<compile_context>
chip_gen: v7x
topology: tpu7x:2x2x1
jax: 0.10.0
libtpu: 0.0.40
codegen_flags: <defaults>
</compile_context>

<pallas_src>
import functools

import jax
import jax.numpy as jnp
from jax import lax
from jax.experimental import pallas as pl
from jax.experimental.pallas import tpu as pltpu

# ---------------------------------------------------------------------------
# Tiling constants / helpers
# ---------------------------------------------------------------------------
TILE_E = 512        # entity rows per KG grid block
TILE_U = 256        # user rows per tile (multiple of 32 for int8 mask blocks)
TILE_I = 512        # item rows per tile (multiple of 128)


def _pick_tile(n, pref, granule):
    """Largest multiple-of-`granule` divisor of n that is <= pref, else n."""
    t = min(pref, n)
    t -= t % granule
    while t >= granule:
        if n % t == 0:
            return t
        t -= granule
    return n


def _ensure_two_blocks(n, t, granule):
    """Prefer >= 2 blocks along a 'parallel' axis (v7x has 2 TensorCores)."""
    if n // t >= 2:
        return t
    half = _pick_tile(n, max(t // 2, granule), granule)
    if half < t and n % half == 0 and n // half >= 2:
        return half
    return t


@functools.lru_cache(maxsize=None)
def _vmem_limit_bytes():
    """~96 MiB on v5e/v6e (128 MiB physical), ~48 MiB on v7x (64 MiB)."""
    try:
        cap = int(pltpu.get_tpu_info().vmem_capacity_bytes)
    except Exception:
        cap = 64 * 1024 * 1024          # conservative (v7x per-core VMEM)
    return int(min(cap * 3 // 4, 100 * 1024 * 1024))


# ---------------------------------------------------------------------------
# Kernel 1: KG aggregate (head-sorted segment reduction) + normalize + residual
# ---------------------------------------------------------------------------
def _kg_agg_kernel(row_ptr_ref, tail_ref, etype_ref,      # SMEM (scalar prefetch)
                   ent_ref, rel_ref, res_ref,             # VMEM inputs
                   emb_out_ref, res_out_ref):             # VMEM outputs (E-blocked)
    f32 = jnp.float32
    D = ent_ref.shape[1]
    te = emb_out_ref.shape[0]
    base = pl.program_id(0) * te

    def head_body(r, carry):
        h = base + r
        lo = row_ptr_ref[h]
        hi = row_ptr_ref[h + 1]

        def edge_body(j, acc):
            t = tail_ref[j]
            rr = etype_ref[j]
            # entity[tail] * relation[edge_type], accumulated in a vreg carry
            return acc + ent_ref[pl.ds(t, 1), :] * rel_ref[pl.ds(rr, 1), :]

        # TODO(synk): sublane-pack 8 edges per vector op (gather [8, D] blocks)
        # for higher vreg utilization on long segments.
        s = lax.fori_loop(lo, hi, edge_body, jnp.zeros((1, D), f32))

        # scatter_mean's 1/count is dropped: positive per-row scaling is a
        # no-op under the immediately following F.normalize(dim=1).
        ss = jnp.sum(s * s, axis=1, keepdims=True)
        normed = s * lax.rsqrt(jnp.maximum(ss, 1e-24))     # F.normalize(dim=1)
        emb_out_ref[pl.ds(r, 1), :] = normed
        res_out_ref[pl.ds(r, 1), :] = res_ref[pl.ds(r, 1), :] + normed
        return carry

    lax.fori_loop(0, te, head_body, 0)


def kg_aggregate_hop(row_ptr, tail_s, etype_s, entity_emb, relation_emb,
                     entity_res, te):
    E, D = entity_emb.shape
    resident = lambda e, *_: (0, 0)
    blocked = lambda e, *_: (e, 0)
    # TODO(synk): for entity tables too large for VMEM, also tile the gather
    # source (per-E-block tail ranges) and/or hold it in bf16.
    grid_spec = pltpu.PrefetchScalarGridSpec(
        num_scalar_prefetch=3,                              # row_ptr, tail, etype
        grid=(E // te,),
        in_specs=[
            pl.BlockSpec((E, D), resident),                 # entity (gather source)
            pl.BlockSpec(relation_emb.shape, resident),     # relation table
            pl.BlockSpec((te, D), blocked),                 # residual in (streamed)
        ],
        out_specs=(
            pl.BlockSpec((te, D), blocked),                 # normalized hop embedding
            pl.BlockSpec((te, D), blocked),                 # updated residual
        ),
    )
    # TODO(synk): alias entity_res -> res_out via input_output_aliases for
    # hops >= 1 to drop one [E, D] HBM allocation per hop.
    return pl.pallas_call(
        _kg_agg_kernel,
        grid_spec=grid_spec,
        out_shape=(jax.ShapeDtypeStruct((E, D), jnp.float32),
                   jax.ShapeDtypeStruct((E, D), jnp.float32)),
        compiler_params=pltpu.CompilerParams(
            dimension_semantics=("parallel",),              # disjoint head blocks
            vmem_limit_bytes=_vmem_limit_bytes()),
    )(row_ptr, tail_s, etype_s, entity_emb, relation_emb, entity_res)


# ---------------------------------------------------------------------------
# Kernel 2: user aggregation (tiled U x I grid) + normalize + residual
# ---------------------------------------------------------------------------
def _user_agg_kernel(user_ref, item_ref, cls_ref, latent_ref, dw_ref,
                     w_all_ref, res_ref,
                     emb_out_ref, res_out_ref,
                     acc_ref, attb_ref):
    f32 = jnp.float32
    bf16 = jnp.bfloat16
    k = pl.program_id(1)
    n_cls = attb_ref.shape[0]
    tu, ti = attb_ref.shape[1], attb_ref.shape[2]

    @pl.when(k == 0)
    def _prologue():
        u = user_ref[...]                                                 # [tu, D]
        # user -> latent-factor attention, softmax over F (f32, EUP recip)
        s = lax.dot_general(u, latent_ref[...], (((1,), (1,)), ((), ())),
                            preferred_element_type=f32)                  # [tu, F]
        s = jnp.exp(s - jnp.max(s, axis=1, keepdims=True))
        att_lat = s * pl.reciprocal(jnp.sum(s, axis=1, keepdims=True), approx=True)
        # user -> class attention, softmax over C; pre-broadcast along the item
        # tile ONCE per u-tile so the streamed loop is a pure multiply-add.
        sc = lax.dot_general(u, cls_ref[...], (((1,), (1,)), ((), ())),
                             preferred_element_type=f32)                 # [tu, C]
        sc = jnp.exp(sc - jnp.max(sc, axis=1, keepdims=True))
        att_cls = sc * pl.reciprocal(jnp.sum(sc, axis=1, keepdims=True), approx=True)
        for c in range(n_cls):                                           # small static C
            attb_ref[c] = jnp.broadcast_to(att_cls[:, c:c + 1].astype(bf16),
                                           (tu, ti))
        # init accumulator with the hop-invariant disen term (precomputed [F, D])
        acc_ref[...] = jnp.dot(att_lat, dw_ref[...], preferred_element_type=f32)

    # Streamed item tile.  interact_mat is folded in as "class 0 / weight 1";
    # the fused weight is built in bf16 from int8 0/1 masks, then one bf16 MXU
    # matmul with f32 accumulation:
    #   acc += (interact + sum_c att_c * inter_cls_c) @ item
    w = w_all_ref[0].astype(bf16)                                        # [tu, ti]
    for c in range(n_cls):
        w = w + attb_ref[c] * w_all_ref[c + 1].astype(bf16)
    acc_ref[...] += jnp.dot(w, item_ref[...], preferred_element_type=f32)

    @pl.when(k == pl.num_programs(1) - 1)
    def _epilogue():
        agg = acc_ref[...]
        ss = jnp.sum(agg * agg, axis=1, keepdims=True)
        normed = agg * lax.rsqrt(jnp.maximum(ss, 1e-24))                 # F.normalize
        emb_out_ref[...] = normed
        res_out_ref[...] = res_ref[...] + normed                         # fused residual


def user_aggregate_hop(user_emb, item_bf16, cls_emb, latent_emb, disen_weight,
                       w_all_int8, user_res, tu, ti):
    U, D = user_emb.shape
    I = item_bf16.shape[0]
    C = cls_emb.shape[0]
    Fk = latent_emb.shape[0]
    grid = (U // tu, I // ti)
    grid_spec = pltpu.PrefetchScalarGridSpec(
        num_scalar_prefetch=0,
        grid=grid,
        in_specs=[
            pl.BlockSpec((tu, D), lambda u, k: (u, 0)),        # user rows (resident over k)
            pl.BlockSpec((ti, D), lambda u, k: (k, 0)),        # item tile (streamed)
            pl.BlockSpec((C, D), lambda u, k: (0, 0)),         # cls_emb
            pl.BlockSpec((Fk, D), lambda u, k: (0, 0)),        # latent_emb
            pl.BlockSpec((Fk, D), lambda u, k: (0, 0)),        # hoisted disen_weight
            pl.BlockSpec((C + 1, tu, ti), lambda u, k: (0, u, k)),  # int8 mask tile
            pl.BlockSpec((tu, D), lambda u, k: (u, 0)),        # residual in
        ],
        out_specs=(
            pl.BlockSpec((tu, D), lambda u, k: (u, 0)),        # normalized hop embedding
            pl.BlockSpec((tu, D), lambda u, k: (u, 0)),        # updated residual
        ),
        scratch_shapes=[pltpu.VMEM((tu, D), jnp.float32),      # f32 accumulator
                        pltpu.VMEM((C, tu, ti), jnp.bfloat16)],  # pre-broadcast cls att
    )
    # TODO(synk): alias user_res -> res_out via input_output_aliases for
    # hops >= 1 to drop one [U, D] HBM allocation per hop.
    return pl.pallas_call(
        _user_agg_kernel,
        grid_spec=grid_spec,
        out_shape=(jax.ShapeDtypeStruct((U, D), jnp.float32),
                   jax.ShapeDtypeStruct((U, D), jnp.float32)),
        compiler_params=pltpu.CompilerParams(
            dimension_semantics=("parallel", "arbitrary"),     # u-rows shard across TCs
            vmem_limit_bytes=_vmem_limit_bytes()),
    )(user_emb, item_bf16, cls_emb, latent_emb, disen_weight,
      w_all_int8, user_res)


# ---------------------------------------------------------------------------
# ClsGraphConv.forward (n_hops loop, residuals fused in-kernel, cor_loss 'mi')
# ---------------------------------------------------------------------------
@functools.partial(jax.jit, static_argnames=("n_items", "n_hops"))
def cls_graph_conv_forward(user_emb, entity_emb, cls_emb, latent_emb,
                           relation_emb, disen_weight_att,
                           edge_index, edge_type, interact_mat, inter_cls_mat,
                           n_items, n_hops, temperature):
    E, D = entity_emb.shape
    U = user_emb.shape[0]
    I = n_items

    head = edge_index[0].astype(jnp.int32)
    tail = edge_index[1].astype(jnp.int32)
    etype = edge_type.astype(jnp.int32)

    # ---- hop-invariant KG preprocessing: head-sorted CSR segments ----
    order = jnp.argsort(head)
    tail_s = tail[order]
    etype_s = etype[order]
    counts = jnp.zeros((E,), jnp.int32).at[head].add(1)
    row_ptr = jnp.concatenate([jnp.zeros((1,), jnp.int32),
                               jnp.cumsum(counts, dtype=jnp.int32)])

    te = _ensure_two_blocks(E, _pick_tile(E, TILE_E, 8), 8)
    tu = _ensure_two_blocks(U, _pick_tile(U, TILE_U, 32), 32)
    ti = _pick_tile(I, TILE_I, 128)

    # hop-invariant: disen_weight = softmax(disen_weight_att, -1) @ relation_emb
    disen_weight = jax.nn.softmax(disen_weight_att, axis=-1) @ relation_emb  # [F, D]

    # item_emb is sliced once before the hop loop and held fixed (reference code)
    item_emb = entity_emb[:n_items]
    item_bf16 = item_emb.astype(jnp.bfloat16)              # bf16 MXU operand

    # 0/1 interaction masks: fold interact_mat in as class 0 and store int8
    # (exact for binary masks; halves the dominant HBM stream).
    # TODO(synk): weighted (non-binary) interaction matrices need bf16 storage.
    w_all_int8 = jnp.concatenate([interact_mat[None], inter_cls_mat],
                                 axis=0).astype(jnp.int8)   # [C+1, U, I]

    entity_cur, user_cur = entity_emb, user_emb
    entity_res, user_res = entity_emb, user_emb

    # mess_dropout_rate = 0.0 / node_dropout_rate = 0.0 (deterministic forward)
    for _ in range(n_hops):
        entity_cur, entity_res = kg_aggregate_hop(
            row_ptr, tail_s, etype_s, entity_cur, relation_emb, entity_res, te)
        user_cur, user_res = user_aggregate_hop(
            user_cur, item_bf16, cls_emb, latent_emb, disen_weight,
            w_all_int8, user_res, tu, ti)

    # ---- cor_loss with ind='mi' (tiny [F, R] problem; plain JAX glue) ----
    a = disen_weight_att * lax.rsqrt(
        jnp.maximum(jnp.sum(disen_weight_att ** 2, axis=1, keepdims=True), 1e-24))
    scores = jnp.exp((a @ a.T) / temperature)
    cor_loss = -jnp.sum(jnp.log(jnp.diag(scores) / jnp.sum(scores, axis=1)))
    # TODO(synk): 'distance' / 'cosine' independence losses not wired (mi used).

    return entity_res, user_res, cor_loss


# ---------------------------------------------------------------------------
# Pure-JAX f32 reference of the same forward (for a numerical sanity check)
# ---------------------------------------------------------------------------
def reference_forward(user_emb, entity_emb, cls_emb, latent_emb, relation_emb,
                      disen_weight_att, edge_index, edge_type, interact_mat,
                      inter_cls_mat, n_items, n_hops, temperature):
    head, tail = edge_index[0], edge_index[1]
    E, D = entity_emb.shape
    counts = jnp.zeros((E,), jnp.float32).at[head].add(1.0)

    def normalize(x):
        n = jnp.sqrt(jnp.sum(x * x, axis=1, keepdims=True))
        return x / jnp.maximum(n, 1e-12)

    item_emb = entity_emb[:n_items]
    ent_cur, usr_cur = entity_emb, user_emb
    ent_res, usr_res = entity_emb, user_emb
    for _ in range(n_hops):
        neigh = ent_cur[tail] * relation_emb[edge_type]
        ent_agg = jnp.zeros((E, D), jnp.float32).at[head].add(neigh)
        ent_agg = ent_agg / jnp.maximum(counts, 1.0)[:, None]

        usr_agg = interact_mat @ item_emb
        att_lat = jax.nn.softmax(usr_cur @ latent_emb.T, axis=1)
        dw = jax.nn.softmax(disen_weight_att, axis=-1) @ relation_emb
        usr_agg = att_lat @ dw + usr_agg
        att_cls = jax.nn.softmax(usr_cur @ cls_emb.T, axis=1)
        user_cls = jnp.stack([inter_cls_mat[i] @ item_emb
                              for i in range(inter_cls_mat.shape[0])], axis=1)
        usr_agg = jnp.sum(user_cls * att_cls[:, :, None], axis=1) + usr_agg

        ent_cur = normalize(ent_agg)
        usr_cur = normalize(usr_agg)
        ent_res = ent_res + ent_cur
        usr_res = usr_res + usr_cur

    a = disen_weight_att / jnp.maximum(
        jnp.sqrt(jnp.sum(disen_weight_att ** 2, axis=1, keepdims=True)), 1e-12)
    scores = jnp.exp((a @ a.T) / temperature)
    cor_loss = -jnp.sum(jnp.log(jnp.diag(scores) / jnp.sum(scores, axis=1)))
    return ent_res, usr_res, cor_loss


# ---------------------------------------------------------------------------
if __name__ == "__main__":
    key = jax.random.PRNGKey(0)
    # lane-dense small shapes: D multiple of 128; multi-block E, U, I grids
    D, E, I, U, C, Fk, R, Ne = 128, 1536, 1024, 64, 4, 4, 8, 4096
    n_hops = 2
    temperature = 0.2

    ks = jax.random.split(key, 11)
    user_emb = 0.1 * jax.random.normal(ks[0], (U, D), jnp.float32)
    entity_emb = 0.1 * jax.random.normal(ks[1], (E, D), jnp.float32)
    cls_emb = 0.1 * jax.random.normal(ks[2], (C, D), jnp.float32)
    latent_emb = 0.1 * jax.random.normal(ks[3], (Fk, D), jnp.float32)

    # xavier-uniform style parameter init (shapes from __init__)
    lim_rel = (6.0 / (R + D)) ** 0.5
    relation_emb = jax.random.uniform(ks[4], (R, D), jnp.float32, -lim_rel, lim_rel)
    lim_att = (6.0 / (Fk + R)) ** 0.5
    disen_weight_att = jax.random.uniform(ks[5], (Fk, R), jnp.float32, -lim_att, lim_att)

    # graph structure / interaction matrices (dense 0/1 stand-ins for sparse mats)
    edge_head = jax.random.randint(ks[6], (Ne,), 0, E)
    edge_tail = jax.random.randint(ks[7], (Ne,), 0, E)
    edge_type = jax.random.randint(ks[8], (Ne,), 0, R)
    edge_index = jnp.stack([edge_head, edge_tail])
    interact_mat = (jax.random.uniform(ks[9], (U, I)) < 0.1).astype(jnp.float32)
    inter_cls_mat = (jax.random.uniform(ks[10], (C, U, I)) < 0.05).astype(jnp.float32)

    entity_res, user_res, cor_loss = cls_graph_conv_forward(
        user_emb, entity_emb, cls_emb, latent_emb, relation_emb,
        disen_weight_att, edge_index, edge_type, interact_mat, inter_cls_mat,
        n_items=I, n_hops=n_hops, temperature=temperature)
    jax.block_until_ready((entity_res, user_res, cor_loss))

    assert entity_res.shape == (E, D)
    assert user_res.shape == (U, D)
    assert cor_loss.shape == ()

    # numerical check vs. the pure-JAX f32 reference (user path uses bf16/int8
    # MXU operands, so its tolerance is looser)
    ent_ref, usr_ref, cor_ref = reference_forward(
        user_emb, entity_emb, cls_emb, latent_emb, relation_emb,
        disen_weight_att, edge_index, edge_type, interact_mat, inter_cls_mat,
        I, n_hops, temperature)

    def _check(a, b, name, atol, rtol):
        err = float(jnp.max(jnp.abs(a - b)))
        if not bool(jnp.allclose(a, b, atol=atol, rtol=rtol)):
            raise AssertionError(f"{name} mismatch (max abs err {err:.3e})")

    _check(entity_res, ent_ref, "entity_res", atol=1e-4, rtol=1e-3)
    _check(user_res, usr_ref, "user_res", atol=1e-2, rtol=5e-2)
    _check(cor_loss, cor_ref, "cor_loss", atol=1e-3, rtol=1e-3)

    print("KERNEL_OK")
</pallas_src>

<mosaic_0001>
module attributes {stable_mosaic.version = 11 : i64} {
  func.func private @main(%arg0: i32) attributes {dimension_semantics = [#tpu.dimension_semantics<core_parallel>], iteration_bounds = array<i64: 2>, tpu.core_type = #tpu.core_type<sc_scalar_subcore>, window_params = []} {
    return
  }
}

module attributes {stable_mosaic.version = 11 : i64} {
  func.func private @main(%arg0: i32) attributes {dimension_semantics = [#tpu.dimension_semantics<core_parallel>], iteration_bounds = array<i64: 2>, tpu.core_type = #tpu.core_type<sc_scalar_subcore>, window_params = []} {
    return
  }
}

module attributes {stable_mosaic.version = 11 : i64} {
  func.func @_user_agg_kernel(%arg0: i32, %arg1: i32, %arg2: memref<32x128xf32, #tpu.memory_space<vmem>>, %arg3: memref<512x128xbf16, #tpu.memory_space<vmem>>, %arg4: memref<4x128xf32, #tpu.memory_space<vmem>>, %arg5: memref<4x128xf32, #tpu.memory_space<vmem>>, %arg6: memref<4x128xf32, #tpu.memory_space<vmem>>, %arg7: memref<5x32x512xi8, #tpu.memory_space<vmem>>, %arg8: memref<32x128xf32, #tpu.memory_space<vmem>>, %arg9: memref<32x128xf32, #tpu.memory_space<vmem>>, %arg10: memref<32x128xf32, #tpu.memory_space<vmem>>, %arg11: memref<32x128xf32, #tpu.memory_space<vmem>>, %arg12: memref<4x32x512xbf16, #tpu.memory_space<vmem>>) attributes {dimension_semantics = [#tpu.dimension_semantics<parallel>, #tpu.dimension_semantics<arbitrary>], iteration_bounds = array<i64: 2, 2>, scalar_prefetch = 0 : i64, scratch_operands = 2 : i64, tpu.core_type = #tpu.core_type<tc>, window_params = [{transform_indices = @transform_0, window_bounds = array<i64: 32, 128>}, {transform_indices = @transform_1, window_bounds = array<i64: 512, 128>}, {pipeline_mode = #tpu.pipeline_mode<synchronous>, transform_indices = @transform_2, window_bounds = array<i64: 4, 128>}, {pipeline_mode = #tpu.pipeline_mode<synchronous>, transform_indices = @transform_3, window_bounds = array<i64: 4, 128>}, {pipeline_mode = #tpu.pipeline_mode<synchronous>, transform_indices = @transform_4, window_bounds = array<i64: 4, 128>}, {transform_indices = @transform_5, window_bounds = array<i64: 5, 32, 512>}, {transform_indices = @transform_6, window_bounds = array<i64: 32, 128>}, {transform_indices = @transform_7, window_bounds = array<i64: 32, 128>}, {transform_indices = @transform_8, window_bounds = array<i64: 32, 128>}]} {
    %c0_i32 = arith.constant 0 : i32
    %0 = arith.cmpi eq, %arg1, %c0_i32 : i32
    %1 = arith.extui %0 : i1 to i32
    %c0_i32_0 = arith.constant 0 : i32
    %2 = arith.cmpi ne, %1, %c0_i32_0 : i32
    scf.if %2 {
      %c0_30 = arith.constant 0 : index
      %c0_31 = arith.constant 0 : index
      %42 = vector.load %arg2[%c0_30, %c0_31] : memref<32x128xf32, #tpu.memory_space<vmem>>, vector<32x128xf32>
      %c0_32 = arith.constant 0 : index
      %c0_33 = arith.constant 0 : index
      %43 = vector.load %arg5[%c0_32, %c0_33] : memref<4x128xf32, #tpu.memory_space<vmem>>, vector<4x128xf32>
      %cst_34 = arith.constant dense<0.000000e+00> : vector<32x4xf32>
      %44 = tpu.matmul %42, %43, %cst_34 {dimension_numbers = #tpu.dot_dimension_numbers<[1], [1], [0], [0], [0, 0, 1, 0], [], []>} : vector<32x128xf32>, vector<4x128xf32>, vector<32x4xf32> -> vector<32x4xf32>
      %cst_35 = arith.constant dense<0xFF800000> : vector<32xf32>
      %45 = vector.multi_reduction <maximumf>, %44, %cst_35 [1] : vector<32x4xf32> to vector<32xf32>
      %46 = vector.shape_cast %45 : vector<32xf32> to vector<32x1xf32>
      %47 = vector.broadcast %46 : vector<32x1xf32> to vector<32x4xf32>
      %48 = arith.subf %44, %47 : vector<32x4xf32>
      %49 = math.exp %48 : vector<32x4xf32>
      %cst_36 = arith.constant dense<0.000000e+00> : vector<32xf32>
      %50 = vector.multi_reduction <add>, %49, %cst_36 [1] : vector<32x4xf32> to vector<32xf32>
      %51 = vector.shape_cast %50 : vector<32xf32> to vector<32x1xf32>
      %52 = tpu.reciprocal %51 {approx = true} : vector<32x1xf32> -> vector<32x1xf32>
      %53 = vector.broadcast %52 : vector<32x1xf32> to vector<32x4xf32>
      %54 = arith.mulf %49, %53 : vector<32x4xf32>
      %c0_37 = arith.constant 0 : index
      %c0_38 = arith.constant 0 : index
      %55 = vector.load %arg4[%c0_37, %c0_38] : memref<4x128xf32, #tpu.memory_space<vmem>>, vector<4x128xf32>
      %cst_39 = arith.constant dense<0.000000e+00> : vector<32x4xf32>
      %56 = tpu.matmul %42, %55, %cst_39 {dimension_numbers = #tpu.dot_dimension_numbers<[1], [1], [0], [0], [0, 0, 1, 0], [], []>} : vector<32x128xf32>, vector<4x128xf32>, vector<32x4xf32> -> vector<32x4xf32>
      %cst_40 = arith.constant dense<0xFF800000> : vector<32xf32>
      %57 = vector.multi_reduction <maximumf>, %56, %cst_40 [1] : vector<32x4xf32> to vector<32xf32>
      %58 = vector.shape_cast %57 : vector<32xf32> to vector<32x1xf32>
      %59 = vector.broadcast %58 : vector<32x1xf32> to vector<32x4xf32>
      %60 = arith.subf %56, %59 : vector<32x4xf32>
      %61 = math.exp %60 : vector<32x4xf32>
      %cst_41 = arith.constant dense<0.000000e+00> : vector<32xf32>
      %62 = vector.multi_reduction <add>, %61, %cst_41 [1] : vector<32x4xf32> to vector<32xf32>
      %63 = vector.shape_cast %62 : vector<32xf32> to vector<32x1xf32>
      %64 = tpu.reciprocal %63 {approx = true} : vector<32x1xf32> -> vector<32x1xf32>
      %65 = vector.broadcast %64 : vector<32x1xf32> to vector<32x4xf32>
      %66 = arith.mulf %61, %65 : vector<32x4xf32>
      %67 = vector.extract_strided_slice %66 {offsets = [0, 0], sizes = [32, 1], strides = [1, 1]} : vector<32x4xf32> to vector<32x1xf32>
      %68 = arith.truncf %67 : vector<32x1xf32> to vector<32x1xbf16>
      %69 = vector.shape_cast %68 : vector<32x1xbf16> to vector<32x1xbf16>
      %70 = vector.broadcast %69 : vector<32x1xbf16> to vector<32x512xbf16>
      %c0_42 = arith.constant 0 : index
      %c0_43 = arith.constant 0 : index
      %c0_44 = arith.constant 0 : index
      %71 = vector.load %arg12[%c0_42, %c0_43, %c0_44] : memref<4x32x512xbf16, #tpu.memory_space<vmem>>, vector<1x32x512xbf16>
      %72 = vector.shape_cast %71 : vector<1x32x512xbf16> to vector<32x512xbf16>
      %73 = vector.shape_cast %70 : vector<32x512xbf16> to vector<1x32x512xbf16>
      tpu.vector_store %arg12[%c0_42, %c0_43, %c0_44], %73 {strides = array<i32>} : memref<4x32x512xbf16, #tpu.memory_space<vmem>>, vector<1x32x512xbf16>,
      %74 = vector.extract_strided_slice %66 {offsets = [0, 1], sizes = [32, 1], strides = [1, 1]} : vector<32x4xf32> to vector<32x1xf32>
      %75 = arith.truncf %74 : vector<32x1xf32> to vector<32x1xbf16>
      %76 = vector.shape_cast %75 : vector<32x1xbf16> to vector<32x1xbf16>
      %77 = vector.broadcast %76 : vector<32x1xbf16> to vector<32x512xbf16>
      %c1_45 = arith.constant 1 : index
      %c0_46 = arith.constant 0 : index
      %c0_47 = arith.constant 0 : index
      %78 = vector.load %arg12[%c1_45, %c0_46, %c0_47] : memref<4x32x512xbf16, #tpu.memory_space<vmem>>, vector<1x32x512xbf16>
      %79 = vector.shape_cast %78 : vector<1x32x512xbf16> to vector<32x512xbf16>
      %80 = vector.shape_cast %77 : vector<32x512xbf16> to vector<1x32x512xbf16>
      tpu.vector_store %arg12[%c1_45, %c0_46, %c0_47], %80 {strides = array<i32>} : memref<4x32x512xbf16, #tpu.memory_space<vmem>>, vector<1x32x512xbf16>,
      %81 = vector.extract_strided_slice %66 {offsets = [0, 2], sizes = [32, 1], strides = [1, 1]} : vector<32x4xf32> to vector<32x1xf32>
      %82 = arith.truncf %81 : vector<32x1xf32> to vector<32x1xbf16>
      %83 = vector.shape_cast %82 : vector<32x1xbf16> to vector<32x1xbf16>
      %84 = vector.broadcast %83 : vector<32x1xbf16> to vector<32x512xbf16>
      %c2_48 = arith.constant 2 : index
      %c0_49 = arith.constant 0 : index
      %c0_50 = arith.constant 0 : index
      %85 = vector.load %arg12[%c2_48, %c0_49, %c0_50] : memref<4x32x512xbf16, #tpu.memory_space<vmem>>, vector<1x32x512xbf16>
      %86 = vector.shape_cast %85 : vector<1x32x512xbf16> to vector<32x512xbf16>
      %87 = vector.shape_cast %84 : vector<32x512xbf16> to vector<1x32x512xbf16>
      tpu.vector_store %arg12[%c2_48, %c0_49, %c0_50], %87 {strides = array<i32>} : memref<4x32x512xbf16, #tpu.memory_space<vmem>>, vector<1x32x512xbf16>,
      %88 = vector.extract_strided_slice %66 {offsets = [0, 3], sizes = [32, 1], strides = [1, 1]} : vector<32x4xf32> to vector<32x1xf32>
      %89 = arith.truncf %88 : vector<32x1xf32> to vector<32x1xbf16>
      %90 = vector.shape_cast %89 : vector<32x1xbf16> to vector<32x1xbf16>
      %91 = vector.broadcast %90 : vector<32x1xbf16> to vector<32x512xbf16>
      %c3_51 = arith.constant 3 : index
      %c0_52 = arith.constant 0 : index
      %c0_53 = arith.constant 0 : index
      %92 = vector.load %arg12[%c3_51, %c0_52, %c0_53] : memref<4x32x512xbf16, #tpu.memory_space<vmem>>, vector<1x32x512xbf16>
      %93 = vector.shape_cast %92 : vector<1x32x512xbf16> to vector<32x512xbf16>
      %94 = vector.shape_cast %91 : vector<32x512xbf16> to vector<1x32x512xbf16>
      tpu.vector_store %arg12[%c3_51, %c0_52, %c0_53], %94 {strides = array<i32>} : memref<4x32x512xbf16, #tpu.memory_space<vmem>>, vector<1x32x512xbf16>,
      %c0_54 = arith.constant 0 : index
      %c0_55 = arith.constant 0 : index
      %95 = vector.load %arg6[%c0_54, %c0_55] : memref<4x128xf32, #tpu.memory_space<vmem>>, vector<4x128xf32>
      %cst_56 = arith.constant dense<0.000000e+00> : vector<32x128xf32>
      %96 = tpu.matmul %54, %95, %cst_56 {dimension_numbers = #tpu.dot_dimension_numbers<[1], [0], [0], [1], [0, 0, 1, 1], [], []>} : vector<32x4xf32>, vector<4x128xf32>, vector<32x128xf32> -> vector<32x128xf32>
      %c0_57 = arith.constant 0 : index
      %c0_58 = arith.constant 0 : index
      %97 = vector.load %arg11[%c0_57, %c0_58] : memref<32x128xf32, #tpu.memory_space<vmem>>, vector<32x128xf32>
      tpu.vector_store %arg11[%c0_57, %c0_58], %96 {strides = array<i32>} : memref<32x128xf32, #tpu.memory_space<vmem>>, vector<32x128xf32>,
    } else {
    }
    %c0 = arith.constant 0 : index
    %c0_1 = arith.constant 0 : index
    %c0_2 = arith.constant 0 : index
    %3 = vector.load %arg7[%c0, %c0_1, %c0_2] : memref<5x32x512xi8, #tpu.memory_space<vmem>>, vector<1x32x512xi8>
    %4 = vector.shape_cast %3 : vector<1x32x512xi8> to vector<32x512xi8>
    %5 = arith.sitofp %4 : vector<32x512xi8> to vector<32x512xbf16>
    %c0_3 = arith.constant 0 : index
    %c0_4 = arith.constant 0 : index
    %c0_5 = arith.constant 0 : index
    %6 = vector.load %arg12[%c0_3, %c0_4, %c0_5] : memref<4x32x512xbf16, #tpu.memory_space<vmem>>, vector<1x32x512xbf16>
    %7 = vector.shape_cast %6 : vector<1x32x512xbf16> to vector<32x512xbf16>
    %c1 = arith.constant 1 : index
    %c0_6 = arith.constant 0 : index
    %c0_7 = arith.constant 0 : index
    %8 = vector.load %arg7[%c1, %c0_6, %c0_7] : memref<5x32x512xi8, #tpu.memory_space<vmem>>, vector<1x32x512xi8>
    %9 = vector.shape_cast %8 : vector<1x32x512xi8> to vector<32x512xi8>
    %10 = arith.sitofp %9 : vector<32x512xi8> to vector<32x512xbf16>
    %11 = arith.mulf %7, %10 : vector<32x512xbf16>
    %12 = arith.addf %5, %11 : vector<32x512xbf16>
    %c1_8 = arith.constant 1 : index
    %c0_9 = arith.constant 0 : index
    %c0_10 = arith.constant 0 : index
    %13 = vector.load %arg12[%c1_8, %c0_9, %c0_10] : memref<4x32x512xbf16, #tpu.memory_space<vmem>>, vector<1x32x512xbf16>
    %14 = vector.shape_cast %13 : vector<1x32x512xbf16> to vector<32x512xbf16>
    %c2 = arith.constant 2 : index
    %c0_11 = arith.constant 0 : index
    %c0_12 = arith.constant 0 : index
    %15 = vector.load %arg7[%c2, %c0_11, %c0_12] : memref<5x32x512xi8, #tpu.memory_space<vmem>>, vector<1x32x512xi8>
    %16 = vector.shape_cast %15 : vector<1x32x512xi8> to vector<32x512xi8>
    %17 = arith.sitofp %16 : vector<32x512xi8> to vector<32x512xbf16>
    %18 = arith.mulf %14, %17 : vector<32x512xbf16>
    %19 = arith.addf %12, %18 : vector<32x512xbf16>
    %c2_13 = arith.constant 2 : index
    %c0_14 = arith.constant 0 : index
    %c0_15 = arith.constant 0 : index
    %20 = vector.load %arg12[%c2_13, %c0_14, %c0_15] : memref<4x32x512xbf16, #tpu.memory_space<vmem>>, vector<1x32x512xbf16>
    %21 = vector.shape_cast %20 : vector<1x32x512xbf16> to vector<32x512xbf16>
    %c3 = arith.constant 3 : index
    %c0_16 = arith.constant 0 : index
    %c0_17 = arith.constant 0 : index
    %22 = vector.load %arg7[%c3, %c0_16, %c0_17] : memref<5x32x512xi8, #tpu.memory_space<vmem>>, vector<1x32x512xi8>
    %23 = vector.shape_cast %22 : vector<1x32x512xi8> to vector<32x512xi8>
    %24 = arith.sitofp %23 : vector<32x512xi8> to vector<32x512xbf16>
    %25 = arith.mulf %21, %24 : vector<32x512xbf16>
    %26 = arith.addf %19, %25 : vector<32x512xbf16>
    %c3_18 = arith.constant 3 : index
    %c0_19 = arith.constant 0 : index
    %c0_20 = arith.constant 0 : index
    %27 = vector.load %arg12[%c3_18, %c0_19, %c0_20] : memref<4x32x512xbf16, #tpu.memory_space<vmem>>, vector<1x32x512xbf16>
    %28 = vector.shape_cast %27 : vector<1x32x512xbf16> to vector<32x512xbf16>
    %c4 = arith.constant 4 : index
    %c0_21 = arith.constant 0 : index
    %c0_22 = arith.constant 0 : index
    %29 = vector.load %arg7[%c4, %c0_21, %c0_22] : memref<5x32x512xi8, #tpu.memory_space<vmem>>, vector<1x32x512xi8>
    %30 = vector.shape_cast %29 : vector<1x32x512xi8> to vector<32x512xi8>
    %31 = arith.sitofp %30 : vector<32x512xi8> to vector<32x512xbf16>
    %32 = arith.mulf %28, %31 : vector<32x512xbf16>
    %33 = arith.addf %26, %32 : vector<32x512xbf16>
    %c0_23 = arith.constant 0 : index
    %c0_24 = arith.constant 0 : index
    %34 = vector.load %arg11[%c0_23, %c0_24] : memref<32x128xf32, #tpu.memory_space<vmem>>, vector<32x128xf32>
    %c0_25 = arith.constant 0 : index
    %c0_26 = arith.constant 0 : index
    %35 = vector.load %arg3[%c0_25, %c0_26] : memref<512x128xbf16, #tpu.memory_space<vmem>>, vector<512x128xbf16>
    %cst = arith.constant dense<0.000000e+00> : vector<32x128xf32>
    %36 = tpu.matmul %33, %35, %cst {dimension_numbers = #tpu.dot_dimension_numbers<[1], [0], [0], [1], [0, 0, 1, 1], [], []>} : vector<32x512xbf16>, vector<512x128xbf16>, vector<32x128xf32> -> vector<32x128xf32>
    %37 = arith.addf %34, %36 : vector<32x128xf32>
    %c0_27 = arith.constant 0 : index
    %c0_28 = arith.constant 0 : index
    %38 = vector.load %arg11[%c0_27, %c0_28] : memref<32x128xf32, #tpu.memory_space<vmem>>, vector<32x128xf32>
    tpu.vector_store %arg11[%c0_27, %c0_28], %37 {strides = array<i32>} : memref<32x128xf32, #tpu.memory_space<vmem>>, vector<32x128xf32>,
    %c1_i32 = arith.constant 1 : i32
    %39 = arith.cmpi eq, %arg1, %c1_i32 : i32
    %40 = arith.extui %39 : i1 to i32
    %c0_i32_29 = arith.constant 0 : i32
    %41 = arith.cmpi ne, %40, %c0_i32_29 : i32
    scf.if %41 {
      %c0_30 = arith.constant 0 : index
      %c0_31 = arith.constant 0 : index
      %42 = vector.load %arg11[%c0_30, %c0_31] : memref<32x128xf32, #tpu.memory_space<vmem>>, vector<32x128xf32>
      %43 = arith.mulf %42, %42 : vector<32x128xf32>
      %cst_32 = arith.constant dense<0.000000e+00> : vector<32xf32>
      %44 = vector.multi_reduction <add>, %43, %cst_32 [1] : vector<32x128xf32> to vector<32xf32>
      %45 = vector.shape_cast %44 : vector<32xf32> to vector<32x1xf32>
      %cst_33 = arith.constant 1.000000e-24 : f32
      %46 = vector.broadcast %cst_33 : f32 to vector<32x1xf32>
      %47 = arith.maximumf %45, %46 : vector<32x1xf32>
      %48 = math.rsqrt %47 : vector<32x1xf32>
      %49 = vector.broadcast %48 : vector<32x1xf32> to vector<32x128xf32>
      %50 = arith.mulf %42, %49 : vector<32x128xf32>
      %c0_34 = arith.constant 0 : index
      %c0_35 = arith.constant 0 : index
      %51 = vector.load %arg9[%c0_34, %c0_35] : memref<32x128xf32, #tpu.memory_space<vmem>>, vector<32x128xf32>
      tpu.vector_store %arg9[%c0_34, %c0_35], %50 {strides = array<i32>} : memref<32x128xf32, #tpu.memory_space<vmem>>, vector<32x128xf32>,
      %c0_36 = arith.constant 0 : index
      %c0_37 = arith.constant 0 : index
      %52 = vector.load %arg8[%c0_36, %c0_37] : memref<32x128xf32, #tpu.memory_space<vmem>>, vector<32x128xf32>
      %53 = arith.addf %52, %50 : vector<32x128xf32>
      %c0_38 = arith.constant 0 : index
      %c0_39 = arith.constant 0 : index
      %54 = vector.load %arg10[%c0_38, %c0_39] : memref<32x128xf32, #tpu.memory_space<vmem>>, vector<32x128xf32>
      tpu.vector_store %arg10[%c0_38, %c0_39], %53 {strides = array<i32>} : memref<32x128xf32, #tpu.memory_space<vmem>>, vector<32x128xf32>,
    } else {
    }
    return
  }
  func.func @transform_0(%arg0: i32, %arg1: i32) -> (i32, i32) {
    %c0_i32 = arith.constant 0 : i32
    %c0_i32_0 = arith.constant 0 : i32
    return %arg0, %c0_i32 : i32, i32
  }
  func.func @transform_1(%arg0: i32, %arg1: i32) -> (i32, i32) {
    %c0_i32 = arith.constant 0 : i32
    %c0_i32_0 = arith.constant 0 : i32
    return %arg1, %c0_i32 : i32, i32
  }
  func.func @transform_2(%arg0: i32, %arg1: i32) -> (i32, i32) {
    %c0_i32 = arith.constant 0 : i32
    %c0_i32_0 = arith.constant 0 : i32
    %c0_i32_1 = arith.constant 0 : i32
    return %c0_i32, %c0_i32_0 : i32, i32
  }
  func.func @transform_3(%arg0: i32, %arg1: i32) -> (i32, i32) {
    %c0_i32 = arith.constant 0 : i32
    %c0_i32_0 = arith.constant 0 : i32
    %c0_i32_1 = arith.constant 0 : i32
    return %c0_i32, %c0_i32_0 : i32, i32
  }
  func.func @transform_4(%arg0: i32, %arg1: i32) -> (i32, i32) {
    %c0_i32 = arith.constant 0 : i32
    %c0_i32_0 = arith.constant 0 : i32
    %c0_i32_1 = arith.constant 0 : i32
    return %c0_i32, %c0_i32_0 : i32, i32
  }
  func.func @transform_5(%arg0: i32, %arg1: i32) -> (i32, i32, i32) {
    %c0_i32 = arith.constant 0 : i32
    %c0_i32_0 = arith.constant 0 : i32
    return %c0_i32, %arg0, %arg1 : i32, i32, i32
  }
  func.func @transform_6(%arg0: i32, %arg1: i32) -> (i32, i32) {
    %c0_i32 = arith.constant 0 : i32
    %c0_i32_0 = arith.constant 0 : i32
    return %arg0, %c0_i32 : i32, i32
  }
  func.func @transform_7(%arg0: i32, %arg1: i32) -> (i32, i32) {
    %c0_i32 = arith.constant 0 : i32
    %c0_i32_0 = arith.constant 0 : i32
    return %arg0, %c0_i32 : i32, i32
  }
  func.func @transform_8(%arg0: i32, %arg1: i32) -> (i32, i32) {
    %c0_i32 = arith.constant 0 : i32
    %c0_i32_0 = arith.constant 0 : i32
    return %arg0, %c0_i32 : i32, i32
  }
}

module attributes {stable_mosaic.version = 11 : i64} {
  func.func @_user_agg_kernel(%arg0: i32, %arg1: i32, %arg2: memref<32x128xf32, #tpu.memory_space<vmem>>, %arg3: memref<512x128xbf16, #tpu.memory_space<vmem>>, %arg4: memref<4x128xf32, #tpu.memory_space<vmem>>, %arg5: memref<4x128xf32, #tpu.memory_space<vmem>>, %arg6: memref<4x128xf32, #tpu.memory_space<vmem>>, %arg7: memref<5x32x512xi8, #tpu.memory_space<vmem>>, %arg8: memref<32x128xf32, #tpu.memory_space<vmem>>, %arg9: memref<32x128xf32, #tpu.memory_space<vmem>>, %arg10: memref<32x128xf32, #tpu.memory_space<vmem>>, %arg11: memref<32x128xf32, #tpu.memory_space<vmem>>, %arg12: memref<4x32x512xbf16, #tpu.memory_space<vmem>>) attributes {dimension_semantics = [#tpu.dimension_semantics<parallel>, #tpu.dimension_semantics<arbitrary>], iteration_bounds = array<i64: 2, 2>, scalar_prefetch = 0 : i64, scratch_operands = 2 : i64, tpu.core_type = #tpu.core_type<tc>, window_params = [{transform_indices = @transform_0, window_bounds = array<i64: 32, 128>}, {transform_indices = @transform_1, window_bounds = array<i64: 512, 128>}, {pipeline_mode = #tpu.pipeline_mode<synchronous>, transform_indices = @transform_2, window_bounds = array<i64: 4, 128>}, {pipeline_mode = #tpu.pipeline_mode<synchronous>, transform_indices = @transform_3, window_bounds = array<i64: 4, 128>}, {pipeline_mode = #tpu.pipeline_mode<synchronous>, transform_indices = @transform_4, window_bounds = array<i64: 4, 128>}, {transform_indices = @transform_5, window_bounds = array<i64: 5, 32, 512>}, {transform_indices = @transform_6, window_bounds = array<i64: 32, 128>}, {transform_indices = @transform_7, window_bounds = array<i64: 32, 128>}, {transform_indices = @transform_8, window_bounds = array<i64: 32, 128>}]} {
    %c0_i32 = arith.constant 0 : i32
    %0 = arith.cmpi eq, %arg1, %c0_i32 : i32
    %1 = arith.extui %0 : i1 to i32
    %c0_i32_0 = arith.constant 0 : i32
    %2 = arith.cmpi ne, %1, %c0_i32_0 : i32
    scf.if %2 {
      %c0_30 = arith.constant 0 : index
      %c0_31 = arith.constant 0 : index
      %42 = vector.load %arg2[%c0_30, %c0_31] : memref<32x128xf32, #tpu.memory_space<vmem>>, vector<32x128xf32>
      %c0_32 = arith.constant 0 : index
      %c0_33 = arith.constant 0 : index
      %43 = vector.load %arg5[%c0_32, %c0_33] : memref<4x128xf32, #tpu.memory_space<vmem>>, vector<4x128xf32>
      %cst_34 = arith.constant dense<0.000000e+00> : vector<32x4xf32>
      %44 = tpu.matmul %42, %43, %cst_34 {dimension_numbers = #tpu.dot_dimension_numbers<[1], [1], [0], [0], [0, 0, 1, 0], [], []>} : vector<32x128xf32>, vector<4x128xf32>, vector<32x4xf32> -> vector<32x4xf32>
      %cst_35 = arith.constant dense<0xFF800000> : vector<32xf32>
      %45 = vector.multi_reduction <maximumf>, %44, %cst_35 [1] : vector<32x4xf32> to vector<32xf32>
      %46 = vector.shape_cast %45 : vector<32xf32> to vector<32x1xf32>
      %47 = vector.broadcast %46 : vector<32x1xf32> to vector<32x4xf32>
      %48 = arith.subf %44, %47 : vector<32x4xf32>
      %49 = math.exp %48 : vector<32x4xf32>
      %cst_36 = arith.constant dense<0.000000e+00> : vector<32xf32>
      %50 = vector.multi_reduction <add>, %49, %cst_36 [1] : vector<32x4xf32> to vector<32xf32>
      %51 = vector.shape_cast %50 : vector<32xf32> to vector<32x1xf32>
      %52 = tpu.reciprocal %51 {approx = true} : vector<32x1xf32> -> vector<32x1xf32>
      %53 = vector.broadcast %52 : vector<32x1xf32> to vector<32x4xf32>
      %54 = arith.mulf %49, %53 : vector<32x4xf32>
      %c0_37 = arith.constant 0 : index
      %c0_38 = arith.constant 0 : index
      %55 = vector.load %arg4[%c0_37, %c0_38] : memref<4x128xf32, #tpu.memory_space<vmem>>, vector<4x128xf32>
      %cst_39 = arith.constant dense<0.000000e+00> : vector<32x4xf32>
      %56 = tpu.matmul %42, %55, %cst_39 {dimension_numbers = #tpu.dot_dimension_numbers<[1], [1], [0], [0], [0, 0, 1, 0], [], []>} : vector<32x128xf32>, vector<4x128xf32>, vector<32x4xf32> -> vector<32x4xf32>
      %cst_40 = arith.constant dense<0xFF800000> : vector<32xf32>
      %57 = vector.multi_reduction <maximumf>, %56, %cst_40 [1] : vector<32x4xf32> to vector<32xf32>
      %58 = vector.shape_cast %57 : vector<32xf32> to vector<32x1xf32>
      %59 = vector.broadcast %58 : vector<32x1xf32> to vector<32x4xf32>
      %60 = arith.subf %56, %59 : vector<32x4xf32>
      %61 = math.exp %60 : vector<32x4xf32>
      %cst_41 = arith.constant dense<0.000000e+00> : vector<32xf32>
      %62 = vector.multi_reduction <add>, %61, %cst_41 [1] : vector<32x4xf32> to vector<32xf32>
      %63 = vector.shape_cast %62 : vector<32xf32> to vector<32x1xf32>
      %64 = tpu.reciprocal %63 {approx = true} : vector<32x1xf32> -> vector<32x1xf32>
      %65 = vector.broadcast %64 : vector<32x1xf32> to vector<32x4xf32>
      %66 = arith.mulf %61, %65 : vector<32x4xf32>
      %67 = vector.extract_strided_slice %66 {offsets = [0, 0], sizes = [32, 1], strides = [1, 1]} : vector<32x4xf32> to vector<32x1xf32>
      %68 = arith.truncf %67 : vector<32x1xf32> to vector<32x1xbf16>
      %69 = vector.shape_cast %68 : vector<32x1xbf16> to vector<32x1xbf16>
      %70 = vector.broadcast %69 : vector<32x1xbf16> to vector<32x512xbf16>
      %c0_42 = arith.constant 0 : index
      %c0_43 = arith.constant 0 : index
      %c0_44 = arith.constant 0 : index
      %71 = vector.load %arg12[%c0_42, %c0_43, %c0_44] : memref<4x32x512xbf16, #tpu.memory_space<vmem>>, vector<1x32x512xbf16>
      %72 = vector.shape_cast %71 : vector<1x32x512xbf16> to vector<32x512xbf16>
      %73 = vector.shape_cast %70 : vector<32x512xbf16> to vector<1x32x512xbf16>
      tpu.vector_store %arg12[%c0_42, %c0_43, %c0_44], %73 {strides = array<i32>} : memref<4x32x512xbf16, #tpu.memory_space<vmem>>, vector<1x32x512xbf16>,
      %74 = vector.extract_strided_slice %66 {offsets = [0, 1], sizes = [32, 1], strides = [1, 1]} : vector<32x4xf32> to vector<32x1xf32>
      %75 = arith.truncf %74 : vector<32x1xf32> to vector<32x1xbf16>
      %76 = vector.shape_cast %75 : vector<32x1xbf16> to vector<32x1xbf16>
      %77 = vector.broadcast %76 : vector<32x1xbf16> to vector<32x512xbf16>
      %c1_45 = arith.constant 1 : index
      %c0_46 = arith.constant 0 : index
      %c0_47 = arith.constant 0 : index
      %78 = vector.load %arg12[%c1_45, %c0_46, %c0_47] : memref<4x32x512xbf16, #tpu.memory_space<vmem>>, vector<1x32x512xbf16>
      %79 = vector.shape_cast %78 : vector<1x32x512xbf16> to vector<32x512xbf16>
      %80 = vector.shape_cast %77 : vector<32x512xbf16> to vector<1x32x512xbf16>
      tpu.vector_store %arg12[%c1_45, %c0_46, %c0_47], %80 {strides = array<i32>} : memref<4x32x512xbf16, #tpu.memory_space<vmem>>, vector<1x32x512xbf16>,
      %81 = vector.extract_strided_slice %66 {offsets = [0, 2], sizes = [32, 1], strides = [1, 1]} : vector<32x4xf32> to vector<32x1xf32>
      %82 = arith.truncf %81 : vector<32x1xf32> to vector<32x1xbf16>
      %83 = vector.shape_cast %82 : vector<32x1xbf16> to vector<32x1xbf16>
      %84 = vector.broadcast %83 : vector<32x1xbf16> to vector<32x512xbf16>
      %c2_48 = arith.constant 2 : index
      %c0_49 = arith.constant 0 : index
      %c0_50 = arith.constant 0 : index
      %85 = vector.load %arg12[%c2_48, %c0_49, %c0_50] : memref<4x32x512xbf16, #tpu.memory_space<vmem>>, vector<1x32x512xbf16>
      %86 = vector.shape_cast %85 : vector<1x32x512xbf16> to vector<32x512xbf16>
      %87 = vector.shape_cast %84 : vector<32x512xbf16> to vector<1x32x512xbf16>
      tpu.vector_store %arg12[%c2_48, %c0_49, %c0_50], %87 {strides = array<i32>} : memref<4x32x512xbf16, #tpu.memory_space<vmem>>, vector<1x32x512xbf16>,
      %88 = vector.extract_strided_slice %66 {offsets = [0, 3], sizes = [32, 1], strides = [1, 1]} : vector<32x4xf32> to vector<32x1xf32>
      %89 = arith.truncf %88 : vector<32x1xf32> to vector<32x1xbf16>
      %90 = vector.shape_cast %89 : vector<32x1xbf16> to vector<32x1xbf16>
      %91 = vector.broadcast %90 : vector<32x1xbf16> to vector<32x512xbf16>
      %c3_51 = arith.constant 3 : index
      %c0_52 = arith.constant 0 : index
      %c0_53 = arith.constant 0 : index
      %92 = vector.load %arg12[%c3_51, %c0_52, %c0_53] : memref<4x32x512xbf16, #tpu.memory_space<vmem>>, vector<1x32x512xbf16>
      %93 = vector.shape_cast %92 : vector<1x32x512xbf16> to vector<32x512xbf16>
      %94 = vector.shape_cast %91 : vector<32x512xbf16> to vector<1x32x512xbf16>
      tpu.vector_store %arg12[%c3_51, %c0_52, %c0_53], %94 {strides = array<i32>} : memref<4x32x512xbf16, #tpu.memory_space<vmem>>, vector<1x32x512xbf16>,
      %c0_54 = arith.constant 0 : index
      %c0_55 = arith.constant 0 : index
      %95 = vector.load %arg6[%c0_54, %c0_55] : memref<4x128xf32, #tpu.memory_space<vmem>>, vector<4x128xf32>
      %cst_56 = arith.constant dense<0.000000e+00> : vector<32x128xf32>
      %96 = tpu.matmul %54, %95, %cst_56 {dimension_numbers = #tpu.dot_dimension_numbers<[1], [0], [0], [1], [0, 0, 1, 1], [], []>} : vector<32x4xf32>, vector<4x128xf32>, vector<32x128xf32> -> vector<32x128xf32>
      %c0_57 = arith.constant 0 : index
      %c0_58 = arith.constant 0 : index
      %97 = vector.load %arg11[%c0_57, %c0_58] : memref<32x128xf32, #tpu.memory_space<vmem>>, vector<32x128xf32>
      tpu.vector_store %arg11[%c0_57, %c0_58], %96 {strides = array<i32>} : memref<32x128xf32, #tpu.memory_space<vmem>>, vector<32x128xf32>,
    } else {
    }
    %c0 = arith.constant 0 : index
    %c0_1 = arith.constant 0 : index
    %c0_2 = arith.constant 0 : index
    %3 = vector.load %arg7[%c0, %c0_1, %c0_2] : memref<5x32x512xi8, #tpu.memory_space<vmem>>, vector<1x32x512xi8>
    %4 = vector.shape_cast %3 : vector<1x32x512xi8> to vector<32x512xi8>
    %5 = arith.sitofp %4 : vector<32x512xi8> to vector<32x512xbf16>
    %c0_3 = arith.constant 0 : index
    %c0_4 = arith.constant 0 : index
    %c0_5 = arith.constant 0 : index
    %6 = vector.load %arg12[%c0_3, %c0_4, %c0_5] : memref<4x32x512xbf16, #tpu.memory_space<vmem>>, vector<1x32x512xbf16>
    %7 = vector.shape_cast %6 : vector<1x32x512xbf16> to vector<32x512xbf16>
    %c1 = arith.constant 1 : index
    %c0_6 = arith.constant 0 : index
    %c0_7 = arith.constant 0 : index
    %8 = vector.load %arg7[%c1, %c0_6, %c0_7] : memref<5x32x512xi8, #tpu.memory_space<vmem>>, vector<1x32x512xi8>
    %9 = vector.shape_cast %8 : vector<1x32x512xi8> to vector<32x512xi8>
    %10 = arith.sitofp %9 : vector<32x512xi8> to vector<32x512xbf16>
    %11 = arith.mulf %7, %10 : vector<32x512xbf16>
    %12 = arith.addf %5, %11 : vector<32x512xbf16>
    %c1_8 = arith.constant 1 : index
    %c0_9 = arith.constant 0 : index
    %c0_10 = arith.constant 0 : index
    %13 = vector.load %arg12[%c1_8, %c0_9, %c0_10] : memref<4x32x512xbf16, #tpu.memory_space<vmem>>, vector<1x32x512xbf16>
    %14 = vector.shape_cast %13 : vector<1x32x512xbf16> to vector<32x512xbf16>
    %c2 = arith.constant 2 : index
    %c0_11 = arith.constant 0 : index
    %c0_12 = arith.constant 0 : index
    %15 = vector.load %arg7[%c2, %c0_11, %c0_12] : memref<5x32x512xi8, #tpu.memory_space<vmem>>, vector<1x32x512xi8>
    %16 = vector.shape_cast %15 : vector<1x32x512xi8> to vector<32x512xi8>
    %17 = arith.sitofp %16 : vector<32x512xi8> to vector<32x512xbf16>
    %18 = arith.mulf %14, %17 : vector<32x512xbf16>
    %19 = arith.addf %12, %18 : vector<32x512xbf16>
    %c2_13 = arith.constant 2 : index
    %c0_14 = arith.constant 0 : index
    %c0_15 = arith.constant 0 : index
    %20 = vector.load %arg12[%c2_13, %c0_14, %c0_15] : memref<4x32x512xbf16, #tpu.memory_space<vmem>>, vector<1x32x512xbf16>
    %21 = vector.shape_cast %20 : vector<1x32x512xbf16> to vector<32x512xbf16>
    %c3 = arith.constant 3 : index
    %c0_16 = arith.constant 0 : index
    %c0_17 = arith.constant 0 : index
    %22 = vector.load %arg7[%c3, %c0_16, %c0_17] : memref<5x32x512xi8, #tpu.memory_space<vmem>>, vector<1x32x512xi8>
    %23 = vector.shape_cast %22 : vector<1x32x512xi8> to vector<32x512xi8>
    %24 = arith.sitofp %23 : vector<32x512xi8> to vector<32x512xbf16>
    %25 = arith.mulf %21, %24 : vector<32x512xbf16>
    %26 = arith.addf %19, %25 : vector<32x512xbf16>
    %c3_18 = arith.constant 3 : index
    %c0_19 = arith.constant 0 : index
    %c0_20 = arith.constant 0 : index
    %27 = vector.load %arg12[%c3_18, %c0_19, %c0_20] : memref<4x32x512xbf16, #tpu.memory_space<vmem>>, vector<1x32x512xbf16>
    %28 = vector.shape_cast %27 : vector<1x32x512xbf16> to vector<32x512xbf16>
    %c4 = arith.constant 4 : index
    %c0_21 = arith.constant 0 : index
    %c0_22 = arith.constant 0 : index
    %29 = vector.load %arg7[%c4, %c0_21, %c0_22] : memref<5x32x512xi8, #tpu.memory_space<vmem>>, vector<1x32x512xi8>
    %30 = vector.shape_cast %29 : vector<1x32x512xi8> to vector<32x512xi8>
    %31 = arith.sitofp %30 : vector<32x512xi8> to vector<32x512xbf16>
    %32 = arith.mulf %28, %31 : vector<32x512xbf16>
    %33 = arith.addf %26, %32 : vector<32x512xbf16>
    %c0_23 = arith.constant 0 : index
    %c0_24 = arith.constant 0 : index
    %34 = vector.load %arg11[%c0_23, %c0_24] : memref<32x128xf32, #tpu.memory_space<vmem>>, vector<32x128xf32>
    %c0_25 = arith.constant 0 : index
    %c0_26 = arith.constant 0 : index
    %35 = vector.load %arg3[%c0_25, %c0_26] : memref<512x128xbf16, #tpu.memory_space<vmem>>, vector<512x128xbf16>
    %cst = arith.constant dense<0.000000e+00> : vector<32x128xf32>
    %36 = tpu.matmul %33, %35, %cst {dimension_numbers = #tpu.dot_dimension_numbers<[1], [0], [0], [1], [0, 0, 1, 1], [], []>} : vector<32x512xbf16>, vector<512x128xbf16>, vector<32x128xf32> -> vector<32x128xf32>
    %37 = arith.addf %34, %36 : vector<32x128xf32>
    %c0_27 = arith.constant 0 : index
    %c0_28 = arith.constant 0 : index
    %38 = vector.load %arg11[%c0_27, %c0_28] : memref<32x128xf32, #tpu.memory_space<vmem>>, vector<32x128xf32>
    tpu.vector_store %arg11[%c0_27, %c0_28], %37 {strides = array<i32>} : memref<32x128xf32, #tpu.memory_space<vmem>>, vector<32x128xf32>,
    %c1_i32 = arith.constant 1 : i32
    %39 = arith.cmpi eq, %arg1, %c1_i32 : i32
    %40 = arith.extui %39 : i1 to i32
    %c0_i32_29 = arith.constant 0 : i32
    %41 = arith.cmpi ne, %40, %c0_i32_29 : i32
    scf.if %41 {
      %c0_30 = arith.constant 0 : index
      %c0_31 = arith.constant 0 : index
      %42 = vector.load %arg11[%c0_30, %c0_31] : memref<32x128xf32, #tpu.memory_space<vmem>>, vector<32x128xf32>
      %43 = arith.mulf %42, %42 : vector<32x128xf32>
      %cst_32 = arith.constant dense<0.000000e+00> : vector<32xf32>
      %44 = vector.multi_reduction <add>, %43, %cst_32 [1] : vector<32x128xf32> to vector<32xf32>
      %45 = vector.shape_cast %44 : vector<32xf32> to vector<32x1xf32>
      %cst_33 = arith.constant 1.000000e-24 : f32
      %46 = vector.broadcast %cst_33 : f32 to vector<32x1xf32>
      %47 = arith.maximumf %45, %46 : vector<32x1xf32>
      %48 = math.rsqrt %47 : vector<32x1xf32>
      %49 = vector.broadcast %48 : vector<32x1xf32> to vector<32x128xf32>
      %50 = arith.mulf %42, %49 : vector<32x128xf32>
      %c0_34 = arith.constant 0 : index
      %c0_35 = arith.constant 0 : index
      %51 = vector.load %arg9[%c0_34, %c0_35] : memref<32x128xf32, #tpu.memory_space<vmem>>, vector<32x128xf32>
      tpu.vector_store %arg9[%c0_34, %c0_35], %50 {strides = array<i32>} : memref<32x128xf32, #tpu.memory_space<vmem>>, vector<32x128xf32>,
      %c0_36 = arith.constant 0 : index
      %c0_37 = arith.constant 0 : index
      %52 = vector.load %arg8[%c0_36, %c0_37] : memref<32x128xf32, #tpu.memory_space<vmem>>, vector<32x128xf32>
      %53 = arith.addf %52, %50 : vector<32x128xf32>
      %c0_38 = arith.constant 0 : index
      %c0_39 = arith.constant 0 : index
      %54 = vector.load %arg10[%c0_38, %c0_39] : memref<32x128xf32, #tpu.memory_space<vmem>>, vector<32x128xf32>
      tpu.vector_store %arg10[%c0_38, %c0_39], %53 {strides = array<i32>} : memref<32x128xf32, #tpu.memory_space<vmem>>, vector<32x128xf32>,
    } else {
    }
    return
  }
  func.func @transform_0(%arg0: i32, %arg1: i32) -> (i32, i32) {
    %c0_i32 = arith.constant 0 : i32
    %c0_i32_0 = arith.constant 0 : i32
    return %arg0, %c0_i32 : i32, i32
  }
  func.func @transform_1(%arg0: i32, %arg1: i32) -> (i32, i32) {
    %c0_i32 = arith.constant 0 : i32
    %c0_i32_0 = arith.constant 0 : i32
    return %arg1, %c0_i32 : i32, i32
  }
  func.func @transform_2(%arg0: i32, %arg1: i32) -> (i32, i32) {
    %c0_i32 = arith.constant 0 : i32
    %c0_i32_0 = arith.constant 0 : i32
    %c0_i32_1 = arith.constant 0 : i32
    return %c0_i32, %c0_i32_0 : i32, i32
  }
  func.func @transform_3(%arg0: i32, %arg1: i32) -> (i32, i32) {
    %c0_i32 = arith.constant 0 : i32
    %c0_i32_0 = arith.constant 0 : i32
    %c0_i32_1 = arith.constant 0 : i32
    return %c0_i32, %c0_i32_0 : i32, i32
  }
  func.func @transform_4(%arg0: i32, %arg1: i32) -> (i32, i32) {
    %c0_i32 = arith.constant 0 : i32
    %c0_i32_0 = arith.constant 0 : i32
    %c0_i32_1 = arith.constant 0 : i32
    return %c0_i32, %c0_i32_0 : i32, i32
  }
  func.func @transform_5(%arg0: i32, %arg1: i32) -> (i32, i32, i32) {
    %c0_i32 = arith.constant 0 : i32
    %c0_i32_0 = arith.constant 0 : i32
    return %c0_i32, %arg0, %arg1 : i32, i32, i32
  }
  func.func @transform_6(%arg0: i32, %arg1: i32) -> (i32, i32) {
    %c0_i32 = arith.constant 0 : i32
    %c0_i32_0 = arith.constant 0 : i32
    return %arg0, %c0_i32 : i32, i32
  }
  func.func @transform_7(%arg0: i32, %arg1: i32) -> (i32, i32) {
    %c0_i32 = arith.constant 0 : i32
    %c0_i32_0 = arith.constant 0 : i32
    return %arg0, %c0_i32 : i32, i32
  }
  func.func @transform_8(%arg0: i32, %arg1: i32) -> (i32, i32) {
    %c0_i32 = arith.constant 0 : i32
    %c0_i32_0 = arith.constant 0 : i32
    return %arg0, %c0_i32 : i32, i32
  }
}

module attributes {stable_mosaic.version = 11 : i64} {
  func.func @_kg_agg_kernel(%arg0: i32, %arg1: memref<1537xi32, #tpu.memory_space<smem>>, %arg2: memref<4096xi32, #tpu.memory_space<smem>>, %arg3: memref<4096xi32, #tpu.memory_space<smem>>, %arg4: memref<1536x128xf32, #tpu.memory_space<vmem>>, %arg5: memref<8x128xf32, #tpu.memory_space<vmem>>, %arg6: memref<512x128xf32, #tpu.memory_space<vmem>>, %arg7: memref<512x128xf32, #tpu.memory_space<vmem>>, %arg8: memref<512x128xf32, #tpu.memory_space<vmem>>) attributes {dimension_semantics = [#tpu.dimension_semantics<parallel>], iteration_bounds = array<i64: 3>, scalar_prefetch = 3 : i64, scratch_operands = 0 : i64, tpu.core_type = #tpu.core_type<tc>, window_params = [{pipeline_mode = #tpu.pipeline_mode<synchronous>, transform_indices = @transform_0, window_bounds = array<i64: 1536, 128>}, {pipeline_mode = #tpu.pipeline_mode<synchronous>, transform_indices = @transform_1, window_bounds = array<i64: 8, 128>}, {transform_indices = @transform_2, window_bounds = array<i64: 512, 128>}, {transform_indices = @transform_3, window_bounds = array<i64: 512, 128>}, {transform_indices = @transform_4, window_bounds = array<i64: 512, 128>}]} {
    %c512_i32 = arith.constant 512 : i32
    %0 = arith.muli %arg0, %c512_i32 : i32
    %c0_i32 = arith.constant 0 : i32
    %c512_i32_0 = arith.constant 512 : i32
    %1 = arith.addi %c0_i32, %c512_i32_0 : i32
    %c1_i32 = arith.constant 1 : i32
    scf.for %arg9 = %c0_i32 to %1 step %c1_i32  : i32 {
      %2 = arith.addi %0, %arg9 : i32
      %3 = arith.index_cast %2 : i32 to index
      %4 = memref.load %arg1[%3] : memref<1537xi32, #tpu.memory_space<smem>>
      %c1_i32_2 = arith.constant 1 : i32
      %5 = arith.addi %2, %c1_i32_2 : i32
      %6 = arith.index_cast %5 : i32 to index
      %7 = memref.load %arg1[%6] : memref<1537xi32, #tpu.memory_space<smem>>
      %cst = arith.constant 0.000000e+00 : f32
      %8 = vector.broadcast %cst : f32 to vector<1x128xf32>
      %9 = arith.subi %7, %4 : i32
      %10 = arith.addi %4, %9 : i32
      %c1_i32_3 = arith.constant 1 : i32
      %11 = scf.for %arg10 = %4 to %10 step %c1_i32_3 iter_args(%arg11 = %8) -> (vector<1x128xf32>)  : i32 {
        %27 = arith.index_cast %arg10 : i32 to index
        %28 = memref.load %arg2[%27] : memref<4096xi32, #tpu.memory_space<smem>>
        %29 = arith.index_cast %arg10 : i32 to index
        %30 = memref.load %arg3[%29] : memref<4096xi32, #tpu.memory_space<smem>>
        %31 = arith.index_cast %28 : i32 to index
        %c0_8 = arith.constant 0 : index
        %32 = vector.load %arg4[%31, %c0_8] : memref<1536x128xf32, #tpu.memory_space<vmem>>, vector<1x128xf32>
        %33 = arith.index_cast %30 : i32 to index
        %c0_9 = arith.constant 0 : index
        %34 = vector.load %arg5[%33, %c0_9] : memref<8x128xf32, #tpu.memory_space<vmem>>, vector<1x128xf32>
        %35 = arith.mulf %32, %34 : vector<1x128xf32>
        %36 = arith.addf %arg11, %35 : vector<1x128xf32>
        scf.yield %36 : vector<1x128xf32>
      }
      %12 = arith.mulf %11, %11 : vector<1x128xf32>
      %cst_4 = arith.constant dense<0.000000e+00> : vector<1xf32>
      %13 = vector.multi_reduction <add>, %12, %cst_4 [1] : vector<1x128xf32> to vector<1xf32>
      %14 = vector.shape_cast %13 : vector<1xf32> to vector<1x1xf32>
      %cst_5 = arith.constant 1.000000e-24 : f32
      %15 = vector.broadcast %cst_5 : f32 to vector<1x1xf32>
      %16 = arith.maximumf %14, %15 : vector<1x1xf32>
      %17 = math.rsqrt %16 : vector<1x1xf32>
      %18 = vector.broadcast %17 : vector<1x1xf32> to vector<1x128xf32>
      %19 = arith.mulf %11, %18 : vector<1x128xf32>
      %20 = arith.index_cast %arg9 : i32 to index
      %c0 = arith.constant 0 : index
      %21 = vector.load %arg7[%20, %c0] : memref<512x128xf32, #tpu.memory_space<vmem>>, vector<1x128xf32>
      tpu.vector_store %arg7[%20, %c0], %19 {strides = array<i32>} : memref<512x128xf32, #tpu.memory_space<vmem>>, vector<1x128xf32>,
      %22 = arith.index_cast %arg9 : i32 to index
      %c0_6 = arith.constant 0 : index
      %23 = vector.load %arg6[%22, %c0_6] : memref<512x128xf32, #tpu.memory_space<vmem>>, vector<1x128xf32>
      %24 = arith.addf %23, %19 : vector<1x128xf32>
      %25 = arith.index_cast %arg9 : i32 to index
      %c0_7 = arith.constant 0 : index
      %26 = vector.load %arg8[%25, %c0_7] : memref<512x128xf32, #tpu.memory_space<vmem>>, vector<1x128xf32>
      tpu.vector_store %arg8[%25, %c0_7], %24 {strides = array<i32>} : memref<512x128xf32, #tpu.memory_space<vmem>>, vector<1x128xf32>,
    }
    %c512_i32_1 = arith.constant 512 : i32
    return
  }
  func.func @transform_0(%arg0: i32, %arg1: memref<1537xi32, #tpu.memory_space<smem>>, %arg2: memref<4096xi32, #tpu.memory_space<smem>>, %arg3: memref<4096xi32, #tpu.memory_space<smem>>) -> (i32, i32) {
    %c0_i32 = arith.constant 0 : i32
    %c0_i32_0 = arith.constant 0 : i32
    %c0_i32_1 = arith.constant 0 : i32
    return %c0_i32, %c0_i32_0 : i32, i32
  }
  func.func @transform_1(%arg0: i32, %arg1: memref<1537xi32, #tpu.memory_space<smem>>, %arg2: memref<4096xi32, #tpu.memory_space<smem>>, %arg3: memref<4096xi32, #tpu.memory_space<smem>>) -> (i32, i32) {
    %c0_i32 = arith.constant 0 : i32
    %c0_i32_0 = arith.constant 0 : i32
    %c0_i32_1 = arith.constant 0 : i32
    return %c0_i32, %c0_i32_0 : i32, i32
  }
  func.func @transform_2(%arg0: i32, %arg1: memref<1537xi32, #tpu.memory_space<smem>>, %arg2: memref<4096xi32, #tpu.memory_space<smem>>, %arg3: memref<4096xi32, #tpu.memory_space<smem>>) -> (i32, i32) {
    %c0_i32 = arith.constant 0 : i32
    %c0_i32_0 = arith.constant 0 : i32
    return %arg0, %c0_i32 : i32, i32
  }
  func.func @transform_3(%arg0: i32, %arg1: memref<1537xi32, #tpu.memory_space<smem>>, %arg2: memref<4096xi32, #tpu.memory_space<smem>>, %arg3: memref<4096xi32, #tpu.memory_space<smem>>) -> (i32, i32) {
    %c0_i32 = arith.constant 0 : i32
    %c0_i32_0 = arith.constant 0 : i32
    return %arg0, %c0_i32 : i32, i32
  }
  func.func @transform_4(%arg0: i32, %arg1: memref<1537xi32, #tpu.memory_space<smem>>, %arg2: memref<4096xi32, #tpu.memory_space<smem>>, %arg3: memref<4096xi32, #tpu.memory_space<smem>>) -> (i32, i32) {
    %c0_i32 = arith.constant 0 : i32
    %c0_i32_0 = arith.constant 0 : i32
    return %arg0, %c0_i32 : i32, i32
  }
}

module attributes {stable_mosaic.version = 11 : i64} {
  func.func @_kg_agg_kernel(%arg0: i32, %arg1: memref<1537xi32, #tpu.memory_space<smem>>, %arg2: memref<4096xi32, #tpu.memory_space<smem>>, %arg3: memref<4096xi32, #tpu.memory_space<smem>>, %arg4: memref<1536x128xf32, #tpu.memory_space<vmem>>, %arg5: memref<8x128xf32, #tpu.memory_space<vmem>>, %arg6: memref<512x128xf32, #tpu.memory_space<vmem>>, %arg7: memref<512x128xf32, #tpu.memory_space<vmem>>, %arg8: memref<512x128xf32, #tpu.memory_space<vmem>>) attributes {dimension_semantics = [#tpu.dimension_semantics<parallel>], iteration_bounds = array<i64: 3>, scalar_prefetch = 3 : i64, scratch_operands = 0 : i64, tpu.core_type = #tpu.core_type<tc>, window_params = [{pipeline_mode = #tpu.pipeline_mode<synchronous>, transform_indices = @transform_0, window_bounds = array<i64: 1536, 128>}, {pipeline_mode = #tpu.pipeline_mode<synchronous>, transform_indices = @transform_1, window_bounds = array<i64: 8, 128>}, {transform_indices = @transform_2, window_bounds = array<i64: 512, 128>}, {transform_indices = @transform_3, window_bounds = array<i64: 512, 128>}, {transform_indices = @transform_4, window_bounds = array<i64: 512, 128>}]} {
    %c512_i32 = arith.constant 512 : i32
    %0 = arith.muli %arg0, %c512_i32 : i32
    %c0_i32 = arith.constant 0 : i32
    %c512_i32_0 = arith.constant 512 : i32
    %1 = arith.addi %c0_i32, %c512_i32_0 : i32
    %c1_i32 = arith.constant 1 : i32
    scf.for %arg9 = %c0_i32 to %1 step %c1_i32  : i32 {
      %2 = arith.addi %0, %arg9 : i32
      %3 = arith.index_cast %2 : i32 to index
      %4 = memref.load %arg1[%3] : memref<1537xi32, #tpu.memory_space<smem>>
      %c1_i32_2 = arith.constant 1 : i32
      %5 = arith.addi %2, %c1_i32_2 : i32
      %6 = arith.index_cast %5 : i32 to index
      %7 = memref.load %arg1[%6] : memref<1537xi32, #tpu.memory_space<smem>>
      %cst = arith.constant 0.000000e+00 : f32
      %8 = vector.broadcast %cst : f32 to vector<1x128xf32>
      %9 = arith.subi %7, %4 : i32
      %10 = arith.addi %4, %9 : i32
      %c1_i32_3 = arith.constant 1 : i32
      %11 = scf.for %arg10 = %4 to %10 step %c1_i32_3 iter_args(%arg11 = %8) -> (vector<1x128xf32>)  : i32 {
        %27 = arith.index_cast %arg10 : i32 to index
        %28 = memref.load %arg2[%27] : memref<4096xi32, #tpu.memory_space<smem>>
        %29 = arith.index_cast %arg10 : i32 to index
        %30 = memref.load %arg3[%29] : memref<4096xi32, #tpu.memory_space<smem>>
        %31 = arith.index_cast %28 : i32 to index
        %c0_8 = arith.constant 0 : index
        %32 = vector.load %arg4[%31, %c0_8] : memref<1536x128xf32, #tpu.memory_space<vmem>>, vector<1x128xf32>
        %33 = arith.index_cast %30 : i32 to index
        %c0_9 = arith.constant 0 : index
        %34 = vector.load %arg5[%33, %c0_9] : memref<8x128xf32, #tpu.memory_space<vmem>>, vector<1x128xf32>
        %35 = arith.mulf %32, %34 : vector<1x128xf32>
        %36 = arith.addf %arg11, %35 : vector<1x128xf32>
        scf.yield %36 : vector<1x128xf32>
      }
      %12 = arith.mulf %11, %11 : vector<1x128xf32>
      %cst_4 = arith.constant dense<0.000000e+00> : vector<1xf32>
      %13 = vector.multi_reduction <add>, %12, %cst_4 [1] : vector<1x128xf32> to vector<1xf32>
      %14 = vector.shape_cast %13 : vector<1xf32> to vector<1x1xf32>
      %cst_5 = arith.constant 1.000000e-24 : f32
      %15 = vector.broadcast %cst_5 : f32 to vector<1x1xf32>
      %16 = arith.maximumf %14, %15 : vector<1x1xf32>
      %17 = math.rsqrt %16 : vector<1x1xf32>
      %18 = vector.broadcast %17 : vector<1x1xf32> to vector<1x128xf32>
      %19 = arith.mulf %11, %18 : vector<1x128xf32>
      %20 = arith.index_cast %arg9 : i32 to index
      %c0 = arith.constant 0 : index
      %21 = vector.load %arg7[%20, %c0] : memref<512x128xf32, #tpu.memory_space<vmem>>, vector<1x128xf32>
      tpu.vector_store %arg7[%20, %c0], %19 {strides = array<i32>} : memref<512x128xf32, #tpu.memory_space<vmem>>, vector<1x128xf32>,
      %22 = arith.index_cast %arg9 : i32 to index
      %c0_6 = arith.constant 0 : index
      %23 = vector.load %arg6[%22, %c0_6] : memref<512x128xf32, #tpu.memory_space<vmem>>, vector<1x128xf32>
      %24 = arith.addf %23, %19 : vector<1x128xf32>
      %25 = arith.index_cast %arg9 : i32 to index
      %c0_7 = arith.constant 0 : index
      %26 = vector.load %arg8[%25, %c0_7] : memref<512x128xf32, #tpu.memory_space<vmem>>, vector<1x128xf32>
      tpu.vector_store %arg8[%25, %c0_7], %24 {strides = array<i32>} : memref<512x128xf32, #tpu.memory_space<vmem>>, vector<1x128xf32>,
    }
    %c512_i32_1 = arith.constant 512 : i32
    return
  }
  func.func @transform_0(%arg0: i32, %arg1: memref<1537xi32, #tpu.memory_space<smem>>, %arg2: memref<4096xi32, #tpu.memory_space<smem>>, %arg3: memref<4096xi32, #tpu.memory_space<smem>>) -> (i32, i32) {
    %c0_i32 = arith.constant 0 : i32
    %c0_i32_0 = arith.constant 0 : i32
    %c0_i32_1 = arith.constant 0 : i32
    return %c0_i32, %c0_i32_0 : i32, i32
  }
  func.func @transform_1(%arg0: i32, %arg1: memref<1537xi32, #tpu.memory_space<smem>>, %arg2: memref<4096xi32, #tpu.memory_space<smem>>, %arg3: memref<4096xi32, #tpu.memory_space<smem>>) -> (i32, i32) {
    %c0_i32 = arith.constant 0 : i32
    %c0_i32_0 = arith.constant 0 : i32
    %c0_i32_1 = arith.constant 0 : i32
    return %c0_i32, %c0_i32_0 : i32, i32
  }
  func.func @transform_2(%arg0: i32, %arg1: memref<1537xi32, #tpu.memory_space<smem>>, %arg2: memref<4096xi32, #tpu.memory_space<smem>>, %arg3: memref<4096xi32, #tpu.memory_space<smem>>) -> (i32, i32) {
    %c0_i32 = arith.constant 0 : i32
    %c0_i32_0 = arith.constant 0 : i32
    return %arg0, %c0_i32 : i32, i32
  }
  func.func @transform_3(%arg0: i32, %arg1: memref<1537xi32, #tpu.memory_space<smem>>, %arg2: memref<4096xi32, #tpu.memory_space<smem>>, %arg3: memref<4096xi32, #tpu.memory_space<smem>>) -> (i32, i32) {
    %c0_i32 = arith.constant 0 : i32
    %c0_i32_0 = arith.constant 0 : i32
    return %arg0, %c0_i32 : i32, i32
  }
  func.func @transform_4(%arg0: i32, %arg1: memref<1537xi32, #tpu.memory_space<smem>>, %arg2: memref<4096xi32, #tpu.memory_space<smem>>, %arg3: memref<4096xi32, #tpu.memory_space<smem>>) -> (i32, i32) {
    %c0_i32 = arith.constant 0 : i32
    %c0_i32_0 = arith.constant 0 : i32
    return %arg0, %c0_i32 : i32, i32
  }
}

</mosaic_0001>

<llo_original>
// kernel: cls_graph_conv_forward.5
$region0: #{cls_graph_conv_forward.5}
  #allocation0 [shape = 'u32[]', space=smem, size = 0x4, offset = 0x4, fixed_abs, tag = 'smem constant byte address 0x4 - core index']
  #allocation1 [shape = 'u32[144,128]{1,0:T(1,128)}', space=vmem, size = 0x12000, scoped, tag = 'internal scratch']
  #allocation2 [shape = 'f32[32,128]{1,0:T(8,128)}', space=vmem, size = 0x4000, scoped, tag = 'scratch operand']
  #allocation3 [shape = 'bf16[4,32,512]{2,1,0:T(16,128)(2,1)}', space=vmem, size = 0x20000, scoped, tag = 'scratch operand']
  %s0 = inlined_call_operand.vmem [shape: f32[64,128], index: 0, kind: input, shape index: {}, may-alias: {0,6}]
  %s1 = inlined_call_operand.vmem [shape: bf16[1024,128], index: 1, kind: input, shape index: {}]
  %s2 = inlined_call_operand.vmem [shape: f32[4,128], index: 2, kind: input, shape index: {}]
  %s3 = inlined_call_operand.vmem [shape: f32[4,128], index: 3, kind: input, shape index: {}]
  %s4 = inlined_call_operand.vmem [shape: f32[4,128], index: 4, kind: input, shape index: {}]
  %s5 = inlined_call_operand.vmem [shape: s8[5,64,1024], index: 5, kind: input, shape index: {}]
  %s6 = inlined_call_operand.vmem [shape: f32[64,128], index: 6, kind: input, shape index: {}, may-alias: {0,6}]
  %s7 = inlined_call_operand.vmem [shape: f32[64,128], index: 7, kind: output, shape index: {0}]
  %s8 = inlined_call_operand.vmem [shape: f32[64,128], index: 8, kind: output, shape index: {1}]
  %9 = xla_tuple %s7, %s8
  %s10 = sld [smem:[#allocation0]]
  $region100: #{cls_graph_conv_forward.5} parent=0
    _
  %s12 = ssub.s32 1, %s10
  %s13 = scalar_select 0, %s12, %s10
  $region1: #{cls_graph_conv_forward.5} parent=0
    #allocation4 [shape = 'u8[163840]{0}', space=vmem, size = 0x28000, scoped, tag = 'input window, operand 5']
    loop: start=0, step=1, limit=6
    $region2: #{cls_graph_conv_forward.5} parent=1 // loop_pre_header
      _
    $region3: #{cls_graph_conv_forward.5} parent=1 // loop_header
      %s15 = sphi 0, %s19
      %p16 = scmp.ge.s32.totalorder %s15, 6
      %s22 = sphi 0, %s34
      %s23 = sphi 0, %s30
      %s24 = sphi 0, %s22
      %s25 = sphi 0, %s23
      %s26 = sphi 0, %s24
      %s27 = sphi 0, %s25
      %s37 = sphi 0, %s39
      %s40 = sphi 0, %s37
      %s41 = sphi 0, %s40
      %s57 = sphi 0, %s41
      %s63 = sphi 0, %s65
      %s66 = sphi 0, %s63
      %s67 = sphi 0, %s66
      %s83 = sphi 0, %s67
      %s87 = sphi 0, %s87
      %s89 = sphi 0, %s87
      %s90 = sphi 0, %s89
      %s104 = sphi 0, %s90
      %s108 = sphi 0, %s108
      %s110 = sphi 0, %s108
      %s111 = sphi 0, %s110
      %s125 = sphi 0, %s111
      %s129 = sphi 0, %s129
      %s131 = sphi 0, %s129
      %s132 = sphi 0, %s131
      %s146 = sphi 0, %s132
      %s154 = sphi 0, %s156
      %s157 = sphi 0, %s154
      %s158 = sphi 0, %s157
      %s174 = sphi 0, %s158
      %s180 = sphi 0, %s182
      %s183 = sphi 0, %s180
      %s184 = sphi 0, %s183
      %s200 = sphi 0, %s184
      %s206 = sphi 0, %s208
      %s209 = sphi 0, %s206
      %s210 = sphi 0, %s209
      %s226 = sphi 0, %s210
      %s232 = sphi 0, %s234
      %s235 = sphi 0, %s232
      %s236 = sphi 0, %s235
      %s252 = sphi 0, %s236
    $region4: #{cls_graph_conv_forward.5} parent=1 // loop_header_branch
      %18 = sbr.rel (%p16) target = $region8
    $region5: #{cls_graph_conv_forward.5} parent=1 // loop_body
      %s20 = ssub.s32 %s15, 1
      %s21 = ssub.s32 %s15, 2
      %s28 = sadd.s32 1, %s23
      %p29 = scmp.ge.s32.totalorder %s28, 2
      %s30 = scalar_select %p29, 0, %s28
      %s31 = sadd.s32 1, %s22
      %s32 = scalar_select %p29, %s31, %s22
      %p33 = scmp.ge.s32.totalorder %s32, 2
      %s34 = scalar_select %p33, 0, %s32
      %s35 = ssub.s32 %s22, %s34
      %p36 = scmp.eq.s32.totalorder %s35, 0
      %s38 = sadd.s32 %s37, 1
      %s39 = scalar_select %p36, %s37, %s38
      %p42 = pneg %p36
      %p43 = scmp.eq.s32.totalorder %s15, 3
      %p44 = por %p42, %p43
      %p45 = scmp.ne.s32.totalorder %s37, %s40
      %p46 = scmp.eq.s32.totalorder %s15, 0
      %p47 = por %p45, %p46
      %p48 = scmp.ne.s32.totalorder %s37, %s40
      %p49 = scmp.eq.s32.totalorder %s20, 3
      %p50 = por %p48, %p49
      %p51 = scmp.ne.s32.totalorder %s40, %s41
      %p52 = scmp.eq.s32.totalorder %s20, 0
      %p53 = por %p51, %p52
      %p54 = scmp.ne.s32.totalorder %s40, %s41
      %p55 = scmp.eq.s32.totalorder %s21, 3
      %p56 = por %p54, %p55
      %p58 = scmp.ne.s32.totalorder %s41, %s57
      %p59 = scmp.eq.s32.totalorder %s21, 0
      %p60 = por %p58, %p59
      %s61 = ssub.s32 %s23, %s30
      %p62 = scmp.eq.s32.totalorder %s61, 0
      %s64 = sadd.s32 %s63, 1
      %s65 = scalar_select %p62, %s63, %s64
      %p68 = pneg %p62
      %p69 = scmp.eq.s32.totalorder %s15, 3
      %p70 = por %p68, %p69
      %p71 = scmp.ne.s32.totalorder %s63, %s66
      %p72 = scmp.eq.s32.totalorder %s15, 0
      %p73 = por %p71, %p72
      %p74 = scmp.ne.s32.totalorder %s63, %s66
      %p75 = scmp.eq.s32.totalorder %s20, 3
      %p76 = por %p74, %p75
      %p77 = scmp.ne.s32.totalorder %s66, %s67
      %p78 = scmp.eq.s32.totalorder %s20, 0
      %p79 = por %p77, %p78
      %p80 = scmp.ne.s32.totalorder %s66, %s67
      %p81 = scmp.eq.s32.totalorder %s21, 3
      %p82 = por %p80, %p81
      %p84 = scmp.ne.s32.totalorder %s67, %s83
      %p85 = scmp.eq.s32.totalorder %s21, 0
      %p86 = por %p84, %p85
      %s88 = sadd.s32 %s87, 1
      %p91 = scmp.eq.s32.totalorder %s15, 3
      %p92 = scmp.ne.s32.totalorder %s87, %s89
      %p93 = scmp.eq.s32.totalorder %s15, 0
      %p94 = por %p92, %p93
      %p95 = scmp.ne.s32.totalorder %s87, %s89
      %p96 = scmp.eq.s32.totalorder %s20, 3
      %p97 = por %p95, %p96
      %p98 = scmp.ne.s32.totalorder %s89, %s90
      %p99 = scmp.eq.s32.totalorder %s20, 0
      %p100 = por %p98, %p99
      %p101 = scmp.ne.s32.totalorder %s89, %s90
      %p102 = scmp.eq.s32.totalorder %s21, 3
      %p103 = por %p101, %p102
      %p105 = scmp.ne.s32.totalorder %s90, %s104
      %p106 = scmp.eq.s32.totalorder %s21, 0
      %p107 = por %p105, %p106
      %s109 = sadd.s32 %s108, 1
      %p112 = scmp.eq.s32.totalorder %s15, 3
      %p113 = scmp.ne.s32.totalorder %s108, %s110
      %p114 = scmp.eq.s32.totalorder %s15, 0
      %p115 = por %p113, %p114
      %p116 = scmp.ne.s32.totalorder %s108, %s110
      %p117 = scmp.eq.s32.totalorder %s20, 3
      %p118 = por %p116, %p117
      %p119 = scmp.ne.s32.totalorder %s110, %s111
      %p120 = scmp.eq.s32.totalorder %s20, 0
      %p121 = por %p119, %p120
      %p122 = scmp.ne.s32.totalorder %s110, %s111
      %p123 = scmp.eq.s32.totalorder %s21, 3
      %p124 = por %p122, %p123
      %p126 = scmp.ne.s32.totalorder %s111, %s125
      %p127 = scmp.eq.s32.totalorder %s21, 0
      %p128 = por %p126, %p127
      %s130 = sadd.s32 %s129, 1
      %p133 = scmp.eq.s32.totalorder %s15, 3
      %p134 = scmp.ne.s32.totalorder %s129, %s131
      %p135 = scmp.eq.s32.totalorder %s15, 0
      %p136 = por %p134, %p135
      %p137 = scmp.ne.s32.totalorder %s129, %s131
      %p138 = scmp.eq.s32.totalorder %s20, 3
      %p139 = por %p137, %p138
      %p140 = scmp.ne.s32.totalorder %s131, %s132
      %p141 = scmp.eq.s32.totalorder %s20, 0
      %p142 = por %p140, %p141
      %p143 = scmp.ne.s32.totalorder %s131, %s132
      %p144 = scmp.eq.s32.totalorder %s21, 3
      %p145 = por %p143, %p144
      %p147 = scmp.ne.s32.totalorder %s132, %s146
      %p148 = scmp.eq.s32.totalorder %s21, 0
      %p149 = por %p147, %p148
      %s150 = ssub.s32 %s22, %s34
      %s151 = ssub.s32 %s23, %s30
      %s152 = sor.u32 %s150, %s151
      %p153 = scmp.eq.s32.totalorder %s152, 0
      %s155 = sadd.s32 %s154, 1
      %s156 = scalar_select %p153, %s154, %s155
      %p159 = pneg %p153
      %p160 = scmp.eq.s32.totalorder %s15, 3
      %p161 = por %p159, %p160
      %p162 = scmp.ne.s32.totalorder %s154, %s157
      %p163 = scmp.eq.s32.totalorder %s15, 0
      %p164 = por %p162, %p163
      %p165 = scmp.ne.s32.totalorder %s154, %s157
      %p166 = scmp.eq.s32.totalorder %s20, 3
      %p167 = por %p165, %p166
      %p168 = scmp.ne.s32.totalorder %s157, %s158
      %p169 = scmp.eq.s32.totalorder %s20, 0
      %p170 = por %p168, %p169
      %p171 = scmp.ne.s32.totalorder %s157, %s158
      %p172 = scmp.eq.s32.totalorder %s21, 3
      %p173 = por %p171, %p172
      %p175 = scmp.ne.s32.totalorder %s158, %s174
      %p176 = scmp.eq.s32.totalorder %s21, 0
      %p177 = por %p175, %p176
      %s178 = ssub.s32 %s22, %s34
      %p179 = scmp.eq.s32.totalorder %s178, 0
      %s181 = sadd.s32 %s180, 1
      %s182 = scalar_select %p179, %s180, %s181
      %p185 = pneg %p179
      %p186 = scmp.eq.s32.totalorder %s15, 3
      %p187 = por %p185, %p186
      %p188 = scmp.ne.s32.totalorder %s180, %s183
      %p189 = scmp.eq.s32.totalorder %s15, 0
      %p190 = por %p188, %p189
      %p191 = scmp.ne.s32.totalorder %s180, %s183
      %p192 = scmp.eq.s32.totalorder %s20, 3
      %p193 = por %p191, %p192
      %p194 = scmp.ne.s32.totalorder %s183, %s184
      %p195 = scmp.eq.s32.totalorder %s20, 0
      %p196 = por %p194, %p195
      %p197 = scmp.ne.s32.totalorder %s183, %s184
      %p198 = scmp.eq.s32.totalorder %s21, 3
      %p199 = por %p197, %p198
      %p201 = scmp.ne.s32.totalorder %s184, %s200
      %p202 = scmp.eq.s32.totalorder %s21, 0
      %p203 = por %p201, %p202
      %s204 = ssub.s32 %s22, %s34
      %p205 = scmp.eq.s32.totalorder %s204, 0
      %s207 = sadd.s32 %s206, 1
      %s208 = scalar_select %p205, %s206, %s207
      %p211 = pneg %p205
      %p212 = scmp.eq.s32.totalorder %s15, 3
      %p213 = por %p211, %p212
      %p214 = scmp.ne.s32.totalorder %s206, %s209
      %p215 = scmp.eq.s32.totalorder %s15, 0
      %p216 = por %p214, %p215
      %p217 = scmp.ne.s32.totalorder %s206, %s209
      %p218 = scmp.eq.s32.totalorder %s20, 3
      %p219 = por %p217, %p218
      %p220 = scmp.ne.s32.totalorder %s209, %s210
      %p221 = scmp.eq.s32.totalorder %s20, 0
      %p222 = por %p220, %p221
      %p223 = scmp.ne.s32.totalorder %s209, %s210
      %p224 = scmp.eq.s32.totalorder %s21, 3
      %p225 = por %p223, %p224
      %p227 = scmp.ne.s32.totalorder %s210, %s226
      %p228 = scmp.eq.s32.totalorder %s21, 0
      %p229 = por %p227, %p228
      %s230 = ssub.s32 %s22, %s34
      %p231 = scmp.eq.s32.totalorder %s230, 0
      %s233 = sadd.s32 %s232, 1
      %s234 = scalar_select %p231, %s232, %s233
      %p237 = pneg %p231
      %p238 = scmp.eq.s32.totalorder %s15, 3
      %p239 = por %p237, %p238
      %p240 = scmp.ne.s32.totalorder %s232, %s235
      %p241 = scmp.eq.s32.totalorder %s15, 0
      %p242 = por %p240, %p241
      %p243 = scmp.ne.s32.totalorder %s232, %s235
      %p244 = scmp.eq.s32.totalorder %s20, 3
      %p245 = por %p243, %p244
      %p246 = scmp.ne.s32.totalorder %s235, %s236
      %p247 = scmp.eq.s32.totalorder %s20, 0
      %p248 = por %p246, %p247
      %p249 = scmp.ne.s32.totalorder %s235, %s236
      %p250 = scmp.eq.s32.totalorder %s21, 3
      %p251 = por %p249, %p250
      %p253 = scmp.ne.s32.totalorder %s236, %s252
      %p254 = scmp.eq.s32.totalorder %s21, 0
      %p255 = por %p253, %p254
      %p256 = scmp.le.s32.totalorder 1, %s15
      %p257 = scmp.lt.s32.totalorder %s15, 5
      %p258 = pnand %p256, %p257
      %p259 = pneg %p258
      // Predicated region
      $region9: #{cls_graph_conv_forward.5} parent=5 // pred_check
        _
      $region10: #{cls_graph_conv_forward.5} parent=5 // pred_check_branch
        %261 = sbr.rel (%p258) target = $region12
      $region11: #{cls_graph_conv_forward.5} parent=5 // pred_region
        %s262 = ssub.s32 %s15, 1
        // Predicated region
        $region13: #{cls_graph_conv_forward.5} parent=11 // pred_check
          %p263 = pneg %p100
        $region14: #{cls_graph_conv_forward.5} parent=11 // pred_check_branch
          %265 = sbr.rel (%p263) target = $region16
        $region15: #{cls_graph_conv_forward.5} parent=11 // pred_region
          _
        $region16: #{cls_graph_conv_forward.5} parent=11 // pred_fallthru
          _
        // Predicated region
        $region17: #{cls_graph_conv_forward.5} parent=11 // pred_check
          %p266 = pneg %p121
        $region18: #{cls_graph_conv_forward.5} parent=11 // pred_check_branch
          %268 = sbr.rel (%p266) target = $region20
        $region19: #{cls_graph_conv_forward.5} parent=11 // pred_region
          _
        $region20: #{cls_graph_conv_forward.5} parent=11 // pred_fallthru
          _
        // Predicated region
        $region21: #{cls_graph_conv_forward.5} parent=11 // pred_check
          %p269 = pneg %p142
        $region22: #{cls_graph_conv_forward.5} parent=11 // pred_check_branch
          %271 = sbr.rel (%p269) target = $region24
        $region23: #{cls_graph_conv_forward.5} parent=11 // pred_region
          _
        $region24: #{cls_graph_conv_forward.5} parent=11 // pred_fallthru
          _
      $region12: #{cls_graph_conv_forward.5} parent=5 // pred_fallthru
        _
      %p272 = scmp.lt.s32.totalorder %s15, 4
      // Predicated region
      $region25: #{cls_graph_conv_forward.5} parent=5 // pred_check
        %p273 = pneg %p272
      $region26: #{cls_graph_conv_forward.5} parent=5 // pred_check_branch
        %275 = sbr.rel (%p273) target = $region28
      $region27: #{cls_graph_conv_forward.5} parent=5 // pred_region
        // Predicated region
        $region29: #{cls_graph_conv_forward.5} parent=27 // pred_check
          %p276 = pneg %p47
        $region30: #{cls_graph_conv_forward.5} parent=27 // pred_check_branch
          %278 = sbr.rel (%p276) target = $region32
        $region31: #{cls_graph_conv_forward.5} parent=27 // pred_region
          %s279 = smul.u32 4, %s22
          %p280 = scmp.lt.s32.totalorder %s279, 7
          %s281 = scalar_select %p280, %s279, 7
          %s282 = smul.addr %s281, 8
          %s283 = scalar_lea.vmem %s0, %s282
          %s284 = smul.u32 4, %s22
        $region32: #{cls_graph_conv_forward.5} parent=27 // pred_fallthru
          _
        // Predicated region
        $region33: #{cls_graph_conv_forward.5} parent=27 // pred_check
          %p285 = pneg %p73
        $region34: #{cls_graph_conv_forward.5} parent=27 // pred_check_branch
          %287 = sbr.rel (%p285) target = $region36
        $region35: #{cls_graph_conv_forward.5} parent=27 // pred_region
          %s288 = smul.u32 64, %s23
          %p289 = scmp.lt.s32.totalorder %s288, 127
          %s290 = scalar_select %p289, %s288, 127
          %s291 = smul.addr %s290, 4
          %s292 = scalar_lea.vmem %s1, %s291
          %s293 = smul.u32 64, %s23
        $region36: #{cls_graph_conv_forward.5} parent=27 // pred_fallthru
          _
        // Predicated region
        $region37: #{cls_graph_conv_forward.5} parent=27 // pred_check
          %p294 = pneg %p164
        $region38: #{cls_graph_conv_forward.5} parent=27 // pred_check_branch
          %296 = sbr.rel (%p294) target = $region40
        $region39: #{cls_graph_conv_forward.5} parent=27 // pred_region
          %s297 = sand.u32 %s154, 1
          %s298 = sand.u32 %s154, 1
          %s299 = smul.addr %s298, 160
          %s300 = scalar_lea.vmem [#allocation4], %s299
          %s301 = smul.u32 4, %s23
          %s302 = smul.addr %s22, 8
          %s303 = sadd.s32 %s301, %s302
          %s304 = smul.addr %s303, 8
          %s305 = scalar_lea.vmem %s5, %s304
          // Predicated region
          $region41: #{cls_graph_conv_forward.5} parent=39 // pred_check
            _
          $region42: #{cls_graph_conv_forward.5} parent=39 // pred_check_branch
            %307 = sbr.rel (0) target = $region44
          $region43: #{cls_graph_conv_forward.5} parent=39 // pred_region
            // Predicated region
            $region45: #{cls_graph_conv_forward.5} parent=43 // pred_check
              _
            $region46: #{cls_graph_conv_forward.5} parent=43 // pred_check_branch
              %309 = sbr.rel (0) target = $region48
            $region47: #{cls_graph_conv_forward.5} parent=43 // pred_region
              loop: start=0, step=1, limit=1
              $region49: #{cls_graph_conv_forward.5} parent=47 // loop_pre_header
                _
              $region50: #{cls_graph_conv_forward.5} parent=47 // loop_header
                %s311 = sphi 0, %s315
                %p312 = scmp.ge.s32.totalorder %s311, 1
                %s316 = sphi %s305, %s305
                %s317 = sphi %s300, %s300
              $region51: #{cls_graph_conv_forward.5} parent=47 // loop_header_branch
                %314 = sbr.rel (%p312) target = $region55
              $region52: #{cls_graph_conv_forward.5} parent=47 // loop_body
                %v318 = vld [vmem:[%s316] sm:$0xff]
                %319 = vst [vmem:[%s317] sm:$0xff] %v318
                %v320 = vld [vmem:[%s316 + $0x8] sm:$0xff]
                %321 = vst [vmem:[%s317 + $0x8] sm:$0xff] %v320
                %v322 = vld [vmem:[%s316 + $0x10] sm:$0xff]
                %323 = vst [vmem:[%s317 + $0x10] sm:$0xff] %v322
                %v324 = vld [vmem:[%s316 + $0x18] sm:$0xff]
                %325 = vst [vmem:[%s317 + $0x18] sm:$0xff] %v324
                %v326 = vld [vmem:[%s316 + $0x80] sm:$0xff]
                %327 = vst [vmem:[%s317 + $0x20] sm:$0xff] %v326
                %v328 = vld [vmem:[%s316 + $0x88] sm:$0xff]
                %329 = vst [vmem:[%s317 + $0x28] sm:$0xff] %v328
                %v330 = vld [vmem:[%s316 + $0x90] sm:$0xff]
                %331 = vst [vmem:[%s317 + $0x30] sm:$0xff] %v330
                %v332 = vld [vmem:[%s316 + $0x98] sm:$0xff]
                %333 = vst [vmem:[%s317 + $0x38] sm:$0xff] %v332
                %v334 = vld [vmem:[%s316 + $0x100] sm:$0xff]
                %335 = vst [vmem:[%s317 + $0x40] sm:$0xff] %v334
                %v336 = vld [vmem:[%s316 + $0x108] sm:$0xff]
                %337 = vst [vmem:[%s317 + $0x48] sm:$0xff] %v336
                %v338 = vld [vmem:[%s316 + $0x110] sm:$0xff]
                %339 = vst [vmem:[%s317 + $0x50] sm:$0xff] %v338
                %v340 = vld [vmem:[%s316 + $0x118] sm:$0xff]
                %341 = vst [vmem:[%s317 + $0x58] sm:$0xff] %v340
                %v342 = vld [vmem:[%s316 + $0x180] sm:$0xff]
                %343 = vst [vmem:[%s317 + $0x60] sm:$0xff] %v342
                %v344 = vld [vmem:[%s316 + $0x188] sm:$0xff]
                %345 = vst [vmem:[%s317 + $0x68] sm:$0xff] %v344
                %v346 = vld [vmem:[%s316 + $0x190] sm:$0xff]
                %347 = vst [vmem:[%s317 + $0x70] sm:$0xff] %v346
                %v348 = vld [vmem:[%s316 + $0x198] sm:$0xff]
                %349 = vst [vmem:[%s317 + $0x78] sm:$0xff] %v348
                %v350 = vld [vmem:[%s316 + $0x200] sm:$0xff]
                %351 = vst [vmem:[%s317 + $0x80] sm:$0xff] %v350
                %v352 = vld [vmem:[%s316 + $0x208] sm:$0xff]
                %353 = vst [vmem:[%s317 + $0x88] sm:$0xff] %v352
                %v354 = vld [vmem:[%s316 + $0x210] sm:$0xff]
                %355 = vst [vmem:[%s317 + $0x90] sm:$0xff] %v354
                %v356 = vld [vmem:[%s316 + $0x218] sm:$0xff]
                %357 = vst [vmem:[%s317 + $0x98] sm:$0xff] %v356
              $region53: #{cls_graph_conv_forward.5} parent=47 // loop_footer
                %s315 = sadd.s32 1, %s311
              $region54: #{cls_graph_conv_forward.5} parent=47 // loop_footer_branch
                %310 = sbr.rel target = $region50
              $region55: #{cls_graph_conv_forward.5} parent=47 // loop_exit
                _
            $region48: #{cls_graph_conv_forward.5} parent=43 // pred_fallthru
              _
            // Predicated region
            $region56: #{cls_graph_conv_forward.5} parent=43 // pred_check
              _
            $region57: #{cls_graph_conv_forward.5} parent=43 // pred_check_branch
              %359 = sbr.rel target = $region59
            $region58: #{cls_graph_conv_forward.5} parent=43 // pred_region
              _
            $region59: #{cls_graph_conv_forward.5} parent=43 // pred_fallthru
              _
          $region44: #{cls_graph_conv_forward.5} parent=39 // pred_fallthru
            _
          %360 = vnop
        $region40: #{cls_graph_conv_forward.5} parent=27 // pred_fallthru
          _
        // Predicated region
        $region60: #{cls_graph_conv_forward.5} parent=27 // pred_check
          %p361 = pneg %p190
        $region61: #{cls_graph_conv_forward.5} parent=27 // pred_check_branch
          %363 = sbr.rel (%p361) target = $region63
        $region62: #{cls_graph_conv_forward.5} parent=27 // pred_region
          %s364 = smul.u32 4, %s22
          %p365 = scmp.lt.s32.totalorder %s364, 7
          %s366 = scalar_select %p365, %s364, 7
          %s367 = smul.addr %s366, 8
          %s368 = scalar_lea.vmem %s6, %s367
          %s369 = smul.u32 4, %s22
        $region63: #{cls_graph_conv_forward.5} parent=27 // pred_fallthru
          _
      $region28: #{cls_graph_conv_forward.5} parent=5 // pred_fallthru
        _
      %p370 = scmp.le.s32.totalorder 1, %s15
      %p371 = scmp.lt.s32.totalorder %s15, 5
      %p372 = pnand %p370, %p371
      %p373 = pneg %p372
      // Predicated region
      $region64: #{cls_graph_conv_forward.5} parent=5 // pred_check
        _
      $region65: #{cls_graph_conv_forward.5} parent=5 // pred_check_branch
        %375 = sbr.rel (%p372) target = $region67
      $region66: #{cls_graph_conv_forward.5} parent=5 // pred_region
        %s376 = ssub.s32 %s15, 1
        %s377 = sand.u32 %s157, 1
        %s378 = sand.u32 %s157, 1
        %s379 = smul.addr %s378, 160
        %s380 = scalar_lea.vmem [#allocation4], %s379
        // Predicated region
        $region68: #{cls_graph_conv_forward.5} parent=66 // pred_check
          %p381 = pneg %p170
        $region69: #{cls_graph_conv_forward.5} parent=66 // pred_check_branch
          %383 = sbr.rel (%p381) target = $region71
        $region70: #{cls_graph_conv_forward.5} parent=66 // pred_region
          _
        $region71: #{cls_graph_conv_forward.5} parent=66 // pred_fallthru
          _
        %s384 = smul.u32 4, %s24
        %p385 = scmp.lt.s32.totalorder %s384, 7
        %s386 = scalar_select %p385, %s384, 7
        %s387 = smul.addr %s386, 8
        %s388 = scalar_lea.vmem %s0, %s387
        %p389 = pneg %p53
        %p390 = pneg %p50
        %s391 = smul.u32 64, %s25
        %p392 = scmp.lt.s32.totalorder %s391, 127
        %s393 = scalar_select %p392, %s391, 127
        %s394 = smul.addr %s393, 4
        %s395 = scalar_lea.vmem %s1, %s394
        %p396 = pneg %p79
        %p397 = pneg %p76
        %p398 = pneg %p100
        %p399 = pneg %p97
        %p400 = pneg %p121
        %p401 = pneg %p118
        %p402 = pneg %p142
        %p403 = pneg %p139
        %s404 = sand.u32 %s157, 1
        %s405 = sand.u32 %s157, 1
        %s406 = smul.addr %s405, 160
        %s407 = scalar_lea.vmem [#allocation4], %s406
        %p408 = pneg %p170
        %p409 = pneg %p167
        %s410 = smul.u32 4, %s24
        %p411 = scmp.lt.s32.totalorder %s410, 7
        %s412 = scalar_select %p411, %s410, 7
        %s413 = smul.addr %s412, 8
        %s414 = scalar_lea.vmem %s6, %s413
        %p415 = pneg %p196
        %p416 = pneg %p193
        %p417 = pneg %p222
        %p418 = pneg %p219
        %s419 = smul.u32 4, %s24
        %p420 = scmp.lt.s32.totalorder %s419, 7
        %s421 = scalar_select %p420, %s419, 7
        %s422 = smul.addr %s421, 8
        %s423 = scalar_lea.vmem %s7, %s422
        %p424 = pneg %p248
        %p425 = pneg %p245
        %s426 = smul.u32 4, %s24
        %p427 = scmp.lt.s32.totalorder %s426, 7
        %s428 = scalar_select %p427, %s426, 7
        %s429 = smul.addr %s428, 8
        %s430 = scalar_lea.vmem %s8, %s429
        %s431 = smul.u32 4, %s24
        %p432 = scmp.lt.s32.totalorder %s431, 7
        %s433 = scalar_select %p432, %s431, 7
        %s434 = smul.addr %s433, 8
        %s435 = scalar_lea.vmem %s0, %s434
        %s436 = smul.u32 4, %s24
        %s437 = smul.u32 64, %s25
        %p438 = scmp.lt.s32.totalorder %s437, 127
        %s439 = scalar_select %p438, %s437, 127
        %s440 = smul.addr %s439, 4
        %s441 = scalar_lea.vmem %s1, %s440
        %s442 = smul.u32 64, %s25
        %s443 = smul.u32 4, %s25
        %s444 = smul.u32 4, %s24
        %p445 = scmp.lt.s32.totalorder %s444, 7
        %s446 = scalar_select %p445, %s444, 7
        %s447 = smul.addr %s446, 8
        %s448 = scalar_lea.vmem %s6, %s447
        %s449 = smul.u32 4, %s24
        %s450 = smul.u32 4, %s24
        %p451 = scmp.lt.s32.totalorder %s450, 7
        %s452 = scalar_select %p451, %s450, 7
        %s453 = smul.addr %s452, 8
        %s454 = scalar_lea.vmem %s7, %s453
        %s455 = smul.u32 4, %s24
        %s456 = smul.u32 4, %s24
        %p457 = scmp.lt.s32.totalorder %s456, 7
        %s458 = scalar_select %p457, %s456, 7
        %s459 = smul.addr %s458, 8
        %s460 = scalar_lea.vmem %s8, %s459
        %s461 = smul.u32 4, %s24
        %p463 = scmp.eq.s32.totalorder %s25, 0
        // Predicated region
        $region72: #{cls_graph_conv_forward.5} parent=66 // pred_check
          %p464 = pneg %p463
        $region73: #{cls_graph_conv_forward.5} parent=66 // pred_check_branch
          %466 = sbr.rel (%p464) target = $region75
        $region74: #{cls_graph_conv_forward.5} parent=66 // pred_region
          %v467 = vld [vmem:[%s435] sm:$0xff]
          %v468 = vld [vmem:[%s435 + $0x8] sm:$0xff]
          %v469 = vld [vmem:[%s435 + $0x10] sm:$0xff]
          %v470 = vld [vmem:[%s435 + $0x18] sm:$0xff]
          %v471 = vld [vmem:[%s3] sm:$0xf]
          %472 = vmatprep.subr.mxu0 0.0
          %473 = vmatpush1.xpose.msra.mxu0 %v471
          %474 = vmatprep.subr.mxu0 0.0
          %475 = vmatpush1.xpose.msra.mxu0 0.0
          %476 = vmatprep.subr.mxu0 0.0
          %477 = vmatpush1.xpose.msra.mxu0 0.0
          %478 = vmatprep.subr.mxu0 0.0
          %479 = vmatpush1.xpose.msra.mxu0 0.0
          %480 = vmatprep.subr.mxu0 0.0
          %481 = vmatpush1.xpose.msra.mxu0 0.0
          %482 = vmatprep.subr.mxu0 0.0
          %483 = vmatpush1.xpose.msra.mxu0 0.0
          %484 = vmatprep.subr.mxu0 0.0
          %485 = vmatpush1.xpose.msra.mxu0 0.0
          %486 = vmatprep.subr.mxu0 0.0
          %487 = vmatpush1.xpose.msra.mxu0 0.0
          %488 = vmatprep.subr.mxu0 0.0
          %489 = vmatpush1.xpose.msra.mxu0 0.0
          %490 = vmatprep.subr.mxu0 0.0
          %491 = vmatpush1.xpose.msra.mxu0 0.0
          %492 = vmatprep.subr.mxu0 0.0
          %493 = vmatpush1.xpose.msra.mxu0 0.0
          %494 = vmatprep.subr.mxu0 0.0
          %495 = vmatpush1.xpose.msra.mxu0 0.0
          %496 = vmatprep.subr.mxu0 0.0
          %497 = vmatpush1.xpose.msra.mxu0 0.0
          %498 = vmatprep.subr.mxu0 0.0
          %499 = vmatpush1.xpose.msra.mxu0 0.0
          %500 = vmatprep.subr.mxu0 0.0
          %501 = vmatpush1.xpose.msra.mxu0 0.0
          %502 = vmatprep.subr.mxu0 0.0
          %503 = vmatpush1.xpose.msra.mxu0 0.0
          %504 = vmatprep.subr.mxu0 0.0
          %505 = vmatpush1.xpose.msra.mxu0 0.0
          %506 = vmatprep.subr.mxu0 0.0
          %507 = vmatpush1.xpose.msra.mxu0 0.0
          %508 = vmatprep.subr.mxu0 0.0
          %509 = vmatpush1.xpose.msra.mxu0 0.0
          %510 = vmatprep.subr.mxu0 0.0
          %511 = vmatpush1.xpose.msra.mxu0 0.0
          %512 = vmatprep.subr.mxu0 0.0
          %513 = vmatpush1.xpose.msra.mxu0 0.0
          %514 = vmatprep.subr.mxu0 0.0
          %515 = vmatpush1.xpose.msra.mxu0 0.0
          %516 = vmatprep.subr.mxu0 0.0
          %517 = vmatpush1.xpose.msra.mxu0 0.0
          %518 = vmatprep.subr.mxu0 0.0
          %519 = vmatpush1.xpose.msra.mxu0 0.0
          %520 = vmatprep.subr.mxu0 0.0
          %521 = vmatpush1.xpose.msra.mxu0 0.0
          %522 = vmatprep.subr.mxu0 0.0
          %523 = vmatpush1.xpose.msra.mxu0 0.0
          %524 = vmatprep.subr.mxu0 0.0
          %525 = vmatpush1.xpose.msra.mxu0 0.0
          %526 = vmatprep.subr.mxu0 0.0
          %527 = vmatpush1.xpose.msra.mxu0 0.0
          %528 = vmatprep.subr.mxu0 0.0
          %529 = vmatpush1.xpose.msra.mxu0 0.0
          %530 = vmatprep.subr.mxu0 0.0
          %531 = vmatpush1.xpose.msra.mxu0 0.0
          %532 = vmatprep.subr.mxu0 0.0
          %533 = vmatpush1.xpose.msra.mxu0 0.0
          %534 = vmatprep.subr.mxu0 0.0
          %535 = vmatpush1.xpose.msra.mxu0 0.0
          %536 = vmatprep.mubr.f32.mxu0 0.0
          %537 = vmatmul.mubr.f32.gmra.mrb[0].mxu0 %v467
          %v538 = vpop.f32.mrb[0].mxu0
          %v539 = vadd.f32 0.0, %v538
          %v540 = vpop.f32.mrb[0].mxu0
          %541 = vmatprep.mubr.f32.mxu0 0.0
          %542 = vmatmul.mubr.f32.gmra.mrb[0].mxu0 %v468
          %v543 = vpop.f32.mrb[0].mxu0
          %v544 = vadd.f32 0.0, %v543
          %v545 = vpop.f32.mrb[0].mxu0
          %546 = vmatprep.mubr.f32.mxu0 0.0
          %547 = vmatmul.mubr.f32.gmra.mrb[0].mxu0 %v469
          %v548 = vpop.f32.mrb[0].mxu0
          %v549 = vadd.f32 0.0, %v548
          %v550 = vpop.f32.mrb[0].mxu0
          %551 = vmatprep.mubr.f32.mxu0 0.0
          %552 = vmatmul.mubr.f32.gmra.mrb[0].mxu0 %v470
          %v553 = vpop.f32.mrb[0].mxu0
          %v554 = vadd.f32 0.0, %v553
          %v555 = vpop.f32.mrb[0].mxu0
          %556 = vdwg.mxu0
          %vm557 = vcmask 31744
          %v558 = vsel %vm557, %v539, -inf
          %559 = vmax.xlane.f32.xlu0 %v558
          %v560 = vpop.xlane.xlu0 %559
          %v561 = vsel %vm557, %v544, -inf
          %562 = vmax.xlane.f32.xlu0 %v561
          %v563 = vpop.xlane.xlu0 %562
          %v564 = vsel %vm557, %v549, -inf
          %565 = vmax.xlane.f32.xlu0 %v564
          %v566 = vpop.xlane.xlu0 %565
          %v567 = vsel %vm557, %v554, -inf
          %568 = vmax.xlane.f32.xlu0 %v567
          %v569 = vpop.xlane.xlu0 %568
          %v570 = vsub.f32 %v539, %v560
          %v571 = vsub.f32 %v544, %v563
          %v572 = vsub.f32 %v549, %v566
          %v573 = vsub.f32 %v554, %v569
          %v574 = vmul.f32 %v570, 1.442695
          %v575 = vpow.pop %v574
          %v576 = vmul.f32 %v571, 1.442695
          %v577 = vpow.pop %v576
          %v578 = vmul.f32 %v572, 1.442695
          %v579 = vpow.pop %v578
          %v580 = vmul.f32 %v573, 1.442695
          %v581 = vpow.pop %v580
          %v582 = vsel %vm557, %v575, 0.0
          %583 = vadd.xlane.f32.xlu0 %v582
          %v584 = vpop.xlane.xlu0 %583
          %v585 = vsel %vm557, %v577, 0.0
          %586 = vadd.xlane.f32.xlu0 %v585
          %v587 = vpop.xlane.xlu0 %586
          %v588 = vsel %vm557, %v579, 0.0
          %589 = vadd.xlane.f32.xlu0 %v588
          %v590 = vpop.xlane.xlu0 %589
          %v591 = vsel %vm557, %v581, 0.0
          %592 = vadd.xlane.f32.xlu0 %v591
          %v593 = vpop.xlane.xlu0 %592
          %v594 = vrcp.pop %v584
          %v595 = vrcp.pop %v587
          %v596 = vrcp.pop %v590
          %v597 = vrcp.pop %v593
          %v598 = vmul.f32 %v575, %v594
          %v599 = vmul.f32 %v577, %v595
          %v600 = vmul.f32 %v579, %v596
          %v601 = vmul.f32 %v581, %v597
          %v602 = vld [vmem:[%s2] sm:$0xf]
          %603 = vmatprep.subr.mxu0 0.0
          %604 = vmatpush1.xpose.msra.mxu0 %v602
          %605 = vmatprep.subr.mxu0 0.0
          %606 = vmatpush1.xpose.msra.mxu0 0.0
          %607 = vmatprep.subr.mxu0 0.0
          %608 = vmatpush1.xpose.msra.mxu0 0.0
          %609 = vmatprep.subr.mxu0 0.0
          %610 = vmatpush1.xpose.msra.mxu0 0.0
          %611 = vmatprep.subr.mxu0 0.0
          %612 = vmatpush1.xpose.msra.mxu0 0.0
          %613 = vmatprep.subr.mxu0 0.0
          %614 = vmatpush1.xpose.msra.mxu0 0.0
          %615 = vmatprep.subr.mxu0 0.0
          %616 = vmatpush1.xpose.msra.mxu0 0.0
          %617 = vmatprep.subr.mxu0 0.0
          %618 = vmatpush1.xpose.msra.mxu0 0.0
          %619 = vmatprep.subr.mxu0 0.0
          %620 = vmatpush1.xpose.msra.mxu0 0.0
          %621 = vmatprep.subr.mxu0 0.0
          %622 = vmatpush1.xpose.msra.mxu0 0.0
          %623 = vmatprep.subr.mxu0 0.0
          %624 = vmatpush1.xpose.msra.mxu0 0.0
          %625 = vmatprep.subr.mxu0 0.0
          %626 = vmatpush1.xpose.msra.mxu0 0.0
          %627 = vmatprep.subr.mxu0 0.0
          %628 = vmatpush1.xpose.msra.mxu0 0.0
          %629 = vmatprep.subr.mxu0 0.0
          %630 = vmatpush1.xpose.msra.mxu0 0.0
          %631 = vmatprep.subr.mxu0 0.0
          %632 = vmatpush1.xpose.msra.mxu0 0.0
          %633 = vmatprep.subr.mxu0 0.0
          %634 = vmatpush1.xpose.msra.mxu0 0.0
          %635 = vmatprep.subr.mxu0 0.0
          %636 = vmatpush1.xpose.msra.mxu0 0.0
          %637 = vmatprep.subr.mxu0 0.0
          %638 = vmatpush1.xpose.msra.mxu0 0.0
          %639 = vmatprep.subr.mxu0 0.0
          %640 = vmatpush1.xpose.msra.mxu0 0.0
          %641 = vmatprep.subr.mxu0 0.0
          %642 = vmatpush1.xpose.msra.mxu0 0.0
          %643 = vmatprep.subr.mxu0 0.0
          %644 = vmatpush1.xpose.msra.mxu0 0.0
          %645 = vmatprep.subr.mxu0 0.0
          %646 = vmatpush1.xpose.msra.mxu0 0.0
          %647 = vmatprep.subr.mxu0 0.0
          %648 = vmatpush1.xpose.msra.mxu0 0.0
          %649 = vmatprep.subr.mxu0 0.0
          %650 = vmatpush1.xpose.msra.mxu0 0.0
          %651 = vmatprep.subr.mxu0 0.0
          %652 = vmatpush1.xpose.msra.mxu0 0.0
          %653 = vmatprep.subr.mxu0 0.0
          %654 = vmatpush1.xpose.msra.mxu0 0.0
          %655 = vmatprep.subr.mxu0 0.0
          %656 = vmatpush1.xpose.msra.mxu0 0.0
          %657 = vmatprep.subr.mxu0 0.0
          %658 = vmatpush1.xpose.msra.mxu0 0.0
          %659 = vmatprep.subr.mxu0 0.0
          %660 = vmatpush1.xpose.msra.mxu0 0.0
          %661 = vmatprep.subr.mxu0 0.0
          %662 = vmatpush1.xpose.msra.mxu0 0.0
          %663 = vmatprep.subr.mxu0 0.0
          %664 = vmatpush1.xpose.msra.mxu0 0.0
          %665 = vmatprep.subr.mxu0 0.0
          %666 = vmatpush1.xpose.msra.mxu0 0.0
          %667 = vmatprep.mubr.f32.mxu0 0.0
          %668 = vmatmul.mubr.f32.gmra.mrb[0].mxu0 %v467
          %v669 = vpop.f32.mrb[0].mxu0
          %v670 = vadd.f32 0.0, %v669
          %v671 = vpop.f32.mrb[0].mxu0
          %672 = vmatprep.mubr.f32.mxu0 0.0
          %673 = vmatmul.mubr.f32.gmra.mrb[0].mxu0 %v468
          %v674 = vpop.f32.mrb[0].mxu0
          %v675 = vadd.f32 0.0, %v674
          %v676 = vpop.f32.mrb[0].mxu0
          %677 = vmatprep.mubr.f32.mxu0 0.0
          %678 = vmatmul.mubr.f32.gmra.mrb[0].mxu0 %v469
          %v679 = vpop.f32.mrb[0].mxu0
          %v680 = vadd.f32 0.0, %v679
          %v681 = vpop.f32.mrb[0].mxu0
          %682 = vmatprep.mubr.f32.mxu0 0.0
          %683 = vmatmul.mubr.f32.gmra.mrb[0].mxu0 %v470
          %v684 = vpop.f32.mrb[0].mxu0
          %v685 = vadd.f32 0.0, %v684
          %v686 = vpop.f32.mrb[0].mxu0
          %687 = vdwg.mxu0
          %v688 = vsel %vm557, %v670, -inf
          %689 = vmax.xlane.f32.xlu0 %v688
          %v690 = vpop.xlane.xlu0 %689
          %v691 = vsel %vm557, %v675, -inf
          %692 = vmax.xlane.f32.xlu0 %v691
          %v693 = vpop.xlane.xlu0 %692
          %v694 = vsel %vm557, %v680, -inf
          %695 = vmax.xlane.f32.xlu0 %v694
          %v696 = vpop.xlane.xlu0 %695
          %v697 = vsel %vm557, %v685, -inf
          %698 = vmax.xlane.f32.xlu0 %v697
          %v699 = vpop.xlane.xlu0 %698
          %v700 = vsub.f32 %v670, %v690
          %v701 = vsub.f32 %v675, %v693
          %v702 = vsub.f32 %v680, %v696
          %v703 = vsub.f32 %v685, %v699
          %v704 = vmul.f32 %v700, 1.442695
          %v705 = vpow.pop %v704
          %v706 = vmul.f32 %v701, 1.442695
          %v707 = vpow.pop %v706
          %v708 = vmul.f32 %v702, 1.442695
          %v709 = vpow.pop %v708
          %v710 = vmul.f32 %v703, 1.442695
          %v711 = vpow.pop %v710
          %v712 = vsel %vm557, %v705, 0.0
          %713 = vadd.xlane.f32.xlu0 %v712
          %v714 = vpop.xlane.xlu0 %713
          %v715 = vsel %vm557, %v707, 0.0
          %716 = vadd.xlane.f32.xlu0 %v715
          %v717 = vpop.xlane.xlu0 %716
          %v718 = vsel %vm557, %v709, 0.0
          %719 = vadd.xlane.f32.xlu0 %v718
          %v720 = vpop.xlane.xlu0 %719
          %v721 = vsel %vm557, %v711, 0.0
          %722 = vadd.xlane.f32.xlu0 %v721
          %v723 = vpop.xlane.xlu0 %722
          %v724 = vrcp.pop %v714
          %v725 = vrcp.pop %v717
          %v726 = vrcp.pop %v720
          %v727 = vrcp.pop %v723
          %v728 = vmul.f32 %v705, %v724
          %v729 = vmul.f32 %v707, %v725
          %v730 = vmul.f32 %v709, %v726
          %v731 = vmul.f32 %v711, %v727
          %v732 = vpack.c.bf16 %v729, %v728
          %v733 = vpack.c.bf16 %v731, %v730
          %735 = vset.pattern.permute.xlu0 0
          %736 = vperm.xlu0 %735, %v732
          %v737 = vpop.permute.xlu0 %736
          %740 = vset.pattern.permute.xlu0 0
          %741 = vperm.xlu0 %740, %v733
          %v742 = vpop.permute.xlu0 %741
          %744 = vst [vmem:[#allocation3] sm:$0xff] %v737
          %745 = vst [vmem:[#allocation3 + $0x8] sm:$0xff] %v737
          %746 = vst [vmem:[#allocation3 + $0x10] sm:$0xff] %v737
          %747 = vst [vmem:[#allocation3 + $0x18] sm:$0xff] %v737
          %748 = vst [vmem:[#allocation3 + $0x20] sm:$0xff] %v742
          %749 = vst [vmem:[#allocation3 + $0x28] sm:$0xff] %v742
          %750 = vst [vmem:[#allocation3 + $0x30] sm:$0xff] %v742
          %751 = vst [vmem:[#allocation3 + $0x38] sm:$0xff] %v742
          %752 = vset.pattern.permute.xlu0 1
          %753 = vperm.xlu0 %752, %v732
          %v754 = vpop.permute.xlu0 %753
          %756 = vset.pattern.permute.xlu0 1
          %757 = vperm.xlu0 %756, %v733
          %v758 = vpop.permute.xlu0 %757
          %s760 = scalar_lea.vmem [#allocation3], 64
          %761 = vst [vmem:[%s760] sm:$0xff] %v754
          %762 = vst [vmem:[%s760 + $0x8] sm:$0xff] %v754
          %763 = vst [vmem:[%s760 + $0x10] sm:$0xff] %v754
          %764 = vst [vmem:[%s760 + $0x18] sm:$0xff] %v754
          %765 = vst [vmem:[%s760 + $0x20] sm:$0xff] %v758
          %766 = vst [vmem:[%s760 + $0x28] sm:$0xff] %v758
          %767 = vst [vmem:[%s760 + $0x30] sm:$0xff] %v758
          %768 = vst [vmem:[%s760 + $0x38] sm:$0xff] %v758
          %769 = vset.pattern.permute.xlu0 2
          %770 = vperm.xlu0 %769, %v732
          %v771 = vpop.permute.xlu0 %770
          %773 = vset.pattern.permute.xlu0 2
          %774 = vperm.xlu0 %773, %v733
          %v775 = vpop.permute.xlu0 %774
          %s777 = scalar_lea.vmem [#allocation3], 128
          %778 = vst [vmem:[%s777] sm:$0xff] %v771
          %779 = vst [vmem:[%s777 + $0x8] sm:$0xff] %v771
          %780 = vst [vmem:[%s777 + $0x10] sm:$0xff] %v771
          %781 = vst [vmem:[%s777 + $0x18] sm:$0xff] %v771
          %782 = vst [vmem:[%s777 + $0x20] sm:$0xff] %v775
          %783 = vst [vmem:[%s777 + $0x28] sm:$0xff] %v775
          %784 = vst [vmem:[%s777 + $0x30] sm:$0xff] %v775
          %785 = vst [vmem:[%s777 + $0x38] sm:$0xff] %v775
          %786 = vset.pattern.permute.xlu0 3
          %787 = vperm.xlu0 %786, %v732
          %v788 = vpop.permute.xlu0 %787
          %790 = vset.pattern.permute.xlu0 3
          %791 = vperm.xlu0 %790, %v733
          %v792 = vpop.permute.xlu0 %791
          %s794 = scalar_lea.vmem [#allocation3], 192
          %795 = vst [vmem:[%s794] sm:$0xff] %v788
          %796 = vst [vmem:[%s794 + $0x8] sm:$0xff] %v788
          %797 = vst [vmem:[%s794 + $0x10] sm:$0xff] %v788
          %798 = vst [vmem:[%s794 + $0x18] sm:$0xff] %v788
          %799 = vst [vmem:[%s794 + $0x20] sm:$0xff] %v792
          %800 = vst [vmem:[%s794 + $0x28] sm:$0xff] %v792
          %801 = vst [vmem:[%s794 + $0x30] sm:$0xff] %v792
          %802 = vst [vmem:[%s794 + $0x38] sm:$0xff] %v792
          %v803 = vld [vmem:[%s4] sm:$0xf]
          %v805 = vsel %vm557, %v598, 0
          %v808 = vsel %vm557, %v599, 0
          %v811 = vsel %vm557, %v600, 0
          %v814 = vsel %vm557, %v601, 0
          %vm816 = vcmask 1043456
          %v818 = vsel %vm816, %v803, 0
          %820 = vmatprep.subr.mxu0 0.0
          %821 = vmatpush1.msra.mxu0 %v818
          %822 = vmatprep.subr.mxu0 0.0
          %823 = vmatpush1.msra.mxu0 0.0
          %824 = vmatprep.subr.mxu0 0.0
          %825 = vmatpush1.msra.mxu0 0.0
          %826 = vmatprep.subr.mxu0 0.0
          %827 = vmatpush1.msra.mxu0 0.0
          %828 = vmatprep.subr.mxu0 0.0
          %829 = vmatpush1.msra.mxu0 0.0
          %830 = vmatprep.subr.mxu0 0.0
          %831 = vmatpush1.msra.mxu0 0.0
          %832 = vmatprep.subr.mxu0 0.0
          %833 = vmatpush1.msra.mxu0 0.0
          %834 = vmatprep.subr.mxu0 0.0
          %835 = vmatpush1.msra.mxu0 0.0
          %836 = vmatprep.subr.mxu0 0.0
          %837 = vmatpush1.msra.mxu0 0.0
          %838 = vmatprep.subr.mxu0 0.0
          %839 = vmatpush1.msra.mxu0 0.0
          %840 = vmatprep.subr.mxu0 0.0
          %841 = vmatpush1.msra.mxu0 0.0
          %842 = vmatprep.subr.mxu0 0.0
          %843 = vmatpush1.msra.mxu0 0.0
          %844 = vmatprep.subr.mxu0 0.0
          %845 = vmatpush1.msra.mxu0 0.0
          %846 = vmatprep.subr.mxu0 0.0
          %847 = vmatpush1.msra.mxu0 0.0
          %848 = vmatprep.subr.mxu0 0.0
          %849 = vmatpush1.msra.mxu0 0.0
          %850 = vmatprep.subr.mxu0 0.0
          %851 = vmatpush1.msra.mxu0 0.0
          %852 = vmatprep.subr.mxu0 0.0
          %853 = vmatpush1.msra.mxu0 0.0
          %854 = vmatprep.subr.mxu0 0.0
          %855 = vmatpush1.msra.mxu0 0.0
          %856 = vmatprep.subr.mxu0 0.0
          %857 = vmatpush1.msra.mxu0 0.0
          %858 = vmatprep.subr.mxu0 0.0
          %859 = vmatpush1.msra.mxu0 0.0
          %860 = vmatprep.subr.mxu0 0.0
          %861 = vmatpush1.msra.mxu0 0.0
          %862 = vmatprep.subr.mxu0 0.0
          %863 = vmatpush1.msra.mxu0 0.0
          %864 = vmatprep.subr.mxu0 0.0
          %865 = vmatpush1.msra.mxu0 0.0
          %866 = vmatprep.subr.mxu0 0.0
          %867 = vmatpush1.msra.mxu0 0.0
          %868 = vmatprep.subr.mxu0 0.0
          %869 = vmatpush1.msra.mxu0 0.0
          %870 = vmatprep.subr.mxu0 0.0
          %871 = vmatpush1.msra.mxu0 0.0
          %872 = vmatprep.subr.mxu0 0.0
          %873 = vmatpush1.msra.mxu0 0.0
          %874 = vmatprep.subr.mxu0 0.0
          %875 = vmatpush1.msra.mxu0 0.0
          %876 = vmatprep.subr.mxu0 0.0
          %877 = vmatpush1.msra.mxu0 0.0
          %878 = vmatprep.subr.mxu0 0.0
          %879 = vmatpush1.msra.mxu0 0.0
          %880 = vmatprep.subr.mxu0 0.0
          %881 = vmatpush1.msra.mxu0 0.0
          %882 = vmatprep.subr.mxu0 0.0
          %883 = vmatpush1.msra.mxu0 0.0
          %884 = vmatprep.mubr.f32.mxu0 0.0
          %885 = vmatmul.mubr.f32.gmra.mrb[0].mxu0 %v805
          %v886 = vpop.f32.mrb[0].mxu0
          %v887 = vadd.f32 0.0, %v886
          %v888 = vpop.f32.mrb[0].mxu0
          %889 = vmatprep.mubr.f32.mxu0 0.0
          %890 = vmatmul.mubr.f32.gmra.mrb[0].mxu0 %v808
          %v891 = vpop.f32.mrb[0].mxu0
          %v892 = vadd.f32 0.0, %v891
          %v893 = vpop.f32.mrb[0].mxu0
          %894 = vmatprep.mubr.f32.mxu0 0.0
          %895 = vmatmul.mubr.f32.gmra.mrb[0].mxu0 %v811
          %v896 = vpop.f32.mrb[0].mxu0
          %v897 = vadd.f32 0.0, %v896
          %v898 = vpop.f32.mrb[0].mxu0
          %899 = vmatprep.mubr.f32.mxu0 0.0
          %900 = vmatmul.mubr.f32.gmra.mrb[0].mxu0 %v814
          %v901 = vpop.f32.mrb[0].mxu0
          %v902 = vadd.f32 0.0, %v901
          %v903 = vpop.f32.mrb[0].mxu0
          %904 = vdwg.mxu0
          %905 = vst [vmem:[#allocation2] sm:$0xff] %v887
          %906 = vst [vmem:[#allocation2 + $0x8] sm:$0xff] %v892
          %907 = vst [vmem:[#allocation2 + $0x10] sm:$0xff] %v897
          %908 = vst [vmem:[#allocation2 + $0x18] sm:$0xff] %v902
        $region75: #{cls_graph_conv_forward.5} parent=66 // pred_fallthru
          _
        %v909 = vld [vmem:[%s380] sm:$0xff]
        %v910 = vld [vmem:[%s380 + $0x8] sm:$0xff]
        %v911 = vld [vmem:[%s380 + $0x10] sm:$0xff]
        %v912 = vld [vmem:[%s380 + $0x18] sm:$0xff]
        %v913 = vunpack.c.l.s8.bf16 %v909
        %v914 = vunpack.c.l.s8.bf16 %v910
        %v915 = vunpack.c.l.s8.bf16 %v911
        %v916 = vunpack.c.l.s8.bf16 %v912
        %v917 = vunpack.c.h.s8.bf16 %v909
        %v918 = vunpack.c.h.s8.bf16 %v910
        %v919 = vunpack.c.h.s8.bf16 %v911
        %v920 = vunpack.c.h.s8.bf16 %v912
        %v921 = vld [vmem:[#allocation3] sm:$0xff]
        %v922 = vld [vmem:[#allocation3 + $0x8] sm:$0xff]
        %v923 = vld [vmem:[#allocation3 + $0x10] sm:$0xff]
        %v924 = vld [vmem:[#allocation3 + $0x18] sm:$0xff]
        %v925 = vld [vmem:[#allocation3 + $0x20] sm:$0xff]
        %v926 = vld [vmem:[#allocation3 + $0x28] sm:$0xff]
        %v927 = vld [vmem:[#allocation3 + $0x30] sm:$0xff]
        %v928 = vld [vmem:[#allocation3 + $0x38] sm:$0xff]
        %s929 = scalar_lea.vmem %s380, 32 [#allocation4]
        %v930 = vld [vmem:[%s929] sm:$0xff]
        %v931 = vld [vmem:[%s929 + $0x8] sm:$0xff]
        %v932 = vld [vmem:[%s929 + $0x10] sm:$0xff]
        %v933 = vld [vmem:[%s929 + $0x18] sm:$0xff]
        %v934 = vunpack.c.l.s8.bf16 %v930
        %v935 = vunpack.c.l.s8.bf16 %v931
        %v936 = vunpack.c.l.s8.bf16 %v932
        %v937 = vunpack.c.l.s8.bf16 %v933
        %v938 = vunpack.c.h.s8.bf16 %v930
        %v939 = vunpack.c.h.s8.bf16 %v931
        %v940 = vunpack.c.h.s8.bf16 %v932
        %v941 = vunpack.c.h.s8.bf16 %v933
        %v942 = vmul.bf16 %v921, %v934
        %v943 = vmul.bf16 %v922, %v935
        %v944 = vmul.bf16 %v923, %v936
        %v945 = vmul.bf16 %v924, %v937
        %v946 = vmul.bf16 %v925, %v938
        %v947 = vmul.bf16 %v926, %v939
        %v948 = vmul.bf16 %v927, %v940
        %v949 = vmul.bf16 %v928, %v941
        %v950 = vadd.bf16 %v913, %v942
        %v951 = vadd.bf16 %v914, %v943
        %v952 = vadd.bf16 %v915, %v944
        %v953 = vadd.bf16 %v916, %v945
        %v954 = vadd.bf16 %v917, %v946
        %v955 = vadd.bf16 %v918, %v947
        %v956 = vadd.bf16 %v919, %v948
        %v957 = vadd.bf16 %v920, %v949
        %s958 = scalar_lea.vmem [#allocation3], 64
        %v959 = vld [vmem:[%s958] sm:$0xff]
        %v960 = vld [vmem:[%s958 + $0x8] sm:$0xff]
        %v961 = vld [vmem:[%s958 + $0x10] sm:$0xff]
        %v962 = vld [vmem:[%s958 + $0x18] sm:$0xff]
        %v963 = vld [vmem:[%s958 + $0x20] sm:$0xff]
        %v964 = vld [vmem:[%s958 + $0x28] sm:$0xff]
        %v965 = vld [vmem:[%s958 + $0x30] sm:$0xff]
        %v966 = vld [vmem:[%s958 + $0x38] sm:$0xff]
        %s967 = scalar_lea.vmem %s380, 64 [#allocation4]
        %v968 = vld [vmem:[%s967] sm:$0xff]
        %v969 = vld [vmem:[%s967 + $0x8] sm:$0xff]
        %v970 = vld [vmem:[%s967 + $0x10] sm:$0xff]
        %v971 = vld [vmem:[%s967 + $0x18] sm:$0xff]
        %v972 = vunpack.c.l.s8.bf16 %v968
        %v973 = vunpack.c.l.s8.bf16 %v969
        %v974 = vunpack.c.l.s8.bf16 %v970
        %v975 = vunpack.c.l.s8.bf16 %v971
        %v976 = vunpack.c.h.s8.bf16 %v968
        %v977 = vunpack.c.h.s8.bf16 %v969
        %v978 = vunpack.c.h.s8.bf16 %v970
        %v979 = vunpack.c.h.s8.bf16 %v971
        %v980 = vmul.bf16 %v959, %v972
        %v981 = vmul.bf16 %v960, %v973
        %v982 = vmul.bf16 %v961, %v974
        %v983 = vmul.bf16 %v962, %v975
        %v984 = vmul.bf16 %v963, %v976
        %v985 = vmul.bf16 %v964, %v977
        %v986 = vmul.bf16 %v965, %v978
        %v987 = vmul.bf16 %v966, %v979
        %v988 = vadd.bf16 %v950, %v980
        %v989 = vadd.bf16 %v951, %v981
        %v990 = vadd.bf16 %v952, %v982
        %v991 = vadd.bf16 %v953, %v983
        %v992 = vadd.bf16 %v954, %v984
        %v993 = vadd.bf16 %v955, %v985
        %v994 = vadd.bf16 %v956, %v986
        %v995 = vadd.bf16 %v957, %v987
        %s996 = scalar_lea.vmem [#allocation3], 128
        %v997 = vld [vmem:[%s996] sm:$0xff]
        %v998 = vld [vmem:[%s996 + $0x8] sm:$0xff]
        %v999 = vld [vmem:[%s996 + $0x10] sm:$0xff]
        %v1000 = vld [vmem:[%s996 + $0x18] sm:$0xff]
        %v1001 = vld [vmem:[%s996 + $0x20] sm:$0xff]
        %v1002 = vld [vmem:[%s996 + $0x28] sm:$0xff]
        %v1003 = vld [vmem:[%s996 + $0x30] sm:$0xff]
        %v1004 = vld [vmem:[%s996 + $0x38] sm:$0xff]
        %s1005 = scalar_lea.vmem %s380, 96 [#allocation4]
        %v1006 = vld [vmem:[%s1005] sm:$0xff]
        %v1007 = vld [vmem:[%s1005 + $0x8] sm:$0xff]
        %v1008 = vld [vmem:[%s1005 + $0x10] sm:$0xff]
        %v1009 = vld [vmem:[%s1005 + $0x18] sm:$0xff]
        %v1010 = vunpack.c.l.s8.bf16 %v1006
        %v1011 = vunpack.c.l.s8.bf16 %v1007
        %v1012 = vunpack.c.l.s8.bf16 %v1008
        %v1013 = vunpack.c.l.s8.bf16 %v1009
        %v1014 = vunpack.c.h.s8.bf16 %v1006
        %v1015 = vunpack.c.h.s8.bf16 %v1007
        %v1016 = vunpack.c.h.s8.bf16 %v1008
        %v1017 = vunpack.c.h.s8.bf16 %v1009
        %v1018 = vmul.bf16 %v997, %v1010
        %v1019 = vmul.bf16 %v998, %v1011
        %v1020 = vmul.bf16 %v999, %v1012
        %v1021 = vmul.bf16 %v1000, %v1013
        %v1022 = vmul.bf16 %v1001, %v1014
        %v1023 = vmul.bf16 %v1002, %v1015
        %v1024 = vmul.bf16 %v1003, %v1016
        %v1025 = vmul.bf16 %v1004, %v1017
        %v1026 = vadd.bf16 %v988, %v1018
        %v1027 = vadd.bf16 %v989, %v1019
        %v1028 = vadd.bf16 %v990, %v1020
        %v1029 = vadd.bf16 %v991, %v1021
        %v1030 = vadd.bf16 %v992, %v1022
        %v1031 = vadd.bf16 %v993, %v1023
        %v1032 = vadd.bf16 %v994, %v1024
        %v1033 = vadd.bf16 %v995, %v1025
        %s1034 = scalar_lea.vmem [#allocation3], 192
        %v1035 = vld [vmem:[%s1034] sm:$0xff]
        %v1036 = vld [vmem:[%s1034 + $0x8] sm:$0xff]
        %v1037 = vld [vmem:[%s1034 + $0x10] sm:$0xff]
        %v1038 = vld [vmem:[%s1034 + $0x18] sm:$0xff]
        %v1039 = vld [vmem:[%s1034 + $0x20] sm:$0xff]
        %v1040 = vld [vmem:[%s1034 + $0x28] sm:$0xff]
        %v1041 = vld [vmem:[%s1034 + $0x30] sm:$0xff]
        %v1042 = vld [vmem:[%s1034 + $0x38] sm:$0xff]
        %s1043 = scalar_lea.vmem %s380, 128 [#allocation4]
        %v1044 = vld [vmem:[%s1043] sm:$0xff]
        %v1045 = vld [vmem:[%s1043 + $0x8] sm:$0xff]
        %v1046 = vld [vmem:[%s1043 + $0x10] sm:$0xff]
        %v1047 = vld [vmem:[%s1043 + $0x18] sm:$0xff]
        %v1048 = vunpack.c.l.s8.bf16 %v1044
        %v1049 = vunpack.c.l.s8.bf16 %v1045
        %v1050 = vunpack.c.l.s8.bf16 %v1046
        %v1051 = vunpack.c.l.s8.bf16 %v1047
        %v1052 = vunpack.c.h.s8.bf16 %v1044
        %v1053 = vunpack.c.h.s8.bf16 %v1045
        %v1054 = vunpack.c.h.s8.bf16 %v1046
        %v1055 = vunpack.c.h.s8.bf16 %v1047
        %v1056 = vmul.bf16 %v1035, %v1048
        %v1057 = vmul.bf16 %v1036, %v1049
        %v1058 = vmul.bf16 %v1037, %v1050
        %v1059 = vmul.bf16 %v1038, %v1051
        %v1060 = vmul.bf16 %v1039, %v1052
        %v1061 = vmul.bf16 %v1040, %v1053
        %v1062 = vmul.bf16 %v1041, %v1054
        %v1063 = vmul.bf16 %v1042, %v1055
        %v1064 = vadd.bf16 %v1026, %v1056
        %v1065 = vadd.bf16 %v1027, %v1057
        %v1066 = vadd.bf16 %v1028, %v1058
        %v1067 = vadd.bf16 %v1029, %v1059
        %v1068 = vadd.bf16 %v1030, %v1060
        %v1069 = vadd.bf16 %v1031, %v1061
        %v1070 = vadd.bf16 %v1032, %v1062
        %v1071 = vadd.bf16 %v1033, %v1063
        %v1072 = vld [vmem:[#allocation2] sm:$0xff]
        %v1073 = vld [vmem:[#allocation2 + $0x8] sm:$0xff]
        %v1074 = vld [vmem:[#allocation2 + $0x10] sm:$0xff]
        %v1075 = vld [vmem:[#allocation2 + $0x18] sm:$0xff]
        %v1076 = vld [vmem:[%s441] sm:$0xf]
        %v1077 = vld [vmem:[%s441 + $0x4] sm:$0xf]
        %v1078 = vld [vmem:[%s441 + $0x8] sm:$0xf]
        %v1079 = vld [vmem:[%s441 + $0xc] sm:$0xf]
        %v1080 = vld [vmem:[%s441 + $0x10] sm:$0xf]
        %v1081 = vld [vmem:[%s441 + $0x14] sm:$0xf]
        %v1082 = vld [vmem:[%s441 + $0x18] sm:$0xf]
        %v1083 = vld [vmem:[%s441 + $0x1c] sm:$0xf]
        %v1084 = vld [vmem:[%s441 + $0x20] sm:$0xf]
        %v1085 = vld [vmem:[%s441 + $0x24] sm:$0xf]
        %v1086 = vld [vmem:[%s441 + $0x28] sm:$0xf]
        %v1087 = vld [vmem:[%s441 + $0x2c] sm:$0xf]
        %v1088 = vld [vmem:[%s441 + $0x30] sm:$0xf]
        %v1089 = vld [vmem:[%s441 + $0x34] sm:$0xf]
        %v1090 = vld [vmem:[%s441 + $0x38] sm:$0xf]
        %v1091 = vld [vmem:[%s441 + $0x3c] sm:$0xf]
        %v1092 = vld [vmem:[%s441 + $0x40] sm:$0xf]
        %v1093 = vld [vmem:[%s441 + $0x44] sm:$0xf]
        %v1094 = vld [vmem:[%s441 + $0x48] sm:$0xf]
        %v1095 = vld [vmem:[%s441 + $0x4c] sm:$0xf]
        %v1096 = vld [vmem:[%s441 + $0x50] sm:$0xf]
        %v1097 = vld [vmem:[%s441 + $0x54] sm:$0xf]
        %v1098 = vld [vmem:[%s441 + $0x58] sm:$0xf]
        %v1099 = vld [vmem:[%s441 + $0x5c] sm:$0xf]
        %v1100 = vld [vmem:[%s441 + $0x60] sm:$0xf]
        %v1101 = vld [vmem:[%s441 + $0x64] sm:$0xf]
        %v1102 = vld [vmem:[%s441 + $0x68] sm:$0xf]
        %v1103 = vld [vmem:[%s441 + $0x6c] sm:$0xf]
        %v1104 = vld [vmem:[%s441 + $0x70] sm:$0xf]
        %v1105 = vld [vmem:[%s441 + $0x74] sm:$0xf]
        %v1106 = vld [vmem:[%s441 + $0x78] sm:$0xf]
        %v1107 = vld [vmem:[%s441 + $0x7c] sm:$0xf]
        %v1108 = vld [vmem:[%s441 + $0x80] sm:$0xf]
        %v1109 = vld [vmem:[%s441 + $0x84] sm:$0xf]
        %v1110 = vld [vmem:[%s441 + $0x88] sm:$0xf]
        %v1111 = vld [vmem:[%s441 + $0x8c] sm:$0xf]
        %v1112 = vld [vmem:[%s441 + $0x90] sm:$0xf]
        %v1113 = vld [vmem:[%s441 + $0x94] sm:$0xf]
        %v1114 = vld [vmem:[%s441 + $0x98] sm:$0xf]
        %v1115 = vld [vmem:[%s441 + $0x9c] sm:$0xf]
        %v1116 = vld [vmem:[%s441 + $0xa0] sm:$0xf]
        %v1117 = vld [vmem:[%s441 + $0xa4] sm:$0xf]
        %v1118 = vld [vmem:[%s441 + $0xa8] sm:$0xf]
        %v1119 = vld [vmem:[%s441 + $0xac] sm:$0xf]
        %v1120 = vld [vmem:[%s441 + $0xb0] sm:$0xf]
        %v1121 = vld [vmem:[%s441 + $0xb4] sm:$0xf]
        %v1122 = vld [vmem:[%s441 + $0xb8] sm:$0xf]
        %v1123 = vld [vmem:[%s441 + $0xbc] sm:$0xf]
        %v1124 = vld [vmem:[%s441 + $0xc0] sm:$0xf]
        %v1125 = vld [vmem:[%s441 + $0xc4] sm:$0xf]
        %v1126 = vld [vmem:[%s441 + $0xc8] sm:$0xf]
        %v1127 = vld [vmem:[%s441 + $0xcc] sm:$0xf]
        %v1128 = vld [vmem:[%s441 + $0xd0] sm:$0xf]
        %v1129 = vld [vmem:[%s441 + $0xd4] sm:$0xf]
        %v1130 = vld [vmem:[%s441 + $0xd8] sm:$0xf]
        %v1131 = vld [vmem:[%s441 + $0xdc] sm:$0xf]
        %v1132 = vld [vmem:[%s441 + $0xe0] sm:$0xf]
        %v1133 = vld [vmem:[%s441 + $0xe4] sm:$0xf]
        %v1134 = vld [vmem:[%s441 + $0xe8] sm:$0xf]
        %v1135 = vld [vmem:[%s441 + $0xec] sm:$0xf]
        %v1136 = vld [vmem:[%s441 + $0xf0] sm:$0xf]
        %v1137 = vld [vmem:[%s441 + $0xf4] sm:$0xf]
        %v1138 = vld [vmem:[%s441 + $0xf8] sm:$0xf]
        %v1139 = vld [vmem:[%s441 + $0xfc] sm:$0xf]
        %v1204 = vunpack.c.l.b16 %v1076
        %v1205 = vunpack.c.l.b16 %v1077
        %v1206 = vunpack.c.l.b16 %v1078
        %v1207 = vunpack.c.l.b16 %v1079
        %v1208 = vunpack.c.l.b16 %v1080
        %v1209 = vunpack.c.l.b16 %v1081
        %v1210 = vunpack.c.l.b16 %v1082
        %v1211 = vunpack.c.l.b16 %v1083
        %v1212 = vunpack.c.l.b16 %v1084
        %v1213 = vunpack.c.l.b16 %v1085
        %v1214 = vunpack.c.l.b16 %v1086
        %v1215 = vunpack.c.l.b16 %v1087
        %v1216 = vunpack.c.l.b16 %v1088
        %v1217 = vunpack.c.l.b16 %v1089
        %v1218 = vunpack.c.l.b16 %v1090
        %v1219 = vunpack.c.l.b16 %v1091
        %v1220 = vunpack.c.l.b16 %v1092
        %v1221 = vunpack.c.l.b16 %v1093
        %v1222 = vunpack.c.l.b16 %v1094
        %v1223 = vunpack.c.l.b16 %v1095
        %v1224 = vunpack.c.l.b16 %v1096
        %v1225 = vunpack.c.l.b16 %v1097
        %v1226 = vunpack.c.l.b16 %v1098
        %v1227 = vunpack.c.l.b16 %v1099
        %v1228 = vunpack.c.l.b16 %v1100
        %v1229 = vunpack.c.l.b16 %v1101
        %v1230 = vunpack.c.l.b16 %v1102
        %v1231 = vunpack.c.l.b16 %v1103
        %v1232 = vunpack.c.l.b16 %v1104
        %v1233 = vunpack.c.l.b16 %v1105
        %v1234 = vunpack.c.l.b16 %v1106
        %v1235 = vunpack.c.l.b16 %v1107
        %v1236 = vunpack.c.l.b16 %v1108
        %v1237 = vunpack.c.l.b16 %v1109
        %v1238 = vunpack.c.l.b16 %v1110
        %v1239 = vunpack.c.l.b16 %v1111
        %v1240 = vunpack.c.l.b16 %v1112
        %v1241 = vunpack.c.l.b16 %v1113
        %v1242 = vunpack.c.l.b16 %v1114
        %v1243 = vunpack.c.l.b16 %v1115
        %v1244 = vunpack.c.l.b16 %v1116
        %v1245 = vunpack.c.l.b16 %v1117
        %v1246 = vunpack.c.l.b16 %v1118
        %v1247 = vunpack.c.l.b16 %v1119
        %v1248 = vunpack.c.l.b16 %v1120
        %v1249 = vunpack.c.l.b16 %v1121
        %v1250 = vunpack.c.l.b16 %v1122
        %v1251 = vunpack.c.l.b16 %v1123
        %v1252 = vunpack.c.l.b16 %v1124
        %v1253 = vunpack.c.l.b16 %v1125
        %v1254 = vunpack.c.l.b16 %v1126
        %v1255 = vunpack.c.l.b16 %v1127
        %v1256 = vunpack.c.l.b16 %v1128
        %v1257 = vunpack.c.l.b16 %v1129
        %v1258 = vunpack.c.l.b16 %v1130
        %v1259 = vunpack.c.l.b16 %v1131
        %v1260 = vunpack.c.l.b16 %v1132
        %v1261 = vunpack.c.l.b16 %v1133
        %v1262 = vunpack.c.l.b16 %v1134
        %v1263 = vunpack.c.l.b16 %v1135
        %v1264 = vunpack.c.l.b16 %v1136
        %v1265 = vunpack.c.l.b16 %v1137
        %v1266 = vunpack.c.l.b16 %v1138
        %v1267 = vunpack.c.l.b16 %v1139
        %v1268 = vpack.c.b16 %v1205, %v1204
        %v1269 = vpack.c.b16 %v1207, %v1206
        %v1270 = vpack.c.b16 %v1209, %v1208
        %v1271 = vpack.c.b16 %v1211, %v1210
        %v1272 = vpack.c.b16 %v1213, %v1212
        %v1273 = vpack.c.b16 %v1215, %v1214
        %v1274 = vpack.c.b16 %v1217, %v1216
        %v1275 = vpack.c.b16 %v1219, %v1218
        %v1276 = vpack.c.b16 %v1221, %v1220
        %v1277 = vpack.c.b16 %v1223, %v1222
        %v1278 = vpack.c.b16 %v1225, %v1224
        %v1279 = vpack.c.b16 %v1227, %v1226
        %v1280 = vpack.c.b16 %v1229, %v1228
        %v1281 = vpack.c.b16 %v1231, %v1230
        %v1282 = vpack.c.b16 %v1233, %v1232
        %v1283 = vpack.c.b16 %v1235, %v1234
        %v1284 = vpack.c.b16 %v1237, %v1236
        %v1285 = vpack.c.b16 %v1239, %v1238
        %v1286 = vpack.c.b16 %v1241, %v1240
        %v1287 = vpack.c.b16 %v1243, %v1242
        %v1288 = vpack.c.b16 %v1245, %v1244
        %v1289 = vpack.c.b16 %v1247, %v1246
        %v1290 = vpack.c.b16 %v1249, %v1248
        %v1291 = vpack.c.b16 %v1251, %v1250
        %v1292 = vpack.c.b16 %v1253, %v1252
        %v1293 = vpack.c.b16 %v1255, %v1254
        %v1294 = vpack.c.b16 %v1257, %v1256
        %v1295 = vpack.c.b16 %v1259, %v1258
        %v1296 = vpack.c.b16 %v1261, %v1260
        %v1297 = vpack.c.b16 %v1263, %v1262
        %v1298 = vpack.c.b16 %v1265, %v1264
        %v1299 = vpack.c.b16 %v1267, %v1266
        %1332 = vmatprep.subr.bf16.mxu0 0
        %1333 = vmatpush1.bf16.msra.mxu0 %v1268
        %1334 = vmatprep.subr.bf16.mxu0 0
        %1335 = vmatpush1.bf16.msra.mxu0 %v1269
        %1336 = vmatprep.subr.bf16.mxu0 0
        %1337 = vmatpush1.bf16.msra.mxu0 %v1270
        %1338 = vmatprep.subr.bf16.mxu0 0
        %1339 = vmatpush1.bf16.msra.mxu0 %v1271
        %1340 = vmatprep.subr.bf16.mxu0 0
        %1341 = vmatpush1.bf16.msra.mxu0 %v1272
        %1342 = vmatprep.subr.bf16.mxu0 0
        %1343 = vmatpush1.bf16.msra.mxu0 %v1273
        %1344 = vmatprep.subr.bf16.mxu0 0
        %1345 = vmatpush1.bf16.msra.mxu0 %v1274
        %1346 = vmatprep.subr.bf16.mxu0 0
        %1347 = vmatpush1.bf16.msra.mxu0 %v1275
        %1348 = vmatprep.subr.bf16.mxu0 0
        %1349 = vmatpush1.bf16.msra.mxu0 %v1276
        %1350 = vmatprep.subr.bf16.mxu0 0
        %1351 = vmatpush1.bf16.msra.mxu0 %v1277
        %1352 = vmatprep.subr.bf16.mxu0 0
        %1353 = vmatpush1.bf16.msra.mxu0 %v1278
        %1354 = vmatprep.subr.bf16.mxu0 0
        %1355 = vmatpush1.bf16.msra.mxu0 %v1279
        %1356 = vmatprep.subr.bf16.mxu0 0
        %1357 = vmatpush1.bf16.msra.mxu0 %v1280
        %1358 = vmatprep.subr.bf16.mxu0 0
        %1359 = vmatpush1.bf16.msra.mxu0 %v1281
        %1360 = vmatprep.subr.bf16.mxu0 0
        %1361 = vmatpush1.bf16.msra.mxu0 %v1282
        %1362 = vmatprep.subr.bf16.mxu0 0
        %1363 = vmatpush1.bf16.msra.mxu0 %v1283
        %1364 = vmatprep.mubr.bf16.mxu0 %v1065
        %1365 = vmatmul.mubr.bf16.gmra.mrb[0].mxu0 %v1064
        %v1366 = vpop.f32.mrb[0].mxu0
        %v1367 = vadd.f32 0.0, %v1366
        %v1368 = vpop.f32.mrb[0].mxu0
        %v1369 = vpop.f32.mrb[0].mxu0
        %v1370 = vadd.f32 0.0, %v1369
        %v1371 = vpop.f32.mrb[0].mxu0
        %1372 = vmatprep.mubr.bf16.mxu0 %v1069
        %1373 = vmatmul.mubr.bf16.gmra.mrb[0].mxu0 %v1068
        %v1374 = vpop.f32.mrb[0].mxu0
        %v1375 = vadd.f32 0.0, %v1374
        %v1376 = vpop.f32.mrb[0].mxu0
        %v1377 = vpop.f32.mrb[0].mxu0
        %v1378 = vadd.f32 0.0, %v1377
        %v1379 = vpop.f32.mrb[0].mxu0
        %1380 = vdwg.mxu0
        %1381 = vmatprep.subr.bf16.mxu0 0
        %1382 = vmatpush1.bf16.msra.mxu0 %v1284
        %1383 = vmatprep.subr.bf16.mxu0 0
        %1384 = vmatpush1.bf16.msra.mxu0 %v1285
        %1385 = vmatprep.subr.bf16.mxu0 0
        %1386 = vmatpush1.bf16.msra.mxu0 %v1286
        %1387 = vmatprep.subr.bf16.mxu0 0
        %1388 = vmatpush1.bf16.msra.mxu0 %v1287
        %1389 = vmatprep.subr.bf16.mxu0 0
        %1390 = vmatpush1.bf16.msra.mxu0 %v1288
        %1391 = vmatprep.subr.bf16.mxu0 0
        %1392 = vmatpush1.bf16.msra.mxu0 %v1289
        %1393 = vmatprep.subr.bf16.mxu0 0
        %1394 = vmatpush1.bf16.msra.mxu0 %v1290
        %1395 = vmatprep.subr.bf16.mxu0 0
        %1396 = vmatpush1.bf16.msra.mxu0 %v1291
        %1397 = vmatprep.subr.bf16.mxu0 0
        %1398 = vmatpush1.bf16.msra.mxu0 %v1292
        %1399 = vmatprep.subr.bf16.mxu0 0
        %1400 = vmatpush1.bf16.msra.mxu0 %v1293
        %1401 = vmatprep.subr.bf16.mxu0 0
        %1402 = vmatpush1.bf16.msra.mxu0 %v1294
        %1403 = vmatprep.subr.bf16.mxu0 0
        %1404 = vmatpush1.bf16.msra.mxu0 %v1295
        %1405 = vmatprep.subr.bf16.mxu0 0
        %1406 = vmatpush1.bf16.msra.mxu0 %v1296
        %1407 = vmatprep.subr.bf16.mxu0 0
        %1408 = vmatpush1.bf16.msra.mxu0 %v1297
        %1409 = vmatprep.subr.bf16.mxu0 0
        %1410 = vmatpush1.bf16.msra.mxu0 %v1298
        %1411 = vmatprep.subr.bf16.mxu0 0
        %1412 = vmatpush1.bf16.msra.mxu0 %v1299
        %1413 = vmatprep.mubr.bf16.mxu0 %v1067
        %1414 = vmatmul.mubr.bf16.gmra.mrb[0].mxu0 %v1066
        %v1415 = vpop.f32.mrb[0].mxu0
        %v1416 = vadd.f32 %v1367, %v1415
        %v1417 = vpop.f32.mrb[0].mxu0
        %v1418 = vpop.f32.mrb[0].mxu0
        %v1419 = vadd.f32 %v1370, %v1418
        %v1420 = vpop.f32.mrb[0].mxu0
        %1421 = vmatprep.mubr.bf16.mxu0 %v1071
        %1422 = vmatmul.mubr.bf16.gmra.mrb[0].mxu0 %v1070
        %v1423 = vpop.f32.mrb[0].mxu0
        %v1424 = vadd.f32 %v1375, %v1423
        %v1425 = vpop.f32.mrb[0].mxu0
        %v1426 = vpop.f32.mrb[0].mxu0
        %v1427 = vadd.f32 %v1378, %v1426
        %v1428 = vpop.f32.mrb[0].mxu0
        %1429 = vdwg.mxu0
        %v1430 = vadd.f32 %v1072, %v1416
        %v1431 = vadd.f32 %v1073, %v1419
        %v1432 = vadd.f32 %v1074, %v1424
        %v1433 = vadd.f32 %v1075, %v1427
        %1434 = vst [vmem:[#allocation2] sm:$0xff] %v1430
        %1435 = vst [vmem:[#allocation2 + $0x8] sm:$0xff] %v1431
        %1436 = vst [vmem:[#allocation2 + $0x10] sm:$0xff] %v1432
        %1437 = vst [vmem:[#allocation2 + $0x18] sm:$0xff] %v1433
        %p1438 = scmp.eq.s32.totalorder %s25, 1
        // Predicated region
        $region76: #{cls_graph_conv_forward.5} parent=66 // pred_check
          %p1439 = pneg %p1438
        $region77: #{cls_graph_conv_forward.5} parent=66 // pred_check_branch
          %1441 = sbr.rel (%p1439) target = $region79
        $region78: #{cls_graph_conv_forward.5} parent=66 // pred_region
          %v1442 = vld [vmem:[#allocation2] sm:$0xff]
          %v1443 = vld [vmem:[#allocation2 + $0x8] sm:$0xff]
          %v1444 = vld [vmem:[#allocation2 + $0x10] sm:$0xff]
          %v1445 = vld [vmem:[#allocation2 + $0x18] sm:$0xff]
          %v1446 = vmul.f32 %v1442, %v1442
          %v1447 = vmul.f32 %v1443, %v1443
          %v1448 = vmul.f32 %v1444, %v1444
          %v1449 = vmul.f32 %v1445, %v1445
          %1450 = vadd.xlane.f32.xlu0 %v1446
          %v1451 = vpop.xlane.xlu0 %1450
          %1452 = vadd.xlane.f32.xlu0 %v1447
          %v1453 = vpop.xlane.xlu0 %1452
          %1454 = vadd.xlane.f32.xlu0 %v1448
          %v1455 = vpop.xlane.xlu0 %1454
          %1456 = vadd.xlane.f32.xlu0 %v1449
          %v1457 = vpop.xlane.xlu0 %1456
          %v1458 = vmax.f32 %v1451, 1e-24
          %v1459 = vmax.f32 %v1453, 1e-24
          %v1460 = vmax.f32 %v1455, 1e-24
          %v1461 = vmax.f32 %v1457, 1e-24
          %v1462 = vrsqrt.pop %v1458
          %v1463 = vrsqrt.pop %v1459
          %v1464 = vrsqrt.pop %v1460
          %v1465 = vrsqrt.pop %v1461
          %v1466 = vmul.f32 %v1442, %v1462
          %v1467 = vmul.f32 %v1443, %v1463
          %v1468 = vmul.f32 %v1444, %v1464
          %v1469 = vmul.f32 %v1445, %v1465
          %1470 = vst [vmem:[%s454] sm:$0xff] %v1466
          %1471 = vst [vmem:[%s454 + $0x8] sm:$0xff] %v1467
          %1472 = vst [vmem:[%s454 + $0x10] sm:$0xff] %v1468
          %1473 = vst [vmem:[%s454 + $0x18] sm:$0xff] %v1469
          %v1474 = vld [vmem:[%s448] sm:$0xff]
          %v1475 = vld [vmem:[%s448 + $0x8] sm:$0xff]
          %v1476 = vld [vmem:[%s448 + $0x10] sm:$0xff]
          %v1477 = vld [vmem:[%s448 + $0x18] sm:$0xff]
          %v1478 = vadd.f32 %v1474, %v1466
          %v1479 = vadd.f32 %v1475, %v1467
          %v1480 = vadd.f32 %v1476, %v1468
          %v1481 = vadd.f32 %v1477, %v1469
          %1482 = vst [vmem:[%s460] sm:$0xff] %v1478
          %1483 = vst [vmem:[%s460 + $0x8] sm:$0xff] %v1479
          %1484 = vst [vmem:[%s460 + $0x10] sm:$0xff] %v1480
          %1485 = vst [vmem:[%s460 + $0x18] sm:$0xff] %v1481
        $region79: #{cls_graph_conv_forward.5} parent=66 // pred_fallthru
          _
        %s1486 = smul.u32 4, %s24
        %p1487 = scmp.lt.s32.totalorder %s1486, 7
        %s1488 = scalar_select %p1487, %s1486, 7
        %s1489 = smul.addr %s1488, 8
        %s1490 = scalar_lea.vmem %s7, %s1489
        %s1491 = smul.u32 4, %s24
        %p1492 = scmp.lt.s32.totalorder %s1491, 7
        %s1493 = scalar_select %p1492, %s1491, 7
        %s1494 = smul.addr %s1493, 8
        %s1495 = scalar_lea.vmem %s8, %s1494
        // Predicated region
        $region80: #{cls_graph_conv_forward.5} parent=66 // pred_check
          %p1496 = pneg %p219
        $region81: #{cls_graph_conv_forward.5} parent=66 // pred_check_branch
          %1498 = sbr.rel (%p1496) target = $region83
        $region82: #{cls_graph_conv_forward.5} parent=66 // pred_region
          %s1499 = smul.u32 4, %s24
        $region83: #{cls_graph_conv_forward.5} parent=66 // pred_fallthru
          _
        // Predicated region
        $region84: #{cls_graph_conv_forward.5} parent=66 // pred_check
          %p1500 = pneg %p245
        $region85: #{cls_graph_conv_forward.5} parent=66 // pred_check_branch
          %1502 = sbr.rel (%p1500) target = $region87
        $region86: #{cls_graph_conv_forward.5} parent=66 // pred_region
          %s1503 = smul.u32 4, %s24
        $region87: #{cls_graph_conv_forward.5} parent=66 // pred_fallthru
          _
      $region67: #{cls_graph_conv_forward.5} parent=5 // pred_fallthru
        _
      %p1504 = scmp.le.s32.totalorder 2, %s15
      // Predicated region
      $region88: #{cls_graph_conv_forward.5} parent=5 // pred_check
        %p1505 = pneg %p1504
      $region89: #{cls_graph_conv_forward.5} parent=5 // pred_check_branch
        %1507 = sbr.rel (%p1505) target = $region91
      $region90: #{cls_graph_conv_forward.5} parent=5 // pred_region
        %s1508 = ssub.s32 %s15, 2
        // Predicated region
        $region92: #{cls_graph_conv_forward.5} parent=90 // pred_check
          %p1509 = pneg %p225
        $region93: #{cls_graph_conv_forward.5} parent=90 // pred_check_branch
          %1511 = sbr.rel (%p1509) target = $region95
        $region94: #{cls_graph_conv_forward.5} parent=90 // pred_region
          %s1512 = smul.u32 4, %s26
          %p1513 = scmp.lt.s32.totalorder %s1512, 7
          %s1514 = scalar_select %p1513, %s1512, 7
          %s1515 = smul.addr %s1514, 8
          %s1516 = scalar_lea.vmem %s7, %s1515
        $region95: #{cls_graph_conv_forward.5} parent=90 // pred_fallthru
          _
        // Predicated region
        $region96: #{cls_graph_conv_forward.5} parent=90 // pred_check
          %p1517 = pneg %p251
        $region97: #{cls_graph_conv_forward.5} parent=90 // pred_check_branch
          %1519 = sbr.rel (%p1517) target = $region99
        $region98: #{cls_graph_conv_forward.5} parent=90 // pred_region
          %s1520 = smul.u32 4, %s26
          %p1521 = scmp.lt.s32.totalorder %s1520, 7
          %s1522 = scalar_select %p1521, %s1520, 7
          %s1523 = smul.addr %s1522, 8
          %s1524 = scalar_lea.vmem %s8, %s1523
        $region99: #{cls_graph_conv_forward.5} parent=90 // pred_fallthru
          _
      $region91: #{cls_graph_conv_forward.5} parent=5 // pred_fallthru
        _
    $region6: #{cls_graph_conv_forward.5} parent=1 // loop_footer
      %s19 = sadd.s32 1, %s15
    $region7: #{cls_graph_conv_forward.5} parent=1 // loop_footer_branch
      %14 = sbr.rel target = $region3
    $region8: #{cls_graph_conv_forward.5} parent=1 // loop_exit
      _

// kernel: cls_graph_conv_forward.7
$region0: #{cls_graph_conv_forward.7}
  #allocation0 [shape = 'u32[]', space=smem, size = 0x4, offset = 0x4, fixed_abs, tag = 'smem constant byte address 0x4 - core index']
  #allocation1 [shape = 'u32[144,128]{1,0:T(1,128)}', space=vmem, size = 0x12000, scoped, tag = 'internal scratch']
  #allocation2 [shape = 'f32[32,128]{1,0:T(8,128)}', space=vmem, size = 0x4000, scoped, tag = 'scratch operand']
  #allocation3 [shape = 'bf16[4,32,512]{2,1,0:T(16,128)(2,1)}', space=vmem, size = 0x20000, scoped, tag = 'scratch operand']
  %s0 = inlined_call_operand.vmem [shape: f32[64,128], index: 0, kind: input, shape index: {}]
  %s1 = inlined_call_operand.vmem [shape: bf16[1024,128], index: 1, kind: input, shape index: {}]
  %s2 = inlined_call_operand.vmem [shape: f32[4,128], index: 2, kind: input, shape index: {}]
  %s3 = inlined_call_operand.vmem [shape: f32[4,128], index: 3, kind: input, shape index: {}]
  %s4 = inlined_call_operand.vmem [shape: f32[4,128], index: 4, kind: input, shape index: {}]
  %s5 = inlined_call_operand.vmem [shape: s8[5,64,1024], index: 5, kind: input, shape index: {}]
  %s6 = inlined_call_operand.vmem [shape: f32[64,128], index: 6, kind: input, shape index: {}]
  %s7 = inlined_call_operand.hbm [shape: f32[64,128], index: 7, kind: output, shape index: {0}]
  %s8 = inlined_call_operand.hbm [shape: f32[64,128], index: 8, kind: output, shape index: {1}]
  %9 = xla_tuple %s7, %s8
  %s10 = sld [smem:[#allocation0]]
  $region100: #{cls_graph_conv_forward.7} parent=0
    _
  %s12 = ssub.s32 1, %s10
  %s13 = scalar_select 0, %s12, %s10
  $region1: #{cls_graph_conv_forward.7} parent=0
    #allocation4 [shape = 'u8[163840]{0}', space=vmem, size = 0x28000, scoped, tag = 'input window, operand 5']
    #allocation5 [shape = 'u8[32768]{0}', space=vmem, size = 0x8000, scoped, tag = 'output window, operand 0']
    #allocation6 [shape = 's32[2]{0}', space=sflag, size = 0x8, scoped, tag = 'scoped memory for cls_graph_conv_forward.7']
    #allocation7 [shape = 'u8[32768]{0}', space=vmem, size = 0x8000, scoped, tag = 'output window, operand 1']
    #allocation8 [shape = 's32[2]{0}', space=sflag, size = 0x8, scoped, tag = 'scoped memory for cls_graph_conv_forward.7']
    %14 = vsyncpa [#allocation6], 0
    %s15 = scalar_lea.sflag [#allocation6], 1
    %16 = vsyncpa %s15, 0
    %17 = vsyncpa [#allocation8], 0
    %s18 = scalar_lea.sflag [#allocation8], 1
    %19 = vsyncpa %s18, 0
    loop: start=0, step=1, limit=6
    $region2: #{cls_graph_conv_forward.7} parent=1 // loop_pre_header
      _
    $region3: #{cls_graph_conv_forward.7} parent=1 // loop_header
      %s21 = sphi 0, %s25
      %p22 = scmp.ge.s32.totalorder %s21, 6
      %s28 = sphi 0, %s40
      %s29 = sphi 0, %s36
      %s30 = sphi 0, %s28
      %s31 = sphi 0, %s29
      %s32 = sphi 0, %s30
      %s33 = sphi 0, %s31
      %s43 = sphi 0, %s45
      %s46 = sphi 0, %s43
      %s47 = sphi 0, %s46
      %s63 = sphi 0, %s47
      %s69 = sphi 0, %s71
      %s72 = sphi 0, %s69
      %s73 = sphi 0, %s72
      %s89 = sphi 0, %s73
      %s93 = sphi 0, %s93
      %s95 = sphi 0, %s93
      %s96 = sphi 0, %s95
      %s110 = sphi 0, %s96
      %s114 = sphi 0, %s114
      %s116 = sphi 0, %s114
      %s117 = sphi 0, %s116
      %s131 = sphi 0, %s117
      %s135 = sphi 0, %s135
      %s137 = sphi 0, %s135
      %s138 = sphi 0, %s137
      %s152 = sphi 0, %s138
      %s160 = sphi 0, %s162
      %s163 = sphi 0, %s160
      %s164 = sphi 0, %s163
      %s180 = sphi 0, %s164
      %s186 = sphi 0, %s188
      %s189 = sphi 0, %s186
      %s190 = sphi 0, %s189
      %s206 = sphi 0, %s190
      %s212 = sphi 0, %s214
      %s215 = sphi 0, %s212
      %s216 = sphi 0, %s215
      %s232 = sphi 0, %s216
      %s238 = sphi 0, %s240
      %s241 = sphi 0, %s238
      %s242 = sphi 0, %s241
      %s258 = sphi 0, %s242
    $region4: #{cls_graph_conv_forward.7} parent=1 // loop_header_branch
      %24 = sbr.rel (%p22) target = $region8
    $region5: #{cls_graph_conv_forward.7} parent=1 // loop_body
      %s26 = ssub.s32 %s21, 1
      %s27 = ssub.s32 %s21, 2
      %s34 = sadd.s32 1, %s29
      %p35 = scmp.ge.s32.totalorder %s34, 2
      %s36 = scalar_select %p35, 0, %s34
      %s37 = sadd.s32 1, %s28
      %s38 = scalar_select %p35, %s37, %s28
      %p39 = scmp.ge.s32.totalorder %s38, 2
      %s40 = scalar_select %p39, 0, %s38
      %s41 = ssub.s32 %s28, %s40
      %p42 = scmp.eq.s32.totalorder %s41, 0
      %s44 = sadd.s32 %s43, 1
      %s45 = scalar_select %p42, %s43, %s44
      %p48 = pneg %p42
      %p49 = scmp.eq.s32.totalorder %s21, 3
      %p50 = por %p48, %p49
      %p51 = scmp.ne.s32.totalorder %s43, %s46
      %p52 = scmp.eq.s32.totalorder %s21, 0
      %p53 = por %p51, %p52
      %p54 = scmp.ne.s32.totalorder %s43, %s46
      %p55 = scmp.eq.s32.totalorder %s26, 3
      %p56 = por %p54, %p55
      %p57 = scmp.ne.s32.totalorder %s46, %s47
      %p58 = scmp.eq.s32.totalorder %s26, 0
      %p59 = por %p57, %p58
      %p60 = scmp.ne.s32.totalorder %s46, %s47
      %p61 = scmp.eq.s32.totalorder %s27, 3
      %p62 = por %p60, %p61
      %p64 = scmp.ne.s32.totalorder %s47, %s63
      %p65 = scmp.eq.s32.totalorder %s27, 0
      %p66 = por %p64, %p65
      %s67 = ssub.s32 %s29, %s36
      %p68 = scmp.eq.s32.totalorder %s67, 0
      %s70 = sadd.s32 %s69, 1
      %s71 = scalar_select %p68, %s69, %s70
      %p74 = pneg %p68
      %p75 = scmp.eq.s32.totalorder %s21, 3
      %p76 = por %p74, %p75
      %p77 = scmp.ne.s32.totalorder %s69, %s72
      %p78 = scmp.eq.s32.totalorder %s21, 0
      %p79 = por %p77, %p78
      %p80 = scmp.ne.s32.totalorder %s69, %s72
      %p81 = scmp.eq.s32.totalorder %s26, 3
      %p82 = por %p80, %p81
      %p83 = scmp.ne.s32.totalorder %s72, %s73
      %p84 = scmp.eq.s32.totalorder %s26, 0
      %p85 = por %p83, %p84
      %p86 = scmp.ne.s32.totalorder %s72, %s73
      %p87 = scmp.eq.s32.totalorder %s27, 3
      %p88 = por %p86, %p87
      %p90 = scmp.ne.s32.totalorder %s73, %s89
      %p91 = scmp.eq.s32.totalorder %s27, 0
      %p92 = por %p90, %p91
      %s94 = sadd.s32 %s93, 1
      %p97 = scmp.eq.s32.totalorder %s21, 3
      %p98 = scmp.ne.s32.totalorder %s93, %s95
      %p99 = scmp.eq.s32.totalorder %s21, 0
      %p100 = por %p98, %p99
      %p101 = scmp.ne.s32.totalorder %s93, %s95
      %p102 = scmp.eq.s32.totalorder %s26, 3
      %p103 = por %p101, %p102
      %p104 = scmp.ne.s32.totalorder %s95, %s96
      %p105 = scmp.eq.s32.totalorder %s26, 0
      %p106 = por %p104, %p105
      %p107 = scmp.ne.s32.totalorder %s95, %s96
      %p108 = scmp.eq.s32.totalorder %s27, 3
      %p109 = por %p107, %p108
      %p111 = scmp.ne.s32.totalorder %s96, %s110
      %p112 = scmp.eq.s32.totalorder %s27, 0
      %p113 = por %p111, %p112
      %s115 = sadd.s32 %s114, 1
      %p118 = scmp.eq.s32.totalorder %s21, 3
      %p119 = scmp.ne.s32.totalorder %s114, %s116
      %p120 = scmp.eq.s32.totalorder %s21, 0
      %p121 = por %p119, %p120
      %p122 = scmp.ne.s32.totalorder %s114, %s116
      %p123 = scmp.eq.s32.totalorder %s26, 3
      %p124 = por %p122, %p123
      %p125 = scmp.ne.s32.totalorder %s116, %s117
      %p126 = scmp.eq.s32.totalorder %s26, 0
      %p127 = por %p125, %p126
      %p128 = scmp.ne.s32.totalorder %s116, %s117
      %p129 = scmp.eq.s32.totalorder %s27, 3
      %p130 = por %p128, %p129
      %p132 = scmp.ne.s32.totalorder %s117, %s131
      %p133 = scmp.eq.s32.totalorder %s27, 0
      %p134 = por %p132, %p133
      %s136 = sadd.s32 %s135, 1
      %p139 = scmp.eq.s32.totalorder %s21, 3
      %p140 = scmp.ne.s32.totalorder %s135, %s137
      %p141 = scmp.eq.s32.totalorder %s21, 0
      %p142 = por %p140, %p141
      %p143 = scmp.ne.s32.totalorder %s135, %s137
      %p144 = scmp.eq.s32.totalorder %s26, 3
      %p145 = por %p143, %p144
      %p146 = scmp.ne.s32.totalorder %s137, %s138
      %p147 = scmp.eq.s32.totalorder %s26, 0
      %p148 = por %p146, %p147
      %p149 = scmp.ne.s32.totalorder %s137, %s138
      %p150 = scmp.eq.s32.totalorder %s27, 3
      %p151 = por %p149, %p150
      %p153 = scmp.ne.s32.totalorder %s138, %s152
      %p154 = scmp.eq.s32.totalorder %s27, 0
      %p155 = por %p153, %p154
      %s156 = ssub.s32 %s28, %s40
      %s157 = ssub.s32 %s29, %s36
      %s158 = sor.u32 %s156, %s157
      %p159 = scmp.eq.s32.totalorder %s158, 0
      %s161 = sadd.s32 %s160, 1
      %s162 = scalar_select %p159, %s160, %s161
      %p165 = pneg %p159
      %p166 = scmp.eq.s32.totalorder %s21, 3
      %p167 = por %p165, %p166
      %p168 = scmp.ne.s32.totalorder %s160, %s163
      %p169 = scmp.eq.s32.totalorder %s21, 0
      %p170 = por %p168, %p169
      %p171 = scmp.ne.s32.totalorder %s160, %s163
      %p172 = scmp.eq.s32.totalorder %s26, 3
      %p173 = por %p171, %p172
      %p174 = scmp.ne.s32.totalorder %s163, %s164
      %p175 = scmp.eq.s32.totalorder %s26, 0
      %p176 = por %p174, %p175
      %p177 = scmp.ne.s32.totalorder %s163, %s164
      %p178 = scmp.eq.s32.totalorder %s27, 3
      %p179 = por %p177, %p178
      %p181 = scmp.ne.s32.totalorder %s164, %s180
      %p182 = scmp.eq.s32.totalorder %s27, 0
      %p183 = por %p181, %p182
      %s184 = ssub.s32 %s28, %s40
      %p185 = scmp.eq.s32.totalorder %s184, 0
      %s187 = sadd.s32 %s186, 1
      %s188 = scalar_select %p185, %s186, %s187
      %p191 = pneg %p185
      %p192 = scmp.eq.s32.totalorder %s21, 3
      %p193 = por %p191, %p192
      %p194 = scmp.ne.s32.totalorder %s186, %s189
      %p195 = scmp.eq.s32.totalorder %s21, 0
      %p196 = por %p194, %p195
      %p197 = scmp.ne.s32.totalorder %s186, %s189
      %p198 = scmp.eq.s32.totalorder %s26, 3
      %p199 = por %p197, %p198
      %p200 = scmp.ne.s32.totalorder %s189, %s190
      %p201 = scmp.eq.s32.totalorder %s26, 0
      %p202 = por %p200, %p201
      %p203 = scmp.ne.s32.totalorder %s189, %s190
      %p204 = scmp.eq.s32.totalorder %s27, 3
      %p205 = por %p203, %p204
      %p207 = scmp.ne.s32.totalorder %s190, %s206
      %p208 = scmp.eq.s32.totalorder %s27, 0
      %p209 = por %p207, %p208
      %s210 = ssub.s32 %s28, %s40
      %p211 = scmp.eq.s32.totalorder %s210, 0
      %s213 = sadd.s32 %s212, 1
      %s214 = scalar_select %p211, %s212, %s213
      %p217 = pneg %p211
      %p218 = scmp.eq.s32.totalorder %s21, 3
      %p219 = por %p217, %p218
      %p220 = scmp.ne.s32.totalorder %s212, %s215
      %p221 = scmp.eq.s32.totalorder %s21, 0
      %p222 = por %p220, %p221
      %p223 = scmp.ne.s32.totalorder %s212, %s215
      %p224 = scmp.eq.s32.totalorder %s26, 3
      %p225 = por %p223, %p224
      %p226 = scmp.ne.s32.totalorder %s215, %s216
      %p227 = scmp.eq.s32.totalorder %s26, 0
      %p228 = por %p226, %p227
      %p229 = scmp.ne.s32.totalorder %s215, %s216
      %p230 = scmp.eq.s32.totalorder %s27, 3
      %p231 = por %p229, %p230
      %p233 = scmp.ne.s32.totalorder %s216, %s232
      %p234 = scmp.eq.s32.totalorder %s27, 0
      %p235 = por %p233, %p234
      %s236 = ssub.s32 %s28, %s40
      %p237 = scmp.eq.s32.totalorder %s236, 0
      %s239 = sadd.s32 %s238, 1
      %s240 = scalar_select %p237, %s238, %s239
      %p243 = pneg %p237
      %p244 = scmp.eq.s32.totalorder %s21, 3
      %p245 = por %p243, %p244
      %p246 = scmp.ne.s32.totalorder %s238, %s241
      %p247 = scmp.eq.s32.totalorder %s21, 0
      %p248 = por %p246, %p247
      %p249 = scmp.ne.s32.totalorder %s238, %s241
      %p250 = scmp.eq.s32.totalorder %s26, 3
      %p251 = por %p249, %p250
      %p252 = scmp.ne.s32.totalorder %s241, %s242
      %p253 = scmp.eq.s32.totalorder %s26, 0
      %p254 = por %p252, %p253
      %p255 = scmp.ne.s32.totalorder %s241, %s242
      %p256 = scmp.eq.s32.totalorder %s27, 3
      %p257 = por %p255, %p256
      %p259 = scmp.ne.s32.totalorder %s242, %s258
      %p260 = scmp.eq.s32.totalorder %s27, 0
      %p261 = por %p259, %p260
      %p262 = scmp.le.s32.totalorder 1, %s21
      %p263 = scmp.lt.s32.totalorder %s21, 5
      %p264 = pnand %p262, %p263
      %p265 = pneg %p264
      // Predicated region
      $region9: #{cls_graph_conv_forward.7} parent=5 // pred_check
        _
      $region10: #{cls_graph_conv_forward.7} parent=5 // pred_check_branch
        %267 = sbr.rel (%p264) target = $region12
      $region11: #{cls_graph_conv_forward.7} parent=5 // pred_region
        %s268 = ssub.s32 %s21, 1
        // Predicated region
        $region13: #{cls_graph_conv_forward.7} parent=11 // pred_check
          %p269 = pneg %p106
        $region14: #{cls_graph_conv_forward.7} parent=11 // pred_check_branch
          %271 = sbr.rel (%p269) target = $region16
        $region15: #{cls_graph_conv_forward.7} parent=11 // pred_region
          _
        $region16: #{cls_graph_conv_forward.7} parent=11 // pred_fallthru
          _
        // Predicated region
        $region17: #{cls_graph_conv_forward.7} parent=11 // pred_check
          %p272 = pneg %p127
        $region18: #{cls_graph_conv_forward.7} parent=11 // pred_check_branch
          %274 = sbr.rel (%p272) target = $region20
        $region19: #{cls_graph_conv_forward.7} parent=11 // pred_region
          _
        $region20: #{cls_graph_conv_forward.7} parent=11 // pred_fallthru
          _
        // Predicated region
        $region21: #{cls_graph_conv_forward.7} parent=11 // pred_check
          %p275 = pneg %p148
        $region22: #{cls_graph_conv_forward.7} parent=11 // pred_check_branch
          %277 = sbr.rel (%p275) target = $region24
        $region23: #{cls_graph_conv_forward.7} parent=11 // pred_region
          _
        $region24: #{cls_graph_conv_forward.7} parent=11 // pred_fallthru
          _
      $region12: #{cls_graph_conv_forward.7} parent=5 // pred_fallthru
        _
      %p278 = scmp.lt.s32.totalorder %s21, 4
      // Predicated region
      $region25: #{cls_graph_conv_forward.7} parent=5 // pred_check
        %p279 = pneg %p278
      $region26: #{cls_graph_conv_forward.7} parent=5 // pred_check_branch
        %281 = sbr.rel (%p279) target = $region28
      $region27: #{cls_graph_conv_forward.7} parent=5 // pred_region
        // Predicated region
        $region29: #{cls_graph_conv_forward.7} parent=27 // pred_check
          %p282 = pneg %p53
        $region30: #{cls_graph_conv_forward.7} parent=27 // pred_check_branch
          %284 = sbr.rel (%p282) target = $region32
        $region31: #{cls_graph_conv_forward.7} parent=27 // pred_region
          %s285 = smul.u32 4, %s28
          %p286 = scmp.lt.s32.totalorder %s285, 7
          %s287 = scalar_select %p286, %s285, 7
          %s288 = smul.addr %s287, 8
          %s289 = scalar_lea.vmem %s0, %s288
          %s290 = smul.u32 4, %s28
        $region32: #{cls_graph_conv_forward.7} parent=27 // pred_fallthru
          _
        // Predicated region
        $region33: #{cls_graph_conv_forward.7} parent=27 // pred_check
          %p291 = pneg %p79
        $region34: #{cls_graph_conv_forward.7} parent=27 // pred_check_branch
          %293 = sbr.rel (%p291) target = $region36
        $region35: #{cls_graph_conv_forward.7} parent=27 // pred_region
          %s294 = smul.u32 64, %s29
          %p295 = scmp.lt.s32.totalorder %s294, 127
          %s296 = scalar_select %p295, %s294, 127
          %s297 = smul.addr %s296, 4
          %s298 = scalar_lea.vmem %s1, %s297
          %s299 = smul.u32 64, %s29
        $region36: #{cls_graph_conv_forward.7} parent=27 // pred_fallthru
          _
        // Predicated region
        $region37: #{cls_graph_conv_forward.7} parent=27 // pred_check
          %p300 = pneg %p170
        $region38: #{cls_graph_conv_forward.7} parent=27 // pred_check_branch
          %302 = sbr.rel (%p300) target = $region40
        $region39: #{cls_graph_conv_forward.7} parent=27 // pred_region
          %s303 = sand.u32 %s160, 1
          %s304 = sand.u32 %s160, 1
          %s305 = smul.addr %s304, 160
          %s306 = scalar_lea.vmem [#allocation4], %s305
          %s307 = smul.u32 4, %s29
          %s308 = smul.addr %s28, 8
          %s309 = sadd.s32 %s307, %s308
          %s310 = smul.addr %s309, 8
          %s311 = scalar_lea.vmem %s5, %s310
          // Predicated region
          $region41: #{cls_graph_conv_forward.7} parent=39 // pred_check
            _
          $region42: #{cls_graph_conv_forward.7} parent=39 // pred_check_branch
            %313 = sbr.rel (0) target = $region44
          $region43: #{cls_graph_conv_forward.7} parent=39 // pred_region
            // Predicated region
            $region45: #{cls_graph_conv_forward.7} parent=43 // pred_check
              _
            $region46: #{cls_graph_conv_forward.7} parent=43 // pred_check_branch
              %315 = sbr.rel (0) target = $region48
            $region47: #{cls_graph_conv_forward.7} parent=43 // pred_region
              loop: start=0, step=1, limit=1
              $region49: #{cls_graph_conv_forward.7} parent=47 // loop_pre_header
                _
              $region50: #{cls_graph_conv_forward.7} parent=47 // loop_header
                %s317 = sphi 0, %s321
                %p318 = scmp.ge.s32.totalorder %s317, 1
                %s322 = sphi %s311, %s311
                %s323 = sphi %s306, %s306
              $region51: #{cls_graph_conv_forward.7} parent=47 // loop_header_branch
                %320 = sbr.rel (%p318) target = $region55
              $region52: #{cls_graph_conv_forward.7} parent=47 // loop_body
                %v324 = vld [vmem:[%s322] sm:$0xff]
                %325 = vst [vmem:[%s323] sm:$0xff] %v324
                %v326 = vld [vmem:[%s322 + $0x8] sm:$0xff]
                %327 = vst [vmem:[%s323 + $0x8] sm:$0xff] %v326
                %v328 = vld [vmem:[%s322 + $0x10] sm:$0xff]
                %329 = vst [vmem:[%s323 + $0x10] sm:$0xff] %v328
                %v330 = vld [vmem:[%s322 + $0x18] sm:$0xff]
                %331 = vst [vmem:[%s323 + $0x18] sm:$0xff] %v330
                %v332 = vld [vmem:[%s322 + $0x80] sm:$0xff]
                %333 = vst [vmem:[%s323 + $0x20] sm:$0xff] %v332
                %v334 = vld [vmem:[%s322 + $0x88] sm:$0xff]
                %335 = vst [vmem:[%s323 + $0x28] sm:$0xff] %v334
                %v336 = vld [vmem:[%s322 + $0x90] sm:$0xff]
                %337 = vst [vmem:[%s323 + $0x30] sm:$0xff] %v336
                %v338 = vld [vmem:[%s322 + $0x98] sm:$0xff]
                %339 = vst [vmem:[%s323 + $0x38] sm:$0xff] %v338
                %v340 = vld [vmem:[%s322 + $0x100] sm:$0xff]
                %341 = vst [vmem:[%s323 + $0x40] sm:$0xff] %v340
                %v342 = vld [vmem:[%s322 + $0x108] sm:$0xff]
                %343 = vst [vmem:[%s323 + $0x48] sm:$0xff] %v342
                %v344 = vld [vmem:[%s322 + $0x110] sm:$0xff]
                %345 = vst [vmem:[%s323 + $0x50] sm:$0xff] %v344
                %v346 = vld [vmem:[%s322 + $0x118] sm:$0xff]
                %347 = vst [vmem:[%s323 + $0x58] sm:$0xff] %v346
                %v348 = vld [vmem:[%s322 + $0x180] sm:$0xff]
                %349 = vst [vmem:[%s323 + $0x60] sm:$0xff] %v348
                %v350 = vld [vmem:[%s322 + $0x188] sm:$0xff]
                %351 = vst [vmem:[%s323 + $0x68] sm:$0xff] %v350
                %v352 = vld [vmem:[%s322 + $0x190] sm:$0xff]
                %353 = vst [vmem:[%s323 + $0x70] sm:$0xff] %v352
                %v354 = vld [vmem:[%s322 + $0x198] sm:$0xff]
                %355 = vst [vmem:[%s323 + $0x78] sm:$0xff] %v354
                %v356 = vld [vmem:[%s322 + $0x200] sm:$0xff]
                %357 = vst [vmem:[%s323 + $0x80] sm:$0xff] %v356
                %v358 = vld [vmem:[%s322 + $0x208] sm:$0xff]
                %359 = vst [vmem:[%s323 + $0x88] sm:$0xff] %v358
                %v360 = vld [vmem:[%s322 + $0x210] sm:$0xff]
                %361 = vst [vmem:[%s323 + $0x90] sm:$0xff] %v360
                %v362 = vld [vmem:[%s322 + $0x218] sm:$0xff]
                %363 = vst [vmem:[%s323 + $0x98] sm:$0xff] %v362
              $region53: #{cls_graph_conv_forward.7} parent=47 // loop_footer
                %s321 = sadd.s32 1, %s317
              $region54: #{cls_graph_conv_forward.7} parent=47 // loop_footer_branch
                %316 = sbr.rel target = $region50
              $region55: #{cls_graph_conv_forward.7} parent=47 // loop_exit
                _
            $region48: #{cls_graph_conv_forward.7} parent=43 // pred_fallthru
              _
            // Predicated region
            $region56: #{cls_graph_conv_forward.7} parent=43 // pred_check
              _
            $region57: #{cls_graph_conv_forward.7} parent=43 // pred_check_branch
              %365 = sbr.rel target = $region59
            $region58: #{cls_graph_conv_forward.7} parent=43 // pred_region
              _
            $region59: #{cls_graph_conv_forward.7} parent=43 // pred_fallthru
              _
          $region44: #{cls_graph_conv_forward.7} parent=39 // pred_fallthru
            _
          %366 = vnop
        $region40: #{cls_graph_conv_forward.7} parent=27 // pred_fallthru
          _
        // Predicated region
        $region60: #{cls_graph_conv_forward.7} parent=27 // pred_check
          %p367 = pneg %p196
        $region61: #{cls_graph_conv_forward.7} parent=27 // pred_check_branch
          %369 = sbr.rel (%p367) target = $region63
        $region62: #{cls_graph_conv_forward.7} parent=27 // pred_region
          %s370 = smul.u32 4, %s28
          %p371 = scmp.lt.s32.totalorder %s370, 7
          %s372 = scalar_select %p371, %s370, 7
          %s373 = smul.addr %s372, 8
          %s374 = scalar_lea.vmem %s6, %s373
          %s375 = smul.u32 4, %s28
        $region63: #{cls_graph_conv_forward.7} parent=27 // pred_fallthru
          _
      $region28: #{cls_graph_conv_forward.7} parent=5 // pred_fallthru
        _
      %p376 = scmp.le.s32.totalorder 1, %s21
      %p377 = scmp.lt.s32.totalorder %s21, 5
      %p378 = pnand %p376, %p377
      %p379 = pneg %p378
      // Predicated region
      $region64: #{cls_graph_conv_forward.7} parent=5 // pred_check
        _
      $region65: #{cls_graph_conv_forward.7} parent=5 // pred_check_branch
        %381 = sbr.rel (%p378) target = $region67
      $region66: #{cls_graph_conv_forward.7} parent=5 // pred_region
        %s382 = ssub.s32 %s21, 1
        %s383 = sand.u32 %s163, 1
        %s384 = sand.u32 %s163, 1
        %s385 = smul.addr %s384, 160
        %s386 = scalar_lea.vmem [#allocation4], %s385
        // Predicated region
        $region68: #{cls_graph_conv_forward.7} parent=66 // pred_check
          %p387 = pneg %p176
        $region69: #{cls_graph_conv_forward.7} parent=66 // pred_check_branch
          %389 = sbr.rel (%p387) target = $region71
        $region70: #{cls_graph_conv_forward.7} parent=66 // pred_region
          _
        $region71: #{cls_graph_conv_forward.7} parent=66 // pred_fallthru
          _
        %s390 = smul.u32 4, %s30
        %p391 = scmp.lt.s32.totalorder %s390, 7
        %s392 = scalar_select %p391, %s390, 7
        %s393 = smul.addr %s392, 8
        %s394 = scalar_lea.vmem %s0, %s393
        %p395 = pneg %p59
        %p396 = pneg %p56
        %s397 = smul.u32 64, %s31
        %p398 = scmp.lt.s32.totalorder %s397, 127
        %s399 = scalar_select %p398, %s397, 127
        %s400 = smul.addr %s399, 4
        %s401 = scalar_lea.vmem %s1, %s400
        %p402 = pneg %p85
        %p403 = pneg %p82
        %p404 = pneg %p106
        %p405 = pneg %p103
        %p406 = pneg %p127
        %p407 = pneg %p124
        %p408 = pneg %p148
        %p409 = pneg %p145
        %s410 = sand.u32 %s163, 1
        %s411 = sand.u32 %s163, 1
        %s412 = smul.addr %s411, 160
        %s413 = scalar_lea.vmem [#allocation4], %s412
        %p414 = pneg %p176
        %p415 = pneg %p173
        %s416 = smul.u32 4, %s30
        %p417 = scmp.lt.s32.totalorder %s416, 7
        %s418 = scalar_select %p417, %s416, 7
        %s419 = smul.addr %s418, 8
        %s420 = scalar_lea.vmem %s6, %s419
        %p421 = pneg %p202
        %p422 = pneg %p199
        %p423 = pneg %p228
        %p424 = pneg %p225
        %s425 = sand.u32 %s215, 1
        %s426 = scalar_lea.sflag [#allocation6], %s425
        %s427 = sand.u32 %s215, 1
        %s428 = smul.addr %s427, 32
        %s429 = scalar_lea.vmem [#allocation5], %s428
        %p430 = pneg %p254
        %p431 = pneg %p251
        %s432 = sand.u32 %s241, 1
        %s433 = scalar_lea.sflag [#allocation8], %s432
        %s434 = sand.u32 %s241, 1
        %s435 = smul.addr %s434, 32
        %s436 = scalar_lea.vmem [#allocation7], %s435
        %s437 = smul.u32 4, %s30
        %p438 = scmp.lt.s32.totalorder %s437, 7
        %s439 = scalar_select %p438, %s437, 7
        %s440 = smul.addr %s439, 8
        %s441 = scalar_lea.vmem %s0, %s440
        %s442 = smul.u32 4, %s30
        %s443 = smul.u32 64, %s31
        %p444 = scmp.lt.s32.totalorder %s443, 127
        %s445 = scalar_select %p444, %s443, 127
        %s446 = smul.addr %s445, 4
        %s447 = scalar_lea.vmem %s1, %s446
        %s448 = smul.u32 64, %s31
        %s449 = smul.u32 4, %s31
        %s450 = smul.u32 4, %s30
        %p451 = scmp.lt.s32.totalorder %s450, 7
        %s452 = scalar_select %p451, %s450, 7
        %s453 = smul.addr %s452, 8
        %s454 = scalar_lea.vmem %s6, %s453
        %s455 = smul.u32 4, %s30
        %s456 = smul.u32 4, %s30
        %s457 = smul.u32 4, %s30
        %p459 = scmp.eq.s32.totalorder %s31, 0
        // Predicated region
        $region72: #{cls_graph_conv_forward.7} parent=66 // pred_check
          %p460 = pneg %p459
        $region73: #{cls_graph_conv_forward.7} parent=66 // pred_check_branch
          %462 = sbr.rel (%p460) target = $region75
        $region74: #{cls_graph_conv_forward.7} parent=66 // pred_region
          %v463 = vld [vmem:[%s441] sm:$0xff]
          %v464 = vld [vmem:[%s441 + $0x8] sm:$0xff]
          %v465 = vld [vmem:[%s441 + $0x10] sm:$0xff]
          %v466 = vld [vmem:[%s441 + $0x18] sm:$0xff]
          %v467 = vld [vmem:[%s3] sm:$0xf]
          %468 = vmatprep.subr.mxu0 0.0
          %469 = vmatpush1.xpose.msra.mxu0 %v467
          %470 = vmatprep.subr.mxu0 0.0
          %471 = vmatpush1.xpose.msra.mxu0 0.0
          %472 = vmatprep.subr.mxu0 0.0
          %473 = vmatpush1.xpose.msra.mxu0 0.0
          %474 = vmatprep.subr.mxu0 0.0
          %475 = vmatpush1.xpose.msra.mxu0 0.0
          %476 = vmatprep.subr.mxu0 0.0
          %477 = vmatpush1.xpose.msra.mxu0 0.0
          %478 = vmatprep.subr.mxu0 0.0
          %479 = vmatpush1.xpose.msra.mxu0 0.0
          %480 = vmatprep.subr.mxu0 0.0
          %481 = vmatpush1.xpose.msra.mxu0 0.0
          %482 = vmatprep.subr.mxu0 0.0
          %483 = vmatpush1.xpose.msra.mxu0 0.0
          %484 = vmatprep.subr.mxu0 0.0
          %485 = vmatpush1.xpose.msra.mxu0 0.0
          %486 = vmatprep.subr.mxu0 0.0
          %487 = vmatpush1.xpose.msra.mxu0 0.0
          %488 = vmatprep.subr.mxu0 0.0
          %489 = vmatpush1.xpose.msra.mxu0 0.0
          %490 = vmatprep.subr.mxu0 0.0
          %491 = vmatpush1.xpose.msra.mxu0 0.0
          %492 = vmatprep.subr.mxu0 0.0
          %493 = vmatpush1.xpose.msra.mxu0 0.0
          %494 = vmatprep.subr.mxu0 0.0
          %495 = vmatpush1.xpose.msra.mxu0 0.0
          %496 = vmatprep.subr.mxu0 0.0
          %497 = vmatpush1.xpose.msra.mxu0 0.0
          %498 = vmatprep.subr.mxu0 0.0
          %499 = vmatpush1.xpose.msra.mxu0 0.0
          %500 = vmatprep.subr.mxu0 0.0
          %501 = vmatpush1.xpose.msra.mxu0 0.0
          %502 = vmatprep.subr.mxu0 0.0
          %503 = vmatpush1.xpose.msra.mxu0 0.0
          %504 = vmatprep.subr.mxu0 0.0
          %505 = vmatpush1.xpose.msra.mxu0 0.0
          %506 = vmatprep.subr.mxu0 0.0
          %507 = vmatpush1.xpose.msra.mxu0 0.0
          %508 = vmatprep.subr.mxu0 0.0
          %509 = vmatpush1.xpose.msra.mxu0 0.0
          %510 = vmatprep.subr.mxu0 0.0
          %511 = vmatpush1.xpose.msra.mxu0 0.0
          %512 = vmatprep.subr.mxu0 0.0
          %513 = vmatpush1.xpose.msra.mxu0 0.0
          %514 = vmatprep.subr.mxu0 0.0
          %515 = vmatpush1.xpose.msra.mxu0 0.0
          %516 = vmatprep.subr.mxu0 0.0
          %517 = vmatpush1.xpose.msra.mxu0 0.0
          %518 = vmatprep.subr.mxu0 0.0
          %519 = vmatpush1.xpose.msra.mxu0 0.0
          %520 = vmatprep.subr.mxu0 0.0
          %521 = vmatpush1.xpose.msra.mxu0 0.0
          %522 = vmatprep.subr.mxu0 0.0
          %523 = vmatpush1.xpose.msra.mxu0 0.0
          %524 = vmatprep.subr.mxu0 0.0
          %525 = vmatpush1.xpose.msra.mxu0 0.0
          %526 = vmatprep.subr.mxu0 0.0
          %527 = vmatpush1.xpose.msra.mxu0 0.0
          %528 = vmatprep.subr.mxu0 0.0
          %529 = vmatpush1.xpose.msra.mxu0 0.0
          %530 = vmatprep.subr.mxu0 0.0
          %531 = vmatpush1.xpose.msra.mxu0 0.0
          %532 = vmatprep.mubr.f32.mxu0 0.0
          %533 = vmatmul.mubr.f32.gmra.mrb[0].mxu0 %v463
          %v534 = vpop.f32.mrb[0].mxu0
          %v535 = vadd.f32 0.0, %v534
          %v536 = vpop.f32.mrb[0].mxu0
          %537 = vmatprep.mubr.f32.mxu0 0.0
          %538 = vmatmul.mubr.f32.gmra.mrb[0].mxu0 %v464
          %v539 = vpop.f32.mrb[0].mxu0
          %v540 = vadd.f32 0.0, %v539
          %v541 = vpop.f32.mrb[0].mxu0
          %542 = vmatprep.mubr.f32.mxu0 0.0
          %543 = vmatmul.mubr.f32.gmra.mrb[0].mxu0 %v465
          %v544 = vpop.f32.mrb[0].mxu0
          %v545 = vadd.f32 0.0, %v544
          %v546 = vpop.f32.mrb[0].mxu0
          %547 = vmatprep.mubr.f32.mxu0 0.0
          %548 = vmatmul.mubr.f32.gmra.mrb[0].mxu0 %v466
          %v549 = vpop.f32.mrb[0].mxu0
          %v550 = vadd.f32 0.0, %v549
          %v551 = vpop.f32.mrb[0].mxu0
          %552 = vdwg.mxu0
          %vm553 = vcmask 31744
          %v554 = vsel %vm553, %v535, -inf
          %555 = vmax.xlane.f32.xlu0 %v554
          %v556 = vpop.xlane.xlu0 %555
          %v557 = vsel %vm553, %v540, -inf
          %558 = vmax.xlane.f32.xlu0 %v557
          %v559 = vpop.xlane.xlu0 %558
          %v560 = vsel %vm553, %v545, -inf
          %561 = vmax.xlane.f32.xlu0 %v560
          %v562 = vpop.xlane.xlu0 %561
          %v563 = vsel %vm553, %v550, -inf
          %564 = vmax.xlane.f32.xlu0 %v563
          %v565 = vpop.xlane.xlu0 %564
          %v566 = vsub.f32 %v535, %v556
          %v567 = vsub.f32 %v540, %v559
          %v568 = vsub.f32 %v545, %v562
          %v569 = vsub.f32 %v550, %v565
          %v570 = vmul.f32 %v566, 1.442695
          %v571 = vpow.pop %v570
          %v572 = vmul.f32 %v567, 1.442695
          %v573 = vpow.pop %v572
          %v574 = vmul.f32 %v568, 1.442695
          %v575 = vpow.pop %v574
          %v576 = vmul.f32 %v569, 1.442695
          %v577 = vpow.pop %v576
          %v578 = vsel %vm553, %v571, 0.0
          %579 = vadd.xlane.f32.xlu0 %v578
          %v580 = vpop.xlane.xlu0 %579
          %v581 = vsel %vm553, %v573, 0.0
          %582 = vadd.xlane.f32.xlu0 %v581
          %v583 = vpop.xlane.xlu0 %582
          %v584 = vsel %vm553, %v575, 0.0
          %585 = vadd.xlane.f32.xlu0 %v584
          %v586 = vpop.xlane.xlu0 %585
          %v587 = vsel %vm553, %v577, 0.0
          %588 = vadd.xlane.f32.xlu0 %v587
          %v589 = vpop.xlane.xlu0 %588
          %v590 = vrcp.pop %v580
          %v591 = vrcp.pop %v583
          %v592 = vrcp.pop %v586
          %v593 = vrcp.pop %v589
          %v594 = vmul.f32 %v571, %v590
          %v595 = vmul.f32 %v573, %v591
          %v596 = vmul.f32 %v575, %v592
          %v597 = vmul.f32 %v577, %v593
          %v598 = vld [vmem:[%s2] sm:$0xf]
          %599 = vmatprep.subr.mxu0 0.0
          %600 = vmatpush1.xpose.msra.mxu0 %v598
          %601 = vmatprep.subr.mxu0 0.0
          %602 = vmatpush1.xpose.msra.mxu0 0.0
          %603 = vmatprep.subr.mxu0 0.0
          %604 = vmatpush1.xpose.msra.mxu0 0.0
          %605 = vmatprep.subr.mxu0 0.0
          %606 = vmatpush1.xpose.msra.mxu0 0.0
          %607 = vmatprep.subr.mxu0 0.0
          %608 = vmatpush1.xpose.msra.mxu0 0.0
          %609 = vmatprep.subr.mxu0 0.0
          %610 = vmatpush1.xpose.msra.mxu0 0.0
          %611 = vmatprep.subr.mxu0 0.0
          %612 = vmatpush1.xpose.msra.mxu0 0.0
          %613 = vmatprep.subr.mxu0 0.0
          %614 = vmatpush1.xpose.msra.mxu0 0.0
          %615 = vmatprep.subr.mxu0 0.0
          %616 = vmatpush1.xpose.msra.mxu0 0.0
          %617 = vmatprep.subr.mxu0 0.0
          %618 = vmatpush1.xpose.msra.mxu0 0.0
          %619 = vmatprep.subr.mxu0 0.0
          %620 = vmatpush1.xpose.msra.mxu0 0.0
          %621 = vmatprep.subr.mxu0 0.0
          %622 = vmatpush1.xpose.msra.mxu0 0.0
          %623 = vmatprep.subr.mxu0 0.0
          %624 = vmatpush1.xpose.msra.mxu0 0.0
          %625 = vmatprep.subr.mxu0 0.0
          %626 = vmatpush1.xpose.msra.mxu0 0.0
          %627 = vmatprep.subr.mxu0 0.0
          %628 = vmatpush1.xpose.msra.mxu0 0.0
          %629 = vmatprep.subr.mxu0 0.0
          %630 = vmatpush1.xpose.msra.mxu0 0.0
          %631 = vmatprep.subr.mxu0 0.0
          %632 = vmatpush1.xpose.msra.mxu0 0.0
          %633 = vmatprep.subr.mxu0 0.0
          %634 = vmatpush1.xpose.msra.mxu0 0.0
          %635 = vmatprep.subr.mxu0 0.0
          %636 = vmatpush1.xpose.msra.mxu0 0.0
          %637 = vmatprep.subr.mxu0 0.0
          %638 = vmatpush1.xpose.msra.mxu0 0.0
          %639 = vmatprep.subr.mxu0 0.0
          %640 = vmatpush1.xpose.msra.mxu0 0.0
          %641 = vmatprep.subr.mxu0 0.0
          %642 = vmatpush1.xpose.msra.mxu0 0.0
          %643 = vmatprep.subr.mxu0 0.0
          %644 = vmatpush1.xpose.msra.mxu0 0.0
          %645 = vmatprep.subr.mxu0 0.0
          %646 = vmatpush1.xpose.msra.mxu0 0.0
          %647 = vmatprep.subr.mxu0 0.0
          %648 = vmatpush1.xpose.msra.mxu0 0.0
          %649 = vmatprep.subr.mxu0 0.0
          %650 = vmatpush1.xpose.msra.mxu0 0.0
          %651 = vmatprep.subr.mxu0 0.0
          %652 = vmatpush1.xpose.msra.mxu0 0.0
          %653 = vmatprep.subr.mxu0 0.0
          %654 = vmatpush1.xpose.msra.mxu0 0.0
          %655 = vmatprep.subr.mxu0 0.0
          %656 = vmatpush1.xpose.msra.mxu0 0.0
          %657 = vmatprep.subr.mxu0 0.0
          %658 = vmatpush1.xpose.msra.mxu0 0.0
          %659 = vmatprep.subr.mxu0 0.0
          %660 = vmatpush1.xpose.msra.mxu0 0.0
          %661 = vmatprep.subr.mxu0 0.0
          %662 = vmatpush1.xpose.msra.mxu0 0.0
          %663 = vmatprep.mubr.f32.mxu0 0.0
          %664 = vmatmul.mubr.f32.gmra.mrb[0].mxu0 %v463
          %v665 = vpop.f32.mrb[0].mxu0
          %v666 = vadd.f32 0.0, %v665
          %v667 = vpop.f32.mrb[0].mxu0
          %668 = vmatprep.mubr.f32.mxu0 0.0
          %669 = vmatmul.mubr.f32.gmra.mrb[0].mxu0 %v464
          %v670 = vpop.f32.mrb[0].mxu0
          %v671 = vadd.f32 0.0, %v670
          %v672 = vpop.f32.mrb[0].mxu0
          %673 = vmatprep.mubr.f32.mxu0 0.0
          %674 = vmatmul.mubr.f32.gmra.mrb[0].mxu0 %v465
          %v675 = vpop.f32.mrb[0].mxu0
          %v676 = vadd.f32 0.0, %v675
          %v677 = vpop.f32.mrb[0].mxu0
          %678 = vmatprep.mubr.f32.mxu0 0.0
          %679 = vmatmul.mubr.f32.gmra.mrb[0].mxu0 %v466
          %v680 = vpop.f32.mrb[0].mxu0
          %v681 = vadd.f32 0.0, %v680
          %v682 = vpop.f32.mrb[0].mxu0
          %683 = vdwg.mxu0
          %v684 = vsel %vm553, %v666, -inf
          %685 = vmax.xlane.f32.xlu0 %v684
          %v686 = vpop.xlane.xlu0 %685
          %v687 = vsel %vm553, %v671, -inf
          %688 = vmax.xlane.f32.xlu0 %v687
          %v689 = vpop.xlane.xlu0 %688
          %v690 = vsel %vm553, %v676, -inf
          %691 = vmax.xlane.f32.xlu0 %v690
          %v692 = vpop.xlane.xlu0 %691
          %v693 = vsel %vm553, %v681, -inf
          %694 = vmax.xlane.f32.xlu0 %v693
          %v695 = vpop.xlane.xlu0 %694
          %v696 = vsub.f32 %v666, %v686
          %v697 = vsub.f32 %v671, %v689
          %v698 = vsub.f32 %v676, %v692
          %v699 = vsub.f32 %v681, %v695
          %v700 = vmul.f32 %v696, 1.442695
          %v701 = vpow.pop %v700
          %v702 = vmul.f32 %v697, 1.442695
          %v703 = vpow.pop %v702
          %v704 = vmul.f32 %v698, 1.442695
          %v705 = vpow.pop %v704
          %v706 = vmul.f32 %v699, 1.442695
          %v707 = vpow.pop %v706
          %v708 = vsel %vm553, %v701, 0.0
          %709 = vadd.xlane.f32.xlu0 %v708
          %v710 = vpop.xlane.xlu0 %709
          %v711 = vsel %vm553, %v703, 0.0
          %712 = vadd.xlane.f32.xlu0 %v711
          %v713 = vpop.xlane.xlu0 %712
          %v714 = vsel %vm553, %v705, 0.0
          %715 = vadd.xlane.f32.xlu0 %v714
          %v716 = vpop.xlane.xlu0 %715
          %v717 = vsel %vm553, %v707, 0.0
          %718 = vadd.xlane.f32.xlu0 %v717
          %v719 = vpop.xlane.xlu0 %718
          %v720 = vrcp.pop %v710
          %v721 = vrcp.pop %v713
          %v722 = vrcp.pop %v716
          %v723 = vrcp.pop %v719
          %v724 = vmul.f32 %v701, %v720
          %v725 = vmul.f32 %v703, %v721
          %v726 = vmul.f32 %v705, %v722
          %v727 = vmul.f32 %v707, %v723
          %v728 = vpack.c.bf16 %v725, %v724
          %v729 = vpack.c.bf16 %v727, %v726
          %731 = vset.pattern.permute.xlu0 0
          %732 = vperm.xlu0 %731, %v728
          %v733 = vpop.permute.xlu0 %732
          %736 = vset.pattern.permute.xlu0 0
          %737 = vperm.xlu0 %736, %v729
          %v738 = vpop.permute.xlu0 %737
          %740 = vst [vmem:[#allocation3] sm:$0xff] %v733
          %741 = vst [vmem:[#allocation3 + $0x8] sm:$0xff] %v733
          %742 = vst [vmem:[#allocation3 + $0x10] sm:$0xff] %v733
          %743 = vst [vmem:[#allocation3 + $0x18] sm:$0xff] %v733
          %744 = vst [vmem:[#allocation3 + $0x20] sm:$0xff] %v738
          %745 = vst [vmem:[#allocation3 + $0x28] sm:$0xff] %v738
          %746 = vst [vmem:[#allocation3 + $0x30] sm:$0xff] %v738
          %747 = vst [vmem:[#allocation3 + $0x38] sm:$0xff] %v738
          %748 = vset.pattern.permute.xlu0 1
          %749 = vperm.xlu0 %748, %v728
          %v750 = vpop.permute.xlu0 %749
          %752 = vset.pattern.permute.xlu0 1
          %753 = vperm.xlu0 %752, %v729
          %v754 = vpop.permute.xlu0 %753
          %s756 = scalar_lea.vmem [#allocation3], 64
          %757 = vst [vmem:[%s756] sm:$0xff] %v750
          %758 = vst [vmem:[%s756 + $0x8] sm:$0xff] %v750
          %759 = vst [vmem:[%s756 + $0x10] sm:$0xff] %v750
          %760 = vst [vmem:[%s756 + $0x18] sm:$0xff] %v750
          %761 = vst [vmem:[%s756 + $0x20] sm:$0xff] %v754
          %762 = vst [vmem:[%s756 + $0x28] sm:$0xff] %v754
          %763 = vst [vmem:[%s756 + $0x30] sm:$0xff] %v754
          %764 = vst [vmem:[%s756 + $0x38] sm:$0xff] %v754
          %765 = vset.pattern.permute.xlu0 2
          %766 = vperm.xlu0 %765, %v728
          %v767 = vpop.permute.xlu0 %766
          %769 = vset.pattern.permute.xlu0 2
          %770 = vperm.xlu0 %769, %v729
          %v771 = vpop.permute.xlu0 %770
          %s773 = scalar_lea.vmem [#allocation3], 128
          %774 = vst [vmem:[%s773] sm:$0xff] %v767
          %775 = vst [vmem:[%s773 + $0x8] sm:$0xff] %v767
          %776 = vst [vmem:[%s773 + $0x10] sm:$0xff] %v767
          %777 = vst [vmem:[%s773 + $0x18] sm:$0xff] %v767
          %778 = vst [vmem:[%s773 + $0x20] sm:$0xff] %v771
          %779 = vst [vmem:[%s773 + $0x28] sm:$0xff] %v771
          %780 = vst [vmem:[%s773 + $0x30] sm:$0xff] %v771
          %781 = vst [vmem:[%s773 + $0x38] sm:$0xff] %v771
          %782 = vset.pattern.permute.xlu0 3
          %783 = vperm.xlu0 %782, %v728
          %v784 = vpop.permute.xlu0 %783
          %786 = vset.pattern.permute.xlu0 3
          %787 = vperm.xlu0 %786, %v729
          %v788 = vpop.permute.xlu0 %787
          %s790 = scalar_lea.vmem [#allocation3], 192
          %791 = vst [vmem:[%s790] sm:$0xff] %v784
          %792 = vst [vmem:[%s790 + $0x8] sm:$0xff] %v784
          %793 = vst [vmem:[%s790 + $0x10] sm:$0xff] %v784
          %794 = vst [vmem:[%s790 + $0x18] sm:$0xff] %v784
          %795 = vst [vmem:[%s790 + $0x20] sm:$0xff] %v788
          %796 = vst [vmem:[%s790 + $0x28] sm:$0xff] %v788
          %797 = vst [vmem:[%s790 + $0x30] sm:$0xff] %v788
          %798 = vst [vmem:[%s790 + $0x38] sm:$0xff] %v788
          %v799 = vld [vmem:[%s4] sm:$0xf]
          %v801 = vsel %vm553, %v594, 0
          %v804 = vsel %vm553, %v595, 0
          %v807 = vsel %vm553, %v596, 0
          %v810 = vsel %vm553, %v597, 0
          %vm812 = vcmask 1043456
          %v814 = vsel %vm812, %v799, 0
          %816 = vmatprep.subr.mxu0 0.0
          %817 = vmatpush1.msra.mxu0 %v814
          %818 = vmatprep.subr.mxu0 0.0
          %819 = vmatpush1.msra.mxu0 0.0
          %820 = vmatprep.subr.mxu0 0.0
          %821 = vmatpush1.msra.mxu0 0.0
          %822 = vmatprep.subr.mxu0 0.0
          %823 = vmatpush1.msra.mxu0 0.0
          %824 = vmatprep.subr.mxu0 0.0
          %825 = vmatpush1.msra.mxu0 0.0
          %826 = vmatprep.subr.mxu0 0.0
          %827 = vmatpush1.msra.mxu0 0.0
          %828 = vmatprep.subr.mxu0 0.0
          %829 = vmatpush1.msra.mxu0 0.0
          %830 = vmatprep.subr.mxu0 0.0
          %831 = vmatpush1.msra.mxu0 0.0
          %832 = vmatprep.subr.mxu0 0.0
          %833 = vmatpush1.msra.mxu0 0.0
          %834 = vmatprep.subr.mxu0 0.0
          %835 = vmatpush1.msra.mxu0 0.0
          %836 = vmatprep.subr.mxu0 0.0
          %837 = vmatpush1.msra.mxu0 0.0
          %838 = vmatprep.subr.mxu0 0.0
          %839 = vmatpush1.msra.mxu0 0.0
          %840 = vmatprep.subr.mxu0 0.0
          %841 = vmatpush1.msra.mxu0 0.0
          %842 = vmatprep.subr.mxu0 0.0
          %843 = vmatpush1.msra.mxu0 0.0
          %844 = vmatprep.subr.mxu0 0.0
          %845 = vmatpush1.msra.mxu0 0.0
          %846 = vmatprep.subr.mxu0 0.0
          %847 = vmatpush1.msra.mxu0 0.0
          %848 = vmatprep.subr.mxu0 0.0
          %849 = vmatpush1.msra.mxu0 0.0
          %850 = vmatprep.subr.mxu0 0.0
          %851 = vmatpush1.msra.mxu0 0.0
          %852 = vmatprep.subr.mxu0 0.0
          %853 = vmatpush1.msra.mxu0 0.0
          %854 = vmatprep.subr.mxu0 0.0
          %855 = vmatpush1.msra.mxu0 0.0
          %856 = vmatprep.subr.mxu0 0.0
          %857 = vmatpush1.msra.mxu0 0.0
          %858 = vmatprep.subr.mxu0 0.0
          %859 = vmatpush1.msra.mxu0 0.0
          %860 = vmatprep.subr.mxu0 0.0
          %861 = vmatpush1.msra.mxu0 0.0
          %862 = vmatprep.subr.mxu0 0.0
          %863 = vmatpush1.msra.mxu0 0.0
          %864 = vmatprep.subr.mxu0 0.0
          %865 = vmatpush1.msra.mxu0 0.0
          %866 = vmatprep.subr.mxu0 0.0
          %867 = vmatpush1.msra.mxu0 0.0
          %868 = vmatprep.subr.mxu0 0.0
          %869 = vmatpush1.msra.mxu0 0.0
          %870 = vmatprep.subr.mxu0 0.0
          %871 = vmatpush1.msra.mxu0 0.0
          %872 = vmatprep.subr.mxu0 0.0
          %873 = vmatpush1.msra.mxu0 0.0
          %874 = vmatprep.subr.mxu0 0.0
          %875 = vmatpush1.msra.mxu0 0.0
          %876 = vmatprep.subr.mxu0 0.0
          %877 = vmatpush1.msra.mxu0 0.0
          %878 = vmatprep.subr.mxu0 0.0
          %879 = vmatpush1.msra.mxu0 0.0
          %880 = vmatprep.mubr.f32.mxu0 0.0
          %881 = vmatmul.mubr.f32.gmra.mrb[0].mxu0 %v801
          %v882 = vpop.f32.mrb[0].mxu0
          %v883 = vadd.f32 0.0, %v882
          %v884 = vpop.f32.mrb[0].mxu0
          %885 = vmatprep.mubr.f32.mxu0 0.0
          %886 = vmatmul.mubr.f32.gmra.mrb[0].mxu0 %v804
          %v887 = vpop.f32.mrb[0].mxu0
          %v888 = vadd.f32 0.0, %v887
          %v889 = vpop.f32.mrb[0].mxu0
          %890 = vmatprep.mubr.f32.mxu0 0.0
          %891 = vmatmul.mubr.f32.gmra.mrb[0].mxu0 %v807
          %v892 = vpop.f32.mrb[0].mxu0
          %v893 = vadd.f32 0.0, %v892
          %v894 = vpop.f32.mrb[0].mxu0
          %895 = vmatprep.mubr.f32.mxu0 0.0
          %896 = vmatmul.mubr.f32.gmra.mrb[0].mxu0 %v810
          %v897 = vpop.f32.mrb[0].mxu0
          %v898 = vadd.f32 0.0, %v897
          %v899 = vpop.f32.mrb[0].mxu0
          %900 = vdwg.mxu0
          %901 = vst [vmem:[#allocation2] sm:$0xff] %v883
          %902 = vst [vmem:[#allocation2 + $0x8] sm:$0xff] %v888
          %903 = vst [vmem:[#allocation2 + $0x10] sm:$0xff] %v893
          %904 = vst [vmem:[#allocation2 + $0x18] sm:$0xff] %v898
        $region75: #{cls_graph_conv_forward.7} parent=66 // pred_fallthru
          _
        %v905 = vld [vmem:[%s386] sm:$0xff]
        %v906 = vld [vmem:[%s386 + $0x8] sm:$0xff]
        %v907 = vld [vmem:[%s386 + $0x10] sm:$0xff]
        %v908 = vld [vmem:[%s386 + $0x18] sm:$0xff]
        %v909 = vunpack.c.l.s8.bf16 %v905
        %v910 = vunpack.c.l.s8.bf16 %v906
        %v911 = vunpack.c.l.s8.bf16 %v907
        %v912 = vunpack.c.l.s8.bf16 %v908
        %v913 = vunpack.c.h.s8.bf16 %v905
        %v914 = vunpack.c.h.s8.bf16 %v906
        %v915 = vunpack.c.h.s8.bf16 %v907
        %v916 = vunpack.c.h.s8.bf16 %v908
        %v917 = vld [vmem:[#allocation3] sm:$0xff]
        %v918 = vld [vmem:[#allocation3 + $0x8] sm:$0xff]
        %v919 = vld [vmem:[#allocation3 + $0x10] sm:$0xff]
        %v920 = vld [vmem:[#allocation3 + $0x18] sm:$0xff]
        %v921 = vld [vmem:[#allocation3 + $0x20] sm:$0xff]
        %v922 = vld [vmem:[#allocation3 + $0x28] sm:$0xff]
        %v923 = vld [vmem:[#allocation3 + $0x30] sm:$0xff]
        %v924 = vld [vmem:[#allocation3 + $0x38] sm:$0xff]
        %s925 = scalar_lea.vmem %s386, 32 [#allocation4]
        %v926 = vld [vmem:[%s925] sm:$0xff]
        %v927 = vld [vmem:[%s925 + $0x8] sm:$0xff]
        %v928 = vld [vmem:[%s925 + $0x10] sm:$0xff]
        %v929 = vld [vmem:[%s925 + $0x18] sm:$0xff]
        %v930 = vunpack.c.l.s8.bf16 %v926
        %v931 = vunpack.c.l.s8.bf16 %v927
        %v932 = vunpack.c.l.s8.bf16 %v928
        %v933 = vunpack.c.l.s8.bf16 %v929
        %v934 = vunpack.c.h.s8.bf16 %v926
        %v935 = vunpack.c.h.s8.bf16 %v927
        %v936 = vunpack.c.h.s8.bf16 %v928
        %v937 = vunpack.c.h.s8.bf16 %v929
        %v938 = vmul.bf16 %v917, %v930
        %v939 = vmul.bf16 %v918, %v931
        %v940 = vmul.bf16 %v919, %v932
        %v941 = vmul.bf16 %v920, %v933
        %v942 = vmul.bf16 %v921, %v934
        %v943 = vmul.bf16 %v922, %v935
        %v944 = vmul.bf16 %v923, %v936
        %v945 = vmul.bf16 %v924, %v937
        %v946 = vadd.bf16 %v909, %v938
        %v947 = vadd.bf16 %v910, %v939
        %v948 = vadd.bf16 %v911, %v940
        %v949 = vadd.bf16 %v912, %v941
        %v950 = vadd.bf16 %v913, %v942
        %v951 = vadd.bf16 %v914, %v943
        %v952 = vadd.bf16 %v915, %v944
        %v953 = vadd.bf16 %v916, %v945
        %s954 = scalar_lea.vmem [#allocation3], 64
        %v955 = vld [vmem:[%s954] sm:$0xff]
        %v956 = vld [vmem:[%s954 + $0x8] sm:$0xff]
        %v957 = vld [vmem:[%s954 + $0x10] sm:$0xff]
        %v958 = vld [vmem:[%s954 + $0x18] sm:$0xff]
        %v959 = vld [vmem:[%s954 + $0x20] sm:$0xff]
        %v960 = vld [vmem:[%s954 + $0x28] sm:$0xff]
        %v961 = vld [vmem:[%s954 + $0x30] sm:$0xff]
        %v962 = vld [vmem:[%s954 + $0x38] sm:$0xff]
        %s963 = scalar_lea.vmem %s386, 64 [#allocation4]
        %v964 = vld [vmem:[%s963] sm:$0xff]
        %v965 = vld [vmem:[%s963 + $0x8] sm:$0xff]
        %v966 = vld [vmem:[%s963 + $0x10] sm:$0xff]
        %v967 = vld [vmem:[%s963 + $0x18] sm:$0xff]
        %v968 = vunpack.c.l.s8.bf16 %v964
        %v969 = vunpack.c.l.s8.bf16 %v965
        %v970 = vunpack.c.l.s8.bf16 %v966
        %v971 = vunpack.c.l.s8.bf16 %v967
        %v972 = vunpack.c.h.s8.bf16 %v964
        %v973 = vunpack.c.h.s8.bf16 %v965
        %v974 = vunpack.c.h.s8.bf16 %v966
        %v975 = vunpack.c.h.s8.bf16 %v967
        %v976 = vmul.bf16 %v955, %v968
        %v977 = vmul.bf16 %v956, %v969
        %v978 = vmul.bf16 %v957, %v970
        %v979 = vmul.bf16 %v958, %v971
        %v980 = vmul.bf16 %v959, %v972
        %v981 = vmul.bf16 %v960, %v973
        %v982 = vmul.bf16 %v961, %v974
        %v983 = vmul.bf16 %v962, %v975
        %v984 = vadd.bf16 %v946, %v976
        %v985 = vadd.bf16 %v947, %v977
        %v986 = vadd.bf16 %v948, %v978
        %v987 = vadd.bf16 %v949, %v979
        %v988 = vadd.bf16 %v950, %v980
        %v989 = vadd.bf16 %v951, %v981
        %v990 = vadd.bf16 %v952, %v982
        %v991 = vadd.bf16 %v953, %v983
        %s992 = scalar_lea.vmem [#allocation3], 128
        %v993 = vld [vmem:[%s992] sm:$0xff]
        %v994 = vld [vmem:[%s992 + $0x8] sm:$0xff]
        %v995 = vld [vmem:[%s992 + $0x10] sm:$0xff]
        %v996 = vld [vmem:[%s992 + $0x18] sm:$0xff]
        %v997 = vld [vmem:[%s992 + $0x20] sm:$0xff]
        %v998 = vld [vmem:[%s992 + $0x28] sm:$0xff]
        %v999 = vld [vmem:[%s992 + $0x30] sm:$0xff]
        %v1000 = vld [vmem:[%s992 + $0x38] sm:$0xff]
        %s1001 = scalar_lea.vmem %s386, 96 [#allocation4]
        %v1002 = vld [vmem:[%s1001] sm:$0xff]
        %v1003 = vld [vmem:[%s1001 + $0x8] sm:$0xff]
        %v1004 = vld [vmem:[%s1001 + $0x10] sm:$0xff]
        %v1005 = vld [vmem:[%s1001 + $0x18] sm:$0xff]
        %v1006 = vunpack.c.l.s8.bf16 %v1002
        %v1007 = vunpack.c.l.s8.bf16 %v1003
        %v1008 = vunpack.c.l.s8.bf16 %v1004
        %v1009 = vunpack.c.l.s8.bf16 %v1005
        %v1010 = vunpack.c.h.s8.bf16 %v1002
        %v1011 = vunpack.c.h.s8.bf16 %v1003
        %v1012 = vunpack.c.h.s8.bf16 %v1004
        %v1013 = vunpack.c.h.s8.bf16 %v1005
        %v1014 = vmul.bf16 %v993, %v1006
        %v1015 = vmul.bf16 %v994, %v1007
        %v1016 = vmul.bf16 %v995, %v1008
        %v1017 = vmul.bf16 %v996, %v1009
        %v1018 = vmul.bf16 %v997, %v1010
        %v1019 = vmul.bf16 %v998, %v1011
        %v1020 = vmul.bf16 %v999, %v1012
        %v1021 = vmul.bf16 %v1000, %v1013
        %v1022 = vadd.bf16 %v984, %v1014
        %v1023 = vadd.bf16 %v985, %v1015
        %v1024 = vadd.bf16 %v986, %v1016
        %v1025 = vadd.bf16 %v987, %v1017
        %v1026 = vadd.bf16 %v988, %v1018
        %v1027 = vadd.bf16 %v989, %v1019
        %v1028 = vadd.bf16 %v990, %v1020
        %v1029 = vadd.bf16 %v991, %v1021
        %s1030 = scalar_lea.vmem [#allocation3], 192
        %v1031 = vld [vmem:[%s1030] sm:$0xff]
        %v1032 = vld [vmem:[%s1030 + $0x8] sm:$0xff]
        %v1033 = vld [vmem:[%s1030 + $0x10] sm:$0xff]
        %v1034 = vld [vmem:[%s1030 + $0x18] sm:$0xff]
        %v1035 = vld [vmem:[%s1030 + $0x20] sm:$0xff]
        %v1036 = vld [vmem:[%s1030 + $0x28] sm:$0xff]
        %v1037 = vld [vmem:[%s1030 + $0x30] sm:$0xff]
        %v1038 = vld [vmem:[%s1030 + $0x38] sm:$0xff]
        %s1039 = scalar_lea.vmem %s386, 128 [#allocation4]
        %v1040 = vld [vmem:[%s1039] sm:$0xff]
        %v1041 = vld [vmem:[%s1039 + $0x8] sm:$0xff]
        %v1042 = vld [vmem:[%s1039 + $0x10] sm:$0xff]
        %v1043 = vld [vmem:[%s1039 + $0x18] sm:$0xff]
        %v1044 = vunpack.c.l.s8.bf16 %v1040
        %v1045 = vunpack.c.l.s8.bf16 %v1041
        %v1046 = vunpack.c.l.s8.bf16 %v1042
        %v1047 = vunpack.c.l.s8.bf16 %v1043
        %v1048 = vunpack.c.h.s8.bf16 %v1040
        %v1049 = vunpack.c.h.s8.bf16 %v1041
        %v1050 = vunpack.c.h.s8.bf16 %v1042
        %v1051 = vunpack.c.h.s8.bf16 %v1043
        %v1052 = vmul.bf16 %v1031, %v1044
        %v1053 = vmul.bf16 %v1032, %v1045
        %v1054 = vmul.bf16 %v1033, %v1046
        %v1055 = vmul.bf16 %v1034, %v1047
        %v1056 = vmul.bf16 %v1035, %v1048
        %v1057 = vmul.bf16 %v1036, %v1049
        %v1058 = vmul.bf16 %v1037, %v1050
        %v1059 = vmul.bf16 %v1038, %v1051
        %v1060 = vadd.bf16 %v1022, %v1052
        %v1061 = vadd.bf16 %v1023, %v1053
        %v1062 = vadd.bf16 %v1024, %v1054
        %v1063 = vadd.bf16 %v1025, %v1055
        %v1064 = vadd.bf16 %v1026, %v1056
        %v1065 = vadd.bf16 %v1027, %v1057
        %v1066 = vadd.bf16 %v1028, %v1058
        %v1067 = vadd.bf16 %v1029, %v1059
        %v1068 = vld [vmem:[#allocation2] sm:$0xff]
        %v1069 = vld [vmem:[#allocation2 + $0x8] sm:$0xff]
        %v1070 = vld [vmem:[#allocation2 + $0x10] sm:$0xff]
        %v1071 = vld [vmem:[#allocation2 + $0x18] sm:$0xff]
        %v1072 = vld [vmem:[%s447] sm:$0xf]
        %v1073 = vld [vmem:[%s447 + $0x4] sm:$0xf]
        %v1074 = vld [vmem:[%s447 + $0x8] sm:$0xf]
        %v1075 = vld [vmem:[%s447 + $0xc] sm:$0xf]
        %v1076 = vld [vmem:[%s447 + $0x10] sm:$0xf]
        %v1077 = vld [vmem:[%s447 + $0x14] sm:$0xf]
        %v1078 = vld [vmem:[%s447 + $0x18] sm:$0xf]
        %v1079 = vld [vmem:[%s447 + $0x1c] sm:$0xf]
        %v1080 = vld [vmem:[%s447 + $0x20] sm:$0xf]
        %v1081 = vld [vmem:[%s447 + $0x24] sm:$0xf]
        %v1082 = vld [vmem:[%s447 + $0x28] sm:$0xf]
        %v1083 = vld [vmem:[%s447 + $0x2c] sm:$0xf]
        %v1084 = vld [vmem:[%s447 + $0x30] sm:$0xf]
        %v1085 = vld [vmem:[%s447 + $0x34] sm:$0xf]
        %v1086 = vld [vmem:[%s447 + $0x38] sm:$0xf]
        %v1087 = vld [vmem:[%s447 + $0x3c] sm:$0xf]
        %v1088 = vld [vmem:[%s447 + $0x40] sm:$0xf]
        %v1089 = vld [vmem:[%s447 + $0x44] sm:$0xf]
        %v1090 = vld [vmem:[%s447 + $0x48] sm:$0xf]
        %v1091 = vld [vmem:[%s447 + $0x4c] sm:$0xf]
        %v1092 = vld [vmem:[%s447 + $0x50] sm:$0xf]
        %v1093 = vld [vmem:[%s447 + $0x54] sm:$0xf]
        %v1094 = vld [vmem:[%s447 + $0x58] sm:$0xf]
        %v1095 = vld [vmem:[%s447 + $0x5c] sm:$0xf]
        %v1096 = vld [vmem:[%s447 + $0x60] sm:$0xf]
        %v1097 = vld [vmem:[%s447 + $0x64] sm:$0xf]
        %v1098 = vld [vmem:[%s447 + $0x68] sm:$0xf]
        %v1099 = vld [vmem:[%s447 + $0x6c] sm:$0xf]
        %v1100 = vld [vmem:[%s447 + $0x70] sm:$0xf]
        %v1101 = vld [vmem:[%s447 + $0x74] sm:$0xf]
        %v1102 = vld [vmem:[%s447 + $0x78] sm:$0xf]
        %v1103 = vld [vmem:[%s447 + $0x7c] sm:$0xf]
        %v1104 = vld [vmem:[%s447 + $0x80] sm:$0xf]
        %v1105 = vld [vmem:[%s447 + $0x84] sm:$0xf]
        %v1106 = vld [vmem:[%s447 + $0x88] sm:$0xf]
        %v1107 = vld [vmem:[%s447 + $0x8c] sm:$0xf]
        %v1108 = vld [vmem:[%s447 + $0x90] sm:$0xf]
        %v1109 = vld [vmem:[%s447 + $0x94] sm:$0xf]
        %v1110 = vld [vmem:[%s447 + $0x98] sm:$0xf]
        %v1111 = vld [vmem:[%s447 + $0x9c] sm:$0xf]
        %v1112 = vld [vmem:[%s447 + $0xa0] sm:$0xf]
        %v1113 = vld [vmem:[%s447 + $0xa4] sm:$0xf]
        %v1114 = vld [vmem:[%s447 + $0xa8] sm:$0xf]
        %v1115 = vld [vmem:[%s447 + $0xac] sm:$0xf]
        %v1116 = vld [vmem:[%s447 + $0xb0] sm:$0xf]
        %v1117 = vld [vmem:[%s447 + $0xb4] sm:$0xf]
        %v1118 = vld [vmem:[%s447 + $0xb8] sm:$0xf]
        %v1119 = vld [vmem:[%s447 + $0xbc] sm:$0xf]
        %v1120 = vld [vmem:[%s447 + $0xc0] sm:$0xf]
        %v1121 = vld [vmem:[%s447 + $0xc4] sm:$0xf]
        %v1122 = vld [vmem:[%s447 + $0xc8] sm:$0xf]
        %v1123 = vld [vmem:[%s447 + $0xcc] sm:$0xf]
        %v1124 = vld [vmem:[%s447 + $0xd0] sm:$0xf]
        %v1125 = vld [vmem:[%s447 + $0xd4] sm:$0xf]
        %v1126 = vld [vmem:[%s447 + $0xd8] sm:$0xf]
        %v1127 = vld [vmem:[%s447 + $0xdc] sm:$0xf]
        %v1128 = vld [vmem:[%s447 + $0xe0] sm:$0xf]
        %v1129 = vld [vmem:[%s447 + $0xe4] sm:$0xf]
        %v1130 = vld [vmem:[%s447 + $0xe8] sm:$0xf]
        %v1131 = vld [vmem:[%s447 + $0xec] sm:$0xf]
        %v1132 = vld [vmem:[%s447 + $0xf0] sm:$0xf]
        %v1133 = vld [vmem:[%s447 + $0xf4] sm:$0xf]
        %v1134 = vld [vmem:[%s447 + $0xf8] sm:$0xf]
        %v1135 = vld [vmem:[%s447 + $0xfc] sm:$0xf]
        %v1200 = vunpack.c.l.b16 %v1072
        %v1201 = vunpack.c.l.b16 %v1073
        %v1202 = vunpack.c.l.b16 %v1074
        %v1203 = vunpack.c.l.b16 %v1075
        %v1204 = vunpack.c.l.b16 %v1076
        %v1205 = vunpack.c.l.b16 %v1077
        %v1206 = vunpack.c.l.b16 %v1078
        %v1207 = vunpack.c.l.b16 %v1079
        %v1208 = vunpack.c.l.b16 %v1080
        %v1209 = vunpack.c.l.b16 %v1081
        %v1210 = vunpack.c.l.b16 %v1082
        %v1211 = vunpack.c.l.b16 %v1083
        %v1212 = vunpack.c.l.b16 %v1084
        %v1213 = vunpack.c.l.b16 %v1085
        %v1214 = vunpack.c.l.b16 %v1086
        %v1215 = vunpack.c.l.b16 %v1087
        %v1216 = vunpack.c.l.b16 %v1088
        %v1217 = vunpack.c.l.b16 %v1089
        %v1218 = vunpack.c.l.b16 %v1090
        %v1219 = vunpack.c.l.b16 %v1091
        %v1220 = vunpack.c.l.b16 %v1092
        %v1221 = vunpack.c.l.b16 %v1093
        %v1222 = vunpack.c.l.b16 %v1094
        %v1223 = vunpack.c.l.b16 %v1095
        %v1224 = vunpack.c.l.b16 %v1096
        %v1225 = vunpack.c.l.b16 %v1097
        %v1226 = vunpack.c.l.b16 %v1098
        %v1227 = vunpack.c.l.b16 %v1099
        %v1228 = vunpack.c.l.b16 %v1100
        %v1229 = vunpack.c.l.b16 %v1101
        %v1230 = vunpack.c.l.b16 %v1102
        %v1231 = vunpack.c.l.b16 %v1103
        %v1232 = vunpack.c.l.b16 %v1104
        %v1233 = vunpack.c.l.b16 %v1105
        %v1234 = vunpack.c.l.b16 %v1106
        %v1235 = vunpack.c.l.b16 %v1107
        %v1236 = vunpack.c.l.b16 %v1108
        %v1237 = vunpack.c.l.b16 %v1109
        %v1238 = vunpack.c.l.b16 %v1110
        %v1239 = vunpack.c.l.b16 %v1111
        %v1240 = vunpack.c.l.b16 %v1112
        %v1241 = vunpack.c.l.b16 %v1113
        %v1242 = vunpack.c.l.b16 %v1114
        %v1243 = vunpack.c.l.b16 %v1115
        %v1244 = vunpack.c.l.b16 %v1116
        %v1245 = vunpack.c.l.b16 %v1117
        %v1246 = vunpack.c.l.b16 %v1118
        %v1247 = vunpack.c.l.b16 %v1119
        %v1248 = vunpack.c.l.b16 %v1120
        %v1249 = vunpack.c.l.b16 %v1121
        %v1250 = vunpack.c.l.b16 %v1122
        %v1251 = vunpack.c.l.b16 %v1123
        %v1252 = vunpack.c.l.b16 %v1124
        %v1253 = vunpack.c.l.b16 %v1125
        %v1254 = vunpack.c.l.b16 %v1126
        %v1255 = vunpack.c.l.b16 %v1127
        %v1256 = vunpack.c.l.b16 %v1128
        %v1257 = vunpack.c.l.b16 %v1129
        %v1258 = vunpack.c.l.b16 %v1130
        %v1259 = vunpack.c.l.b16 %v1131
        %v1260 = vunpack.c.l.b16 %v1132
        %v1261 = vunpack.c.l.b16 %v1133
        %v1262 = vunpack.c.l.b16 %v1134
        %v1263 = vunpack.c.l.b16 %v1135
        %v1264 = vpack.c.b16 %v1201, %v1200
        %v1265 = vpack.c.b16 %v1203, %v1202
        %v1266 = vpack.c.b16 %v1205, %v1204
        %v1267 = vpack.c.b16 %v1207, %v1206
        %v1268 = vpack.c.b16 %v1209, %v1208
        %v1269 = vpack.c.b16 %v1211, %v1210
        %v1270 = vpack.c.b16 %v1213, %v1212
        %v1271 = vpack.c.b16 %v1215, %v1214
        %v1272 = vpack.c.b16 %v1217, %v1216
        %v1273 = vpack.c.b16 %v1219, %v1218
        %v1274 = vpack.c.b16 %v1221, %v1220
        %v1275 = vpack.c.b16 %v1223, %v1222
        %v1276 = vpack.c.b16 %v1225, %v1224
        %v1277 = vpack.c.b16 %v1227, %v1226
        %v1278 = vpack.c.b16 %v1229, %v1228
        %v1279 = vpack.c.b16 %v1231, %v1230
        %v1280 = vpack.c.b16 %v1233, %v1232
        %v1281 = vpack.c.b16 %v1235, %v1234
        %v1282 = vpack.c.b16 %v1237, %v1236
        %v1283 = vpack.c.b16 %v1239, %v1238
        %v1284 = vpack.c.b16 %v1241, %v1240
        %v1285 = vpack.c.b16 %v1243, %v1242
        %v1286 = vpack.c.b16 %v1245, %v1244
        %v1287 = vpack.c.b16 %v1247, %v1246
        %v1288 = vpack.c.b16 %v1249, %v1248
        %v1289 = vpack.c.b16 %v1251, %v1250
        %v1290 = vpack.c.b16 %v1253, %v1252
        %v1291 = vpack.c.b16 %v1255, %v1254
        %v1292 = vpack.c.b16 %v1257, %v1256
        %v1293 = vpack.c.b16 %v1259, %v1258
        %v1294 = vpack.c.b16 %v1261, %v1260
        %v1295 = vpack.c.b16 %v1263, %v1262
        %1328 = vmatprep.subr.bf16.mxu0 0
        %1329 = vmatpush1.bf16.msra.mxu0 %v1264
        %1330 = vmatprep.subr.bf16.mxu0 0
        %1331 = vmatpush1.bf16.msra.mxu0 %v1265
        %1332 = vmatprep.subr.bf16.mxu0 0
        %1333 = vmatpush1.bf16.msra.mxu0 %v1266
        %1334 = vmatprep.subr.bf16.mxu0 0
        %1335 = vmatpush1.bf16.msra.mxu0 %v1267
        %1336 = vmatprep.subr.bf16.mxu0 0
        %1337 = vmatpush1.bf16.msra.mxu0 %v1268
        %1338 = vmatprep.subr.bf16.mxu0 0
        %1339 = vmatpush1.bf16.msra.mxu0 %v1269
        %1340 = vmatprep.subr.bf16.mxu0 0
        %1341 = vmatpush1.bf16.msra.mxu0 %v1270
        %1342 = vmatprep.subr.bf16.mxu0 0
        %1343 = vmatpush1.bf16.msra.mxu0 %v1271
        %1344 = vmatprep.subr.bf16.mxu0 0
        %1345 = vmatpush1.bf16.msra.mxu0 %v1272
        %1346 = vmatprep.subr.bf16.mxu0 0
        %1347 = vmatpush1.bf16.msra.mxu0 %v1273
        %1348 = vmatprep.subr.bf16.mxu0 0
        %1349 = vmatpush1.bf16.msra.mxu0 %v1274
        %1350 = vmatprep.subr.bf16.mxu0 0
        %1351 = vmatpush1.bf16.msra.mxu0 %v1275
        %1352 = vmatprep.subr.bf16.mxu0 0
        %1353 = vmatpush1.bf16.msra.mxu0 %v1276
        %1354 = vmatprep.subr.bf16.mxu0 0
        %1355 = vmatpush1.bf16.msra.mxu0 %v1277
        %1356 = vmatprep.subr.bf16.mxu0 0
        %1357 = vmatpush1.bf16.msra.mxu0 %v1278
        %1358 = vmatprep.subr.bf16.mxu0 0
        %1359 = vmatpush1.bf16.msra.mxu0 %v1279
        %1360 = vmatprep.mubr.bf16.mxu0 %v1061
        %1361 = vmatmul.mubr.bf16.gmra.mrb[0].mxu0 %v1060
        %v1362 = vpop.f32.mrb[0].mxu0
        %v1363 = vadd.f32 0.0, %v1362
        %v1364 = vpop.f32.mrb[0].mxu0
        %v1365 = vpop.f32.mrb[0].mxu0
        %v1366 = vadd.f32 0.0, %v1365
        %v1367 = vpop.f32.mrb[0].mxu0
        %1368 = vmatprep.mubr.bf16.mxu0 %v1065
        %1369 = vmatmul.mubr.bf16.gmra.mrb[0].mxu0 %v1064
        %v1370 = vpop.f32.mrb[0].mxu0
        %v1371 = vadd.f32 0.0, %v1370
        %v1372 = vpop.f32.mrb[0].mxu0
        %v1373 = vpop.f32.mrb[0].mxu0
        %v1374 = vadd.f32 0.0, %v1373
        %v1375 = vpop.f32.mrb[0].mxu0
        %1376 = vdwg.mxu0
        %1377 = vmatprep.subr.bf16.mxu0 0
        %1378 = vmatpush1.bf16.msra.mxu0 %v1280
        %1379 = vmatprep.subr.bf16.mxu0 0
        %1380 = vmatpush1.bf16.msra.mxu0 %v1281
        %1381 = vmatprep.subr.bf16.mxu0 0
        %1382 = vmatpush1.bf16.msra.mxu0 %v1282
        %1383 = vmatprep.subr.bf16.mxu0 0
        %1384 = vmatpush1.bf16.msra.mxu0 %v1283
        %1385 = vmatprep.subr.bf16.mxu0 0
        %1386 = vmatpush1.bf16.msra.mxu0 %v1284
        %1387 = vmatprep.subr.bf16.mxu0 0
        %1388 = vmatpush1.bf16.msra.mxu0 %v1285
        %1389 = vmatprep.subr.bf16.mxu0 0
        %1390 = vmatpush1.bf16.msra.mxu0 %v1286
        %1391 = vmatprep.subr.bf16.mxu0 0
        %1392 = vmatpush1.bf16.msra.mxu0 %v1287
        %1393 = vmatprep.subr.bf16.mxu0 0
        %1394 = vmatpush1.bf16.msra.mxu0 %v1288
        %1395 = vmatprep.subr.bf16.mxu0 0
        %1396 = vmatpush1.bf16.msra.mxu0 %v1289
        %1397 = vmatprep.subr.bf16.mxu0 0
        %1398 = vmatpush1.bf16.msra.mxu0 %v1290
        %1399 = vmatprep.subr.bf16.mxu0 0
        %1400 = vmatpush1.bf16.msra.mxu0 %v1291
        %1401 = vmatprep.subr.bf16.mxu0 0
        %1402 = vmatpush1.bf16.msra.mxu0 %v1292
        %1403 = vmatprep.subr.bf16.mxu0 0
        %1404 = vmatpush1.bf16.msra.mxu0 %v1293
        %1405 = vmatprep.subr.bf16.mxu0 0
        %1406 = vmatpush1.bf16.msra.mxu0 %v1294
        %1407 = vmatprep.subr.bf16.mxu0 0
        %1408 = vmatpush1.bf16.msra.mxu0 %v1295
        %1409 = vmatprep.mubr.bf16.mxu0 %v1063
        %1410 = vmatmul.mubr.bf16.gmra.mrb[0].mxu0 %v1062
        %v1411 = vpop.f32.mrb[0].mxu0
        %v1412 = vadd.f32 %v1363, %v1411
        %v1413 = vpop.f32.mrb[0].mxu0
        %v1414 = vpop.f32.mrb[0].mxu0
        %v1415 = vadd.f32 %v1366, %v1414
        %v1416 = vpop.f32.mrb[0].mxu0
        %1417 = vmatprep.mubr.bf16.mxu0 %v1067
        %1418 = vmatmul.mubr.bf16.gmra.mrb[0].mxu0 %v1066
        %v1419 = vpop.f32.mrb[0].mxu0
        %v1420 = vadd.f32 %v1371, %v1419
        %v1421 = vpop.f32.mrb[0].mxu0
        %v1422 = vpop.f32.mrb[0].mxu0
        %v1423 = vadd.f32 %v1374, %v1422
        %v1424 = vpop.f32.mrb[0].mxu0
        %1425 = vdwg.mxu0
        %v1426 = vadd.f32 %v1068, %v1412
        %v1427 = vadd.f32 %v1069, %v1415
        %v1428 = vadd.f32 %v1070, %v1420
        %v1429 = vadd.f32 %v1071, %v1423
        %1430 = vst [vmem:[#allocation2] sm:$0xff] %v1426
        %1431 = vst [vmem:[#allocation2 + $0x8] sm:$0xff] %v1427
        %1432 = vst [vmem:[#allocation2 + $0x10] sm:$0xff] %v1428
        %1433 = vst [vmem:[#allocation2 + $0x18] sm:$0xff] %v1429
        %p1434 = scmp.eq.s32.totalorder %s31, 1
        // Predicated region
        $region76: #{cls_graph_conv_forward.7} parent=66 // pred_check
          %p1435 = pneg %p1434
        $region77: #{cls_graph_conv_forward.7} parent=66 // pred_check_branch
          %1437 = sbr.rel (%p1435) target = $region79
        $region78: #{cls_graph_conv_forward.7} parent=66 // pred_region
          %v1438 = vld [vmem:[#allocation2] sm:$0xff]
          %v1439 = vld [vmem:[#allocation2 + $0x8] sm:$0xff]
          %v1440 = vld [vmem:[#allocation2 + $0x10] sm:$0xff]
          %v1441 = vld [vmem:[#allocation2 + $0x18] sm:$0xff]
          %v1442 = vmul.f32 %v1438, %v1438
          %v1443 = vmul.f32 %v1439, %v1439
          %v1444 = vmul.f32 %v1440, %v1440
          %v1445 = vmul.f32 %v1441, %v1441
          %1446 = vadd.xlane.f32.xlu0 %v1442
          %v1447 = vpop.xlane.xlu0 %1446
          %1448 = vadd.xlane.f32.xlu0 %v1443
          %v1449 = vpop.xlane.xlu0 %1448
          %1450 = vadd.xlane.f32.xlu0 %v1444
          %v1451 = vpop.xlane.xlu0 %1450
          %1452 = vadd.xlane.f32.xlu0 %v1445
          %v1453 = vpop.xlane.xlu0 %1452
          %v1454 = vmax.f32 %v1447, 1e-24
          %v1455 = vmax.f32 %v1449, 1e-24
          %v1456 = vmax.f32 %v1451, 1e-24
          %v1457 = vmax.f32 %v1453, 1e-24
          %v1458 = vrsqrt.pop %v1454
          %v1459 = vrsqrt.pop %v1455
          %v1460 = vrsqrt.pop %v1456
          %v1461 = vrsqrt.pop %v1457
          %v1462 = vmul.f32 %v1438, %v1458
          %v1463 = vmul.f32 %v1439, %v1459
          %v1464 = vmul.f32 %v1440, %v1460
          %v1465 = vmul.f32 %v1441, %v1461
          %1466 = vst [vmem:[%s429] sm:$0xff] %v1462
          %1467 = vst [vmem:[%s429 + $0x8] sm:$0xff] %v1463
          %1468 = vst [vmem:[%s429 + $0x10] sm:$0xff] %v1464
          %1469 = vst [vmem:[%s429 + $0x18] sm:$0xff] %v1465
          %v1470 = vld [vmem:[%s454] sm:$0xff]
          %v1471 = vld [vmem:[%s454 + $0x8] sm:$0xff]
          %v1472 = vld [vmem:[%s454 + $0x10] sm:$0xff]
          %v1473 = vld [vmem:[%s454 + $0x18] sm:$0xff]
          %v1474 = vadd.f32 %v1470, %v1462
          %v1475 = vadd.f32 %v1471, %v1463
          %v1476 = vadd.f32 %v1472, %v1464
          %v1477 = vadd.f32 %v1473, %v1465
          %1478 = vst [vmem:[%s436] sm:$0xff] %v1474
          %1479 = vst [vmem:[%s436 + $0x8] sm:$0xff] %v1475
          %1480 = vst [vmem:[%s436 + $0x10] sm:$0xff] %v1476
          %1481 = vst [vmem:[%s436 + $0x18] sm:$0xff] %v1477
        $region79: #{cls_graph_conv_forward.7} parent=66 // pred_fallthru
          _
        %s1482 = sand.u32 %s215, 1
        %s1483 = scalar_lea.sflag [#allocation6], %s1482
        %s1484 = sand.u32 %s215, 1
        %s1485 = smul.addr %s1484, 32
        %s1486 = scalar_lea.vmem [#allocation5], %s1485
        %s1487 = sand.u32 %s241, 1
        %s1488 = scalar_lea.sflag [#allocation8], %s1487
        %s1489 = sand.u32 %s241, 1
        %s1490 = smul.addr %s1489, 32
        %s1491 = scalar_lea.vmem [#allocation7], %s1490
        // Predicated region
        $region80: #{cls_graph_conv_forward.7} parent=66 // pred_check
          %p1492 = pneg %p225
        $region81: #{cls_graph_conv_forward.7} parent=66 // pred_check_branch
          %1494 = sbr.rel (%p1492) target = $region83
        $region82: #{cls_graph_conv_forward.7} parent=66 // pred_region
          %s1495 = smul.u32 4, %s30
          %s1497 = ssub.s32 512, 512
          %1498 = vsyncadd %s1483, %s1497
          %s1499 = smul.addr %s1495, 128
          %s1500 = scalar_lea.hbm %s7, %s1499
          %s1501 = sshll.u32 %s1486, 4
          %s1502 = int_to_ptr.vmem [resolvable:$true] %s1501
          %1507 = dma.vmem_to_hbm [thread:$0]  %s1502, 512, %s1500, %s1483, 128, 128, 8
        $region83: #{cls_graph_conv_forward.7} parent=66 // pred_fallthru
          _
        // Predicated region
        $region84: #{cls_graph_conv_forward.7} parent=66 // pred_check
          %p1508 = pneg %p251
        $region85: #{cls_graph_conv_forward.7} parent=66 // pred_check_branch
          %1510 = sbr.rel (%p1508) target = $region87
        $region86: #{cls_graph_conv_forward.7} parent=66 // pred_region
          %s1511 = smul.u32 4, %s30
          %s1513 = ssub.s32 512, 512
          %1514 = vsyncadd %s1488, %s1513
          %s1515 = smul.addr %s1511, 128
          %s1516 = scalar_lea.hbm %s8, %s1515
          %s1517 = sshll.u32 %s1491, 4
          %s1518 = int_to_ptr.vmem [resolvable:$true] %s1517
          %1523 = dma.vmem_to_hbm [thread:$0]  %s1518, 512, %s1516, %s1488, 128, 128, 8
        $region87: #{cls_graph_conv_forward.7} parent=66 // pred_fallthru
          _
      $region67: #{cls_graph_conv_forward.7} parent=5 // pred_fallthru
        _
      %p1524 = scmp.le.s32.totalorder 2, %s21
      // Predicated region
      $region88: #{cls_graph_conv_forward.7} parent=5 // pred_check
        %p1525 = pneg %p1524
      $region89: #{cls_graph_conv_forward.7} parent=5 // pred_check_branch
        %1527 = sbr.rel (%p1525) target = $region91
      $region90: #{cls_graph_conv_forward.7} parent=5 // pred_region
        %s1528 = ssub.s32 %s21, 2
        // Predicated region
        $region92: #{cls_graph_conv_forward.7} parent=90 // pred_check
          %p1529 = pneg %p231
        $region93: #{cls_graph_conv_forward.7} parent=90 // pred_check_branch
          %1531 = sbr.rel (%p1529) target = $region95
        $region94: #{cls_graph_conv_forward.7} parent=90 // pred_region
          %s1532 = sand.u32 %s216, 1
          %s1533 = scalar_lea.sflag [#allocation6], %s1532
          %s1534 = sand.u32 %s216, 1
          %s1535 = smul.addr %s1534, 32
          %s1536 = scalar_lea.vmem [#allocation5], %s1535
          %1537 = dma.done %s1533, 512
        $region95: #{cls_graph_conv_forward.7} parent=90 // pred_fallthru
          _
        // Predicated region
        $region96: #{cls_graph_conv_forward.7} parent=90 // pred_check
          %p1538 = pneg %p257
        $region97: #{cls_graph_conv_forward.7} parent=90 // pred_check_branch
          %1540 = sbr.rel (%p1538) target = $region99
        $region98: #{cls_graph_conv_forward.7} parent=90 // pred_region
          %s1541 = sand.u32 %s242, 1
          %s1542 = scalar_lea.sflag [#allocation8], %s1541
          %s1543 = sand.u32 %s242, 1
          %s1544 = smul.addr %s1543, 32
          %s1545 = scalar_lea.vmem [#allocation7], %s1544
          %1546 = dma.done %s1542, 512
        $region99: #{cls_graph_conv_forward.7} parent=90 // pred_fallthru
          _
      $region91: #{cls_graph_conv_forward.7} parent=5 // pred_fallthru
        _
    $region6: #{cls_graph_conv_forward.7} parent=1 // loop_footer
      %s25 = sadd.s32 1, %s21
    $region7: #{cls_graph_conv_forward.7} parent=1 // loop_footer_branch
      %20 = sbr.rel target = $region3
    $region8: #{cls_graph_conv_forward.7} parent=1 // loop_exit
      _
    %1547 = vsyncpa [#allocation6], 1
    %s1548 = scalar_lea.sflag [#allocation6], 1
    %1549 = vsyncpa %s1548, 1
    %1550 = vsyncpa [#allocation8], 1
    %s1551 = scalar_lea.sflag [#allocation8], 1
    %1552 = vsyncpa %s1551, 1

// kernel: cls_graph_conv_forward.4
$region0: #{cls_graph_conv_forward.4}
  #allocation0 [shape = 'u32[]', space=smem, size = 0x4, offset = 0x4, fixed_abs, tag = 'smem constant byte address 0x4 - core index']
  #allocation1 [shape = 'u32[144,128]{1,0:T(1,128)}', space=vmem, size = 0x12000, scoped, tag = 'internal scratch']
  #allocation2 [shape = 's32[1]{0}', space=sflag, size = 0x4, scoped, tag = 'scoped memory for cls_graph_conv_forward.4']
  #allocation3 [shape = 'u8[6656]{0}', space=smem, size = 0x1a00, scoped, tag = 'prefetched SMEM operand 0']
  #allocation4 [shape = 'u8[16384]{0}', space=smem, size = 0x4000, scoped, tag = 'prefetched SMEM operand 1']
  #allocation5 [shape = 'u8[16384]{0}', space=smem, size = 0x4000, scoped, tag = 'prefetched SMEM operand 2']
  %s0 = inlined_call_operand.vmem [shape: s32[1537], index: 0, kind: input, shape index: {}]
  %s1 = inlined_call_operand.hbm [shape: s32[4096], index: 1, kind: input, shape index: {}]
  %s2 = inlined_call_operand.hbm [shape: s32[4096], index: 2, kind: input, shape index: {}]
  %s3 = inlined_call_operand.vmem [shape: f32[1536,128], index: 3, kind: input, shape index: {}, may-alias: {3,5}]
  %s4 = inlined_call_operand.vmem [shape: f32[8,128], index: 4, kind: input, shape index: {}]
  %s5 = inlined_call_operand.vmem [shape: f32[1536,128], index: 5, kind: input, shape index: {}, may-alias: {3,5}]
  %s6 = inlined_call_operand.vmem [shape: f32[1536,128], index: 6, kind: output, shape index: {0}]
  %s7 = inlined_call_operand.vmem [shape: f32[1536,128], index: 7, kind: output, shape index: {1}]
  %8 = xla_tuple %s6, %s7
  %s9 = sld [smem:[#allocation0]]
  $region67: #{cls_graph_conv_forward.4} parent=0
    _
  %s11 = ssub.s32 1, %s9
  %s12 = scalar_select 0, %s11, %s9
  %s13 = sshll.u32 %s0, 4
  %s14 = int_to_ptr.vmem [resolvable:$true] %s13
  %16 = dma.vmem_to_smem %s14, 208, [#allocation3], [#allocation2]
  %18 = dma.hbm_to_smem %s1, 512, [#allocation4], [#allocation2]
  %20 = dma.hbm_to_smem %s2, 512, [#allocation5], [#allocation2]
  %21 = dma.done [#allocation2], 1232
  %22 = sfence
  loop: start=0, step=1, limit=5
  $region2: #{cls_graph_conv_forward.4} parent=0 // loop_pre_header
    _
  $region3: #{cls_graph_conv_forward.4} parent=0 // loop_header
    %s24 = sphi 0, %s28
    %p25 = scmp.ge.s32.totalorder %s24, 5
    %s32 = sphi 0, %s32
    %s34 = sphi 0, %s32
    %s35 = sphi 0, %s34
    %s49 = sphi 0, %s35
    %s53 = sphi 0, %s53
    %s55 = sphi 0, %s53
    %s56 = sphi 0, %s55
    %s70 = sphi 0, %s56
    %s76 = sphi 0, %s78
    %s79 = sphi 0, %s76
    %s80 = sphi 0, %s79
    %s96 = sphi 0, %s80
    %s102 = sphi 0, %s104
    %s105 = sphi 0, %s102
    %s106 = sphi 0, %s105
    %s122 = sphi 0, %s106
    %s128 = sphi 0, %s130
    %s131 = sphi 0, %s128
    %s132 = sphi 0, %s131
    %s148 = sphi 0, %s132
  $region4: #{cls_graph_conv_forward.4} parent=0 // loop_header_branch
    %27 = sbr.rel (%p25) target = $region8
  $region5: #{cls_graph_conv_forward.4} parent=0 // loop_body
    %s29 = ssub.s32 %s24, 1
    %s30 = ssub.s32 %s24, 2
    %s31 = sadd.s32 %s24, 1
    %s33 = sadd.s32 %s32, 1
    %p36 = scmp.eq.s32.totalorder %s24, 2
    %p37 = scmp.ne.s32.totalorder %s32, %s34
    %p38 = scmp.eq.s32.totalorder %s24, 0
    %p39 = por %p37, %p38
    %p40 = scmp.ne.s32.totalorder %s32, %s34
    %p41 = scmp.eq.s32.totalorder %s29, 2
    %p42 = por %p40, %p41
    %p43 = scmp.ne.s32.totalorder %s34, %s35
    %p44 = scmp.eq.s32.totalorder %s29, 0
    %p45 = por %p43, %p44
    %p46 = scmp.ne.s32.totalorder %s34, %s35
    %p47 = scmp.eq.s32.totalorder %s30, 2
    %p48 = por %p46, %p47
    %p50 = scmp.ne.s32.totalorder %s35, %s49
    %p51 = scmp.eq.s32.totalorder %s30, 0
    %p52 = por %p50, %p51
    %s54 = sadd.s32 %s53, 1
    %p57 = scmp.eq.s32.totalorder %s24, 2
    %p58 = scmp.ne.s32.totalorder %s53, %s55
    %p59 = scmp.eq.s32.totalorder %s24, 0
    %p60 = por %p58, %p59
    %p61 = scmp.ne.s32.totalorder %s53, %s55
    %p62 = scmp.eq.s32.totalorder %s29, 2
    %p63 = por %p61, %p62
    %p64 = scmp.ne.s32.totalorder %s55, %s56
    %p65 = scmp.eq.s32.totalorder %s29, 0
    %p66 = por %p64, %p65
    %p67 = scmp.ne.s32.totalorder %s55, %s56
    %p68 = scmp.eq.s32.totalorder %s30, 2
    %p69 = por %p67, %p68
    %p71 = scmp.ne.s32.totalorder %s56, %s70
    %p72 = scmp.eq.s32.totalorder %s30, 0
    %p73 = por %p71, %p72
    %s74 = ssub.s32 %s24, %s31
    %p75 = scmp.eq.s32.totalorder %s74, 0
    %s77 = sadd.s32 %s76, 1
    %s78 = scalar_select %p75, %s76, %s77
    %p81 = pneg %p75
    %p82 = scmp.eq.s32.totalorder %s24, 2
    %p83 = por %p81, %p82
    %p84 = scmp.ne.s32.totalorder %s76, %s79
    %p85 = scmp.eq.s32.totalorder %s24, 0
    %p86 = por %p84, %p85
    %p87 = scmp.ne.s32.totalorder %s76, %s79
    %p88 = scmp.eq.s32.totalorder %s29, 2
    %p89 = por %p87, %p88
    %p90 = scmp.ne.s32.totalorder %s79, %s80
    %p91 = scmp.eq.s32.totalorder %s29, 0
    %p92 = por %p90, %p91
    %p93 = scmp.ne.s32.totalorder %s79, %s80
    %p94 = scmp.eq.s32.totalorder %s30, 2
    %p95 = por %p93, %p94
    %p97 = scmp.ne.s32.totalorder %s80, %s96
    %p98 = scmp.eq.s32.totalorder %s30, 0
    %p99 = por %p97, %p98
    %s100 = ssub.s32 %s24, %s31
    %p101 = scmp.eq.s32.totalorder %s100, 0
    %s103 = sadd.s32 %s102, 1
    %s104 = scalar_select %p101, %s102, %s103
    %p107 = pneg %p101
    %p108 = scmp.eq.s32.totalorder %s24, 2
    %p109 = por %p107, %p108
    %p110 = scmp.ne.s32.totalorder %s102, %s105
    %p111 = scmp.eq.s32.totalorder %s24, 0
    %p112 = por %p110, %p111
    %p113 = scmp.ne.s32.totalorder %s102, %s105
    %p114 = scmp.eq.s32.totalorder %s29, 2
    %p115 = por %p113, %p114
    %p116 = scmp.ne.s32.totalorder %s105, %s106
    %p117 = scmp.eq.s32.totalorder %s29, 0
    %p118 = por %p116, %p117
    %p119 = scmp.ne.s32.totalorder %s105, %s106
    %p120 = scmp.eq.s32.totalorder %s30, 2
    %p121 = por %p119, %p120
    %p123 = scmp.ne.s32.totalorder %s106, %s122
    %p124 = scmp.eq.s32.totalorder %s30, 0
    %p125 = por %p123, %p124
    %s126 = ssub.s32 %s24, %s31
    %p127 = scmp.eq.s32.totalorder %s126, 0
    %s129 = sadd.s32 %s128, 1
    %s130 = scalar_select %p127, %s128, %s129
    %p133 = pneg %p127
    %p134 = scmp.eq.s32.totalorder %s24, 2
    %p135 = por %p133, %p134
    %p136 = scmp.ne.s32.totalorder %s128, %s131
    %p137 = scmp.eq.s32.totalorder %s24, 0
    %p138 = por %p136, %p137
    %p139 = scmp.ne.s32.totalorder %s128, %s131
    %p140 = scmp.eq.s32.totalorder %s29, 2
    %p141 = por %p139, %p140
    %p142 = scmp.ne.s32.totalorder %s131, %s132
    %p143 = scmp.eq.s32.totalorder %s29, 0
    %p144 = por %p142, %p143
    %p145 = scmp.ne.s32.totalorder %s131, %s132
    %p146 = scmp.eq.s32.totalorder %s30, 2
    %p147 = por %p145, %p146
    %p149 = scmp.ne.s32.totalorder %s132, %s148
    %p150 = scmp.eq.s32.totalorder %s30, 0
    %p151 = por %p149, %p150
    %p152 = scmp.le.s32.totalorder 1, %s24
    %p153 = scmp.lt.s32.totalorder %s24, 4
    %p154 = pnand %p152, %p153
    %p155 = pneg %p154
    // Predicated region
    $region9: #{cls_graph_conv_forward.4} parent=5 // pred_check
      _
    $region10: #{cls_graph_conv_forward.4} parent=5 // pred_check_branch
      %157 = sbr.rel (%p154) target = $region12
    $region11: #{cls_graph_conv_forward.4} parent=5 // pred_region
      %s158 = ssub.s32 %s24, 1
      // Predicated region
      $region13: #{cls_graph_conv_forward.4} parent=11 // pred_check
        %p159 = pneg %p45
      $region14: #{cls_graph_conv_forward.4} parent=11 // pred_check_branch
        %161 = sbr.rel (%p159) target = $region16
      $region15: #{cls_graph_conv_forward.4} parent=11 // pred_region
        _
      $region16: #{cls_graph_conv_forward.4} parent=11 // pred_fallthru
        _
      // Predicated region
      $region17: #{cls_graph_conv_forward.4} parent=11 // pred_check
        %p162 = pneg %p66
      $region18: #{cls_graph_conv_forward.4} parent=11 // pred_check_branch
        %164 = sbr.rel (%p162) target = $region20
      $region19: #{cls_graph_conv_forward.4} parent=11 // pred_region
        _
      $region20: #{cls_graph_conv_forward.4} parent=11 // pred_fallthru
        _
    $region12: #{cls_graph_conv_forward.4} parent=5 // pred_fallthru
      _
    %p165 = scmp.lt.s32.totalorder %s24, 3
    // Predicated region
    $region21: #{cls_graph_conv_forward.4} parent=5 // pred_check
      %p166 = pneg %p165
    $region22: #{cls_graph_conv_forward.4} parent=5 // pred_check_branch
      %168 = sbr.rel (%p166) target = $region24
    $region23: #{cls_graph_conv_forward.4} parent=5 // pred_region
      // Predicated region
      $region25: #{cls_graph_conv_forward.4} parent=23 // pred_check
        %p169 = pneg %p86
      $region26: #{cls_graph_conv_forward.4} parent=23 // pred_check_branch
        %171 = sbr.rel (%p169) target = $region28
      $region27: #{cls_graph_conv_forward.4} parent=23 // pred_region
        %s172 = smul.u32 64, %s24
        %p173 = scmp.lt.s32.totalorder %s172, 191
        %s174 = scalar_select %p173, %s172, 191
        %s175 = smul.addr %s174, 8
        %s176 = scalar_lea.vmem %s5, %s175
        %s177 = smul.u32 64, %s24
      $region28: #{cls_graph_conv_forward.4} parent=23 // pred_fallthru
        _
    $region24: #{cls_graph_conv_forward.4} parent=5 // pred_fallthru
      _
    %p178 = scmp.le.s32.totalorder 1, %s24
    %p179 = scmp.lt.s32.totalorder %s24, 4
    %p180 = pnand %p178, %p179
    %p181 = pneg %p180
    // Predicated region
    $region29: #{cls_graph_conv_forward.4} parent=5 // pred_check
      _
    $region30: #{cls_graph_conv_forward.4} parent=5 // pred_check_branch
      %183 = sbr.rel (%p180) target = $region32
    $region31: #{cls_graph_conv_forward.4} parent=5 // pred_region
      %s184 = ssub.s32 %s24, 1
      %p185 = pneg %p45
      %p186 = pneg %p42
      %p187 = pneg %p66
      %p188 = pneg %p63
      %s189 = smul.u32 64, %s29
      %p190 = scmp.lt.s32.totalorder %s189, 191
      %s191 = scalar_select %p190, %s189, 191
      %s192 = smul.addr %s191, 8
      %s193 = scalar_lea.vmem %s5, %s192
      %p194 = pneg %p92
      %p195 = pneg %p89
      %p196 = pneg %p118
      %p197 = pneg %p115
      %s198 = smul.u32 64, %s29
      %p199 = scmp.lt.s32.totalorder %s198, 191
      %s200 = scalar_select %p199, %s198, 191
      %s201 = smul.addr %s200, 8
      %s202 = scalar_lea.vmem %s6, %s201
      %p203 = pneg %p144
      %p204 = pneg %p141
      %s205 = smul.u32 64, %s29
      %p206 = scmp.lt.s32.totalorder %s205, 191
      %s207 = scalar_select %p206, %s205, 191
      %s208 = smul.addr %s207, 8
      %s209 = scalar_lea.vmem %s7, %s208
      %s210 = smul.u32 64, %s29
      %p211 = scmp.lt.s32.totalorder %s210, 191
      %s212 = scalar_select %p211, %s210, 191
      %s213 = smul.addr %s212, 8
      %s214 = scalar_lea.vmem %s5, %s213
      %s215 = smul.u32 64, %s29
      %s216 = smul.u32 64, %s29
      %p217 = scmp.lt.s32.totalorder %s216, 191
      %s218 = scalar_select %p217, %s216, 191
      %s219 = smul.addr %s218, 8
      %s220 = scalar_lea.vmem %s6, %s219
      %s221 = smul.u32 64, %s29
      %s222 = smul.u32 64, %s29
      %p223 = scmp.lt.s32.totalorder %s222, 191
      %s224 = scalar_select %p223, %s222, 191
      %s225 = smul.addr %s224, 8
      %s226 = scalar_lea.vmem %s7, %s225
      %s227 = smul.u32 64, %s29
      %s228 = smul.u32 %s29, 512
      loop: start=0, step=1, limit=512
      $region33: #{cls_graph_conv_forward.4} parent=31 // loop_pre_header
        _
      $region34: #{cls_graph_conv_forward.4} parent=31 // loop_header
        %s230 = sphi 0, %s234
        %p231 = scmp.ge.s32.totalorder %s230, 512
      $region35: #{cls_graph_conv_forward.4} parent=31 // loop_header_branch
        %233 = sbr.rel (%p231) target = $region39
      $region36: #{cls_graph_conv_forward.4} parent=31 // loop_body
        %s235 = sadd.s32 %s228, %s230
        %s236 = sld [smem:[#allocation3 + %s235]]
        %s237 = sadd.s32 %s235, 1
        %s238 = sld [smem:[#allocation3 + %s237]]
        // While loop
        $region40: #{cls_graph_conv_forward.4} parent=36 // loop_pre_header
          _
        $region41: #{cls_graph_conv_forward.4} parent=36 // loop_header
          %s240 = sphi %s236, %s242
          %p241 = scmp.ge.s32.totalorder %s240, %s238
          %v245 = vphi 0.0, %v253
        $region42: #{cls_graph_conv_forward.4} parent=36 // loop_header_branch
          %244 = sbr.rel (%p241) target = $region46
        $region43: #{cls_graph_conv_forward.4} parent=36 // loop_body
          %s246 = sld [smem:[#allocation4 + %s240]]
          %s247 = sld [smem:[#allocation5 + %s240]]
          %s248 = scalar_lea.vmem %s3, %s246
          %v249 = vld [vmem:[%s248] sm:$0x1]
          %s250 = scalar_lea.vmem %s4, %s247
          %v251 = vld [vmem:[%s250] sm:$0x1]
          %v252 = vmul.f32 %v249, %v251
          %v253 = vadd.f32 %v245, %v252
        $region44: #{cls_graph_conv_forward.4} parent=36 // loop_footer
          %s242 = sadd.s32 %s240, 1
        $region45: #{cls_graph_conv_forward.4} parent=36 // loop_footer_branch
          %239 = sbr.rel target = $region41
        $region46: #{cls_graph_conv_forward.4} parent=36 // loop_exit
          _
        %v254 = vmul.f32 %v245, %v245
        %vm255 = vcmask 1040384
        %v256 = vsel %vm255, %v254, 0.0
        %257 = vadd.xlane.f32.xlu0 %v256
        %v258 = vpop.xlane.xlu0 %257
        %v259 = vmax.f32 %v258, 1e-24
        %v260 = vrsqrt.pop %v259
        %v261 = vmul.f32 %v245, %v260
        %s262 = scalar_lea.vmem %s220, %s230
        %263 = vst [vmem:[%s262] sm:$0x1] %v261
        %s264 = scalar_lea.vmem %s214, %s230
        %v265 = vld [vmem:[%s264] sm:$0x1]
        %v266 = vadd.f32 %v265, %v261
        %s267 = scalar_lea.vmem %s226, %s230
        %268 = vst [vmem:[%s267] sm:$0x1] %v266
      $region37: #{cls_graph_conv_forward.4} parent=31 // loop_footer
        %s234 = sadd.s32 1, %s230
      $region38: #{cls_graph_conv_forward.4} parent=31 // loop_footer_branch
        %229 = sbr.rel target = $region34
      $region39: #{cls_graph_conv_forward.4} parent=31 // loop_exit
        _
      %s269 = smul.u32 64, %s29
      %p270 = scmp.lt.s32.totalorder %s269, 191
      %s271 = scalar_select %p270, %s269, 191
      %s272 = smul.addr %s271, 8
      %s273 = scalar_lea.vmem %s6, %s272
      %s274 = smul.u32 64, %s29
      %p275 = scmp.lt.s32.totalorder %s274, 191
      %s276 = scalar_select %p275, %s274, 191
      %s277 = smul.addr %s276, 8
      %s278 = scalar_lea.vmem %s7, %s277
      // Predicated region
      $region47: #{cls_graph_conv_forward.4} parent=31 // pred_check
        %p279 = pneg %p115
      $region48: #{cls_graph_conv_forward.4} parent=31 // pred_check_branch
        %281 = sbr.rel (%p279) target = $region50
      $region49: #{cls_graph_conv_forward.4} parent=31 // pred_region
        %s282 = smul.u32 64, %s29
      $region50: #{cls_graph_conv_forward.4} parent=31 // pred_fallthru
        _
      // Predicated region
      $region51: #{cls_graph_conv_forward.4} parent=31 // pred_check
        %p283 = pneg %p141
      $region52: #{cls_graph_conv_forward.4} parent=31 // pred_check_branch
        %285 = sbr.rel (%p283) target = $region54
      $region53: #{cls_graph_conv_forward.4} parent=31 // pred_region
        %s286 = smul.u32 64, %s29
      $region54: #{cls_graph_conv_forward.4} parent=31 // pred_fallthru
        _
    $region32: #{cls_graph_conv_forward.4} parent=5 // pred_fallthru
      _
    %p287 = scmp.le.s32.totalorder 2, %s24
    // Predicated region
    $region55: #{cls_graph_conv_forward.4} parent=5 // pred_check
      %p288 = pneg %p287
    $region56: #{cls_graph_conv_forward.4} parent=5 // pred_check_branch
      %290 = sbr.rel (%p288) target = $region58
    $region57: #{cls_graph_conv_forward.4} parent=5 // pred_region
      %s291 = ssub.s32 %s24, 2
      // Predicated region
      $region59: #{cls_graph_conv_forward.4} parent=57 // pred_check
        %p292 = pneg %p121
      $region60: #{cls_graph_conv_forward.4} parent=57 // pred_check_branch
        %294 = sbr.rel (%p292) target = $region62
      $region61: #{cls_graph_conv_forward.4} parent=57 // pred_region
        %s295 = smul.u32 64, %s30
        %p296 = scmp.lt.s32.totalorder %s295, 191
        %s297 = scalar_select %p296, %s295, 191
        %s298 = smul.addr %s297, 8
        %s299 = scalar_lea.vmem %s6, %s298
      $region62: #{cls_graph_conv_forward.4} parent=57 // pred_fallthru
        _
      // Predicated region
      $region63: #{cls_graph_conv_forward.4} parent=57 // pred_check
        %p300 = pneg %p147
      $region64: #{cls_graph_conv_forward.4} parent=57 // pred_check_branch
        %302 = sbr.rel (%p300) target = $region66
      $region65: #{cls_graph_conv_forward.4} parent=57 // pred_region
        %s303 = smul.u32 64, %s30
        %p304 = scmp.lt.s32.totalorder %s303, 191
        %s305 = scalar_select %p304, %s303, 191
        %s306 = smul.addr %s305, 8
        %s307 = scalar_lea.vmem %s7, %s306
      $region66: #{cls_graph_conv_forward.4} parent=57 // pred_fallthru
        _
    $region58: #{cls_graph_conv_forward.4} parent=5 // pred_fallthru
      _
  $region6: #{cls_graph_conv_forward.4} parent=0 // loop_footer
    %s28 = sadd.s32 1, %s24
  $region7: #{cls_graph_conv_forward.4} parent=0 // loop_footer_branch
    %23 = sbr.rel target = $region3
  $region8: #{cls_graph_conv_forward.4} parent=0 // loop_exit
    _

// kernel: cls_graph_conv_forward.6
$region0: #{cls_graph_conv_forward.6}
  #allocation0 [shape = 'u32[]', space=smem, size = 0x4, offset = 0x4, fixed_abs, tag = 'smem constant byte address 0x4 - core index']
  #allocation1 [shape = 'u32[144,128]{1,0:T(1,128)}', space=vmem, size = 0x12000, scoped, tag = 'internal scratch']
  #allocation2 [shape = 's32[1]{0}', space=sflag, size = 0x4, scoped, tag = 'scoped memory for cls_graph_conv_forward.6']
  #allocation3 [shape = 'u8[6656]{0}', space=smem, size = 0x1a00, scoped, tag = 'prefetched SMEM operand 0']
  #allocation4 [shape = 'u8[16384]{0}', space=smem, size = 0x4000, scoped, tag = 'prefetched SMEM operand 1']
  #allocation5 [shape = 'u8[16384]{0}', space=smem, size = 0x4000, scoped, tag = 'prefetched SMEM operand 2']
  %s0 = inlined_call_operand.vmem [shape: s32[1537], index: 0, kind: input, shape index: {}]
  %s1 = inlined_call_operand.vmem [shape: s32[4096], index: 1, kind: input, shape index: {}]
  %s2 = inlined_call_operand.vmem [shape: s32[4096], index: 2, kind: input, shape index: {}]
  %s3 = inlined_call_operand.vmem [shape: f32[1536,128], index: 3, kind: input, shape index: {}]
  %s4 = inlined_call_operand.vmem [shape: f32[8,128], index: 4, kind: input, shape index: {}]
  %s5 = inlined_call_operand.vmem [shape: f32[1536,128], index: 5, kind: input, shape index: {}]
  %s6 = inlined_call_operand.hbm [shape: f32[1536,128], index: 6, kind: output, shape index: {0}]
  %s7 = inlined_call_operand.hbm [shape: f32[1536,128], index: 7, kind: output, shape index: {1}]
  %8 = xla_tuple %s6, %s7
  %s9 = sld [smem:[#allocation0]]
  $region67: #{cls_graph_conv_forward.6} parent=0
    _
  %s11 = ssub.s32 1, %s9
  %s12 = scalar_select 0, %s11, %s9
  %s13 = sshll.u32 %s0, 4
  %s14 = int_to_ptr.vmem [resolvable:$true] %s13
  %16 = dma.vmem_to_smem %s14, 208, [#allocation3], [#allocation2]
  %s17 = sshll.u32 %s1, 4
  %s18 = int_to_ptr.vmem [resolvable:$true] %s17
  %20 = dma.vmem_to_smem %s18, 512, [#allocation4], [#allocation2]
  %s21 = sshll.u32 %s2, 4
  %s22 = int_to_ptr.vmem [resolvable:$true] %s21
  %24 = dma.vmem_to_smem %s22, 512, [#allocation5], [#allocation2]
  %25 = dma.done [#allocation2], 1232
  %26 = sfence
  $region1: #{cls_graph_conv_forward.6} parent=0
    #allocation6 [shape = 'u8[524288]{0}', space=vmem, size = 0x80000, scoped, tag = 'output window, operand 0']
    #allocation7 [shape = 's32[2]{0}', space=sflag, size = 0x8, scoped, tag = 'scoped memory for cls_graph_conv_forward.6']
    #allocation8 [shape = 'u8[524288]{0}', space=vmem, size = 0x80000, scoped, tag = 'output window, operand 1']
    #allocation9 [shape = 's32[2]{0}', space=sflag, size = 0x8, scoped, tag = 'scoped memory for cls_graph_conv_forward.6']
    %27 = vsyncpa [#allocation7], 0
    %s28 = scalar_lea.sflag [#allocation7], 1
    %29 = vsyncpa %s28, 0
    %30 = vsyncpa [#allocation9], 0
    %s31 = scalar_lea.sflag [#allocation9], 1
    %32 = vsyncpa %s31, 0
    loop: start=0, step=1, limit=5
    $region2: #{cls_graph_conv_forward.6} parent=1 // loop_pre_header
      _
    $region3: #{cls_graph_conv_forward.6} parent=1 // loop_header
      %s34 = sphi 0, %s38
      %p35 = scmp.ge.s32.totalorder %s34, 5
      %s42 = sphi 0, %s42
      %s44 = sphi 0, %s42
      %s45 = sphi 0, %s44
      %s59 = sphi 0, %s45
      %s63 = sphi 0, %s63
      %s65 = sphi 0, %s63
      %s66 = sphi 0, %s65
      %s80 = sphi 0, %s66
      %s86 = sphi 0, %s88
      %s89 = sphi 0, %s86
      %s90 = sphi 0, %s89
      %s106 = sphi 0, %s90
      %s112 = sphi 0, %s114
      %s115 = sphi 0, %s112
      %s116 = sphi 0, %s115
      %s132 = sphi 0, %s116
      %s138 = sphi 0, %s140
      %s141 = sphi 0, %s138
      %s142 = sphi 0, %s141
      %s158 = sphi 0, %s142
    $region4: #{cls_graph_conv_forward.6} parent=1 // loop_header_branch
      %37 = sbr.rel (%p35) target = $region8
    $region5: #{cls_graph_conv_forward.6} parent=1 // loop_body
      %s39 = ssub.s32 %s34, 1
      %s40 = ssub.s32 %s34, 2
      %s41 = sadd.s32 %s34, 1
      %s43 = sadd.s32 %s42, 1
      %p46 = scmp.eq.s32.totalorder %s34, 2
      %p47 = scmp.ne.s32.totalorder %s42, %s44
      %p48 = scmp.eq.s32.totalorder %s34, 0
      %p49 = por %p47, %p48
      %p50 = scmp.ne.s32.totalorder %s42, %s44
      %p51 = scmp.eq.s32.totalorder %s39, 2
      %p52 = por %p50, %p51
      %p53 = scmp.ne.s32.totalorder %s44, %s45
      %p54 = scmp.eq.s32.totalorder %s39, 0
      %p55 = por %p53, %p54
      %p56 = scmp.ne.s32.totalorder %s44, %s45
      %p57 = scmp.eq.s32.totalorder %s40, 2
      %p58 = por %p56, %p57
      %p60 = scmp.ne.s32.totalorder %s45, %s59
      %p61 = scmp.eq.s32.totalorder %s40, 0
      %p62 = por %p60, %p61
      %s64 = sadd.s32 %s63, 1
      %p67 = scmp.eq.s32.totalorder %s34, 2
      %p68 = scmp.ne.s32.totalorder %s63, %s65
      %p69 = scmp.eq.s32.totalorder %s34, 0
      %p70 = por %p68, %p69
      %p71 = scmp.ne.s32.totalorder %s63, %s65
      %p72 = scmp.eq.s32.totalorder %s39, 2
      %p73 = por %p71, %p72
      %p74 = scmp.ne.s32.totalorder %s65, %s66
      %p75 = scmp.eq.s32.totalorder %s39, 0
      %p76 = por %p74, %p75
      %p77 = scmp.ne.s32.totalorder %s65, %s66
      %p78 = scmp.eq.s32.totalorder %s40, 2
      %p79 = por %p77, %p78
      %p81 = scmp.ne.s32.totalorder %s66, %s80
      %p82 = scmp.eq.s32.totalorder %s40, 0
      %p83 = por %p81, %p82
      %s84 = ssub.s32 %s34, %s41
      %p85 = scmp.eq.s32.totalorder %s84, 0
      %s87 = sadd.s32 %s86, 1
      %s88 = scalar_select %p85, %s86, %s87
      %p91 = pneg %p85
      %p92 = scmp.eq.s32.totalorder %s34, 2
      %p93 = por %p91, %p92
      %p94 = scmp.ne.s32.totalorder %s86, %s89
      %p95 = scmp.eq.s32.totalorder %s34, 0
      %p96 = por %p94, %p95
      %p97 = scmp.ne.s32.totalorder %s86, %s89
      %p98 = scmp.eq.s32.totalorder %s39, 2
      %p99 = por %p97, %p98
      %p100 = scmp.ne.s32.totalorder %s89, %s90
      %p101 = scmp.eq.s32.totalorder %s39, 0
      %p102 = por %p100, %p101
      %p103 = scmp.ne.s32.totalorder %s89, %s90
      %p104 = scmp.eq.s32.totalorder %s40, 2
      %p105 = por %p103, %p104
      %p107 = scmp.ne.s32.totalorder %s90, %s106
      %p108 = scmp.eq.s32.totalorder %s40, 0
      %p109 = por %p107, %p108
      %s110 = ssub.s32 %s34, %s41
      %p111 = scmp.eq.s32.totalorder %s110, 0
      %s113 = sadd.s32 %s112, 1
      %s114 = scalar_select %p111, %s112, %s113
      %p117 = pneg %p111
      %p118 = scmp.eq.s32.totalorder %s34, 2
      %p119 = por %p117, %p118
      %p120 = scmp.ne.s32.totalorder %s112, %s115
      %p121 = scmp.eq.s32.totalorder %s34, 0
      %p122 = por %p120, %p121
      %p123 = scmp.ne.s32.totalorder %s112, %s115
      %p124 = scmp.eq.s32.totalorder %s39, 2
      %p125 = por %p123, %p124
      %p126 = scmp.ne.s32.totalorder %s115, %s116
      %p127 = scmp.eq.s32.totalorder %s39, 0
      %p128 = por %p126, %p127
      %p129 = scmp.ne.s32.totalorder %s115, %s116
      %p130 = scmp.eq.s32.totalorder %s40, 2
      %p131 = por %p129, %p130
      %p133 = scmp.ne.s32.totalorder %s116, %s132
      %p134 = scmp.eq.s32.totalorder %s40, 0
      %p135 = por %p133, %p134
      %s136 = ssub.s32 %s34, %s41
      %p137 = scmp.eq.s32.totalorder %s136, 0
      %s139 = sadd.s32 %s138, 1
      %s140 = scalar_select %p137, %s138, %s139
      %p143 = pneg %p137
      %p144 = scmp.eq.s32.totalorder %s34, 2
      %p145 = por %p143, %p144
      %p146 = scmp.ne.s32.totalorder %s138, %s141
      %p147 = scmp.eq.s32.totalorder %s34, 0
      %p148 = por %p146, %p147
      %p149 = scmp.ne.s32.totalorder %s138, %s141
      %p150 = scmp.eq.s32.totalorder %s39, 2
      %p151 = por %p149, %p150
      %p152 = scmp.ne.s32.totalorder %s141, %s142
      %p153 = scmp.eq.s32.totalorder %s39, 0
      %p154 = por %p152, %p153
      %p155 = scmp.ne.s32.totalorder %s141, %s142
      %p156 = scmp.eq.s32.totalorder %s40, 2
      %p157 = por %p155, %p156
      %p159 = scmp.ne.s32.totalorder %s142, %s158
      %p160 = scmp.eq.s32.totalorder %s40, 0
      %p161 = por %p159, %p160
      %p162 = scmp.le.s32.totalorder 1, %s34
      %p163 = scmp.lt.s32.totalorder %s34, 4
      %p164 = pnand %p162, %p163
      %p165 = pneg %p164
      // Predicated region
      $region9: #{cls_graph_conv_forward.6} parent=5 // pred_check
        _
      $region10: #{cls_graph_conv_forward.6} parent=5 // pred_check_branch
        %167 = sbr.rel (%p164) target = $region12
      $region11: #{cls_graph_conv_forward.6} parent=5 // pred_region
        %s168 = ssub.s32 %s34, 1
        // Predicated region
        $region13: #{cls_graph_conv_forward.6} parent=11 // pred_check
          %p169 = pneg %p55
        $region14: #{cls_graph_conv_forward.6} parent=11 // pred_check_branch
          %171 = sbr.rel (%p169) target = $region16
        $region15: #{cls_graph_conv_forward.6} parent=11 // pred_region
          _
        $region16: #{cls_graph_conv_forward.6} parent=11 // pred_fallthru
          _
        // Predicated region
        $region17: #{cls_graph_conv_forward.6} parent=11 // pred_check
          %p172 = pneg %p76
        $region18: #{cls_graph_conv_forward.6} parent=11 // pred_check_branch
          %174 = sbr.rel (%p172) target = $region20
        $region19: #{cls_graph_conv_forward.6} parent=11 // pred_region
          _
        $region20: #{cls_graph_conv_forward.6} parent=11 // pred_fallthru
          _
      $region12: #{cls_graph_conv_forward.6} parent=5 // pred_fallthru
        _
      %p175 = scmp.lt.s32.totalorder %s34, 3
      // Predicated region
      $region21: #{cls_graph_conv_forward.6} parent=5 // pred_check
        %p176 = pneg %p175
      $region22: #{cls_graph_conv_forward.6} parent=5 // pred_check_branch
        %178 = sbr.rel (%p176) target = $region24
      $region23: #{cls_graph_conv_forward.6} parent=5 // pred_region
        // Predicated region
        $region25: #{cls_graph_conv_forward.6} parent=23 // pred_check
          %p179 = pneg %p96
        $region26: #{cls_graph_conv_forward.6} parent=23 // pred_check_branch
          %181 = sbr.rel (%p179) target = $region28
        $region27: #{cls_graph_conv_forward.6} parent=23 // pred_region
          %s182 = smul.u32 64, %s34
          %p183 = scmp.lt.s32.totalorder %s182, 191
          %s184 = scalar_select %p183, %s182, 191
          %s185 = smul.addr %s184, 8
          %s186 = scalar_lea.vmem %s5, %s185
          %s187 = smul.u32 64, %s34
        $region28: #{cls_graph_conv_forward.6} parent=23 // pred_fallthru
          _
      $region24: #{cls_graph_conv_forward.6} parent=5 // pred_fallthru
        _
      %p188 = scmp.le.s32.totalorder 1, %s34
      %p189 = scmp.lt.s32.totalorder %s34, 4
      %p190 = pnand %p188, %p189
      %p191 = pneg %p190
      // Predicated region
      $region29: #{cls_graph_conv_forward.6} parent=5 // pred_check
        _
      $region30: #{cls_graph_conv_forward.6} parent=5 // pred_check_branch
        %193 = sbr.rel (%p190) target = $region32
      $region31: #{cls_graph_conv_forward.6} parent=5 // pred_region
        %s194 = ssub.s32 %s34, 1
        %p195 = pneg %p55
        %p196 = pneg %p52
        %p197 = pneg %p76
        %p198 = pneg %p73
        %s199 = smul.u32 64, %s39
        %p200 = scmp.lt.s32.totalorder %s199, 191
        %s201 = scalar_select %p200, %s199, 191
        %s202 = smul.addr %s201, 8
        %s203 = scalar_lea.vmem %s5, %s202
        %p204 = pneg %p102
        %p205 = pneg %p99
        %p206 = pneg %p128
        %p207 = pneg %p125
        %s208 = sand.u32 %s115, 1
        %s209 = scalar_lea.sflag [#allocation7], %s208
        %s210 = sand.u32 %s115, 1
        %s211 = smul.addr %s210, 512
        %s212 = scalar_lea.vmem [#allocation6], %s211
        %p213 = pneg %p154
        %p214 = pneg %p151
        %s215 = sand.u32 %s141, 1
        %s216 = scalar_lea.sflag [#allocation9], %s215
        %s217 = sand.u32 %s141, 1
        %s218 = smul.addr %s217, 512
        %s219 = scalar_lea.vmem [#allocation8], %s218
        %s220 = smul.u32 64, %s39
        %p221 = scmp.lt.s32.totalorder %s220, 191
        %s222 = scalar_select %p221, %s220, 191
        %s223 = smul.addr %s222, 8
        %s224 = scalar_lea.vmem %s5, %s223
        %s225 = smul.u32 64, %s39
        %s226 = smul.u32 64, %s39
        %s227 = smul.u32 64, %s39
        %s228 = smul.u32 %s39, 512
        loop: start=0, step=1, limit=512
        $region33: #{cls_graph_conv_forward.6} parent=31 // loop_pre_header
          _
        $region34: #{cls_graph_conv_forward.6} parent=31 // loop_header
          %s230 = sphi 0, %s234
          %p231 = scmp.ge.s32.totalorder %s230, 512
        $region35: #{cls_graph_conv_forward.6} parent=31 // loop_header_branch
          %233 = sbr.rel (%p231) target = $region39
        $region36: #{cls_graph_conv_forward.6} parent=31 // loop_body
          %s235 = sadd.s32 %s228, %s230
          %s236 = sld [smem:[#allocation3 + %s235]]
          %s237 = sadd.s32 %s235, 1
          %s238 = sld [smem:[#allocation3 + %s237]]
          // While loop
          $region40: #{cls_graph_conv_forward.6} parent=36 // loop_pre_header
            _
          $region41: #{cls_graph_conv_forward.6} parent=36 // loop_header
            %s240 = sphi %s236, %s242
            %p241 = scmp.ge.s32.totalorder %s240, %s238
            %v245 = vphi 0.0, %v253
          $region42: #{cls_graph_conv_forward.6} parent=36 // loop_header_branch
            %244 = sbr.rel (%p241) target = $region46
          $region43: #{cls_graph_conv_forward.6} parent=36 // loop_body
            %s246 = sld [smem:[#allocation4 + %s240]]
            %s247 = sld [smem:[#allocation5 + %s240]]
            %s248 = scalar_lea.vmem %s3, %s246
            %v249 = vld [vmem:[%s248] sm:$0x1]
            %s250 = scalar_lea.vmem %s4, %s247
            %v251 = vld [vmem:[%s250] sm:$0x1]
            %v252 = vmul.f32 %v249, %v251
            %v253 = vadd.f32 %v245, %v252
          $region44: #{cls_graph_conv_forward.6} parent=36 // loop_footer
            %s242 = sadd.s32 %s240, 1
          $region45: #{cls_graph_conv_forward.6} parent=36 // loop_footer_branch
            %239 = sbr.rel target = $region41
          $region46: #{cls_graph_conv_forward.6} parent=36 // loop_exit
            _
          %v254 = vmul.f32 %v245, %v245
          %vm255 = vcmask 1040384
          %v256 = vsel %vm255, %v254, 0.0
          %257 = vadd.xlane.f32.xlu0 %v256
          %v258 = vpop.xlane.xlu0 %257
          %v259 = vmax.f32 %v258, 1e-24
          %v260 = vrsqrt.pop %v259
          %v261 = vmul.f32 %v245, %v260
          %s262 = scalar_lea.vmem %s212, %s230 [#allocation6]
          %263 = vst [vmem:[%s262] sm:$0x1] %v261
          %s264 = scalar_lea.vmem %s224, %s230
          %v265 = vld [vmem:[%s264] sm:$0x1]
          %v266 = vadd.f32 %v265, %v261
          %s267 = scalar_lea.vmem %s219, %s230 [#allocation8]
          %268 = vst [vmem:[%s267] sm:$0x1] %v266
        $region37: #{cls_graph_conv_forward.6} parent=31 // loop_footer
          %s234 = sadd.s32 1, %s230
        $region38: #{cls_graph_conv_forward.6} parent=31 // loop_footer_branch
          %229 = sbr.rel target = $region34
        $region39: #{cls_graph_conv_forward.6} parent=31 // loop_exit
          _
        %s269 = sand.u32 %s115, 1
        %s270 = scalar_lea.sflag [#allocation7], %s269
        %s271 = sand.u32 %s115, 1
        %s272 = smul.addr %s271, 512
        %s273 = scalar_lea.vmem [#allocation6], %s272
        %s274 = sand.u32 %s141, 1
        %s275 = scalar_lea.sflag [#allocation9], %s274
        %s276 = sand.u32 %s141, 1
        %s277 = smul.addr %s276, 512
        %s278 = scalar_lea.vmem [#allocation8], %s277
        // Predicated region
        $region47: #{cls_graph_conv_forward.6} parent=31 // pred_check
          %p279 = pneg %p125
        $region48: #{cls_graph_conv_forward.6} parent=31 // pred_check_branch
          %281 = sbr.rel (%p279) target = $region50
        $region49: #{cls_graph_conv_forward.6} parent=31 // pred_region
          %s282 = smul.u32 64, %s39
          %s284 = ssub.s32 8192, 8192
          %285 = vsyncadd %s270, %s284
          %s286 = smul.addr %s282, 128
          %s287 = scalar_lea.hbm %s6, %s286
          %s288 = sshll.u32 %s273, 4
          %s289 = int_to_ptr.vmem [resolvable:$true] %s288
          %294 = dma.vmem_to_hbm [thread:$0]  %s289, 8192, %s287, %s270, 128, 128, 8
        $region50: #{cls_graph_conv_forward.6} parent=31 // pred_fallthru
          _
        // Predicated region
        $region51: #{cls_graph_conv_forward.6} parent=31 // pred_check
          %p295 = pneg %p151
        $region52: #{cls_graph_conv_forward.6} parent=31 // pred_check_branch
          %297 = sbr.rel (%p295) target = $region54
        $region53: #{cls_graph_conv_forward.6} parent=31 // pred_region
          %s298 = smul.u32 64, %s39
          %s300 = ssub.s32 8192, 8192
          %301 = vsyncadd %s275, %s300
          %s302 = smul.addr %s298, 128
          %s303 = scalar_lea.hbm %s7, %s302
          %s304 = sshll.u32 %s278, 4
          %s305 = int_to_ptr.vmem [resolvable:$true] %s304
          %310 = dma.vmem_to_hbm [thread:$0]  %s305, 8192, %s303, %s275, 128, 128, 8
        $region54: #{cls_graph_conv_forward.6} parent=31 // pred_fallthru
          _
      $region32: #{cls_graph_conv_forward.6} parent=5 // pred_fallthru
        _
      %p311 = scmp.le.s32.totalorder 2, %s34
      // Predicated region
      $region55: #{cls_graph_conv_forward.6} parent=5 // pred_check
        %p312 = pneg %p311
      $region56: #{cls_graph_conv_forward.6} parent=5 // pred_check_branch
        %314 = sbr.rel (%p312) target = $region58
      $region57: #{cls_graph_conv_forward.6} parent=5 // pred_region
        %s315 = ssub.s32 %s34, 2
        // Predicated region
        $region59: #{cls_graph_conv_forward.6} parent=57 // pred_check
          %p316 = pneg %p131
        $region60: #{cls_graph_conv_forward.6} parent=57 // pred_check_branch
          %318 = sbr.rel (%p316) target = $region62
        $region61: #{cls_graph_conv_forward.6} parent=57 // pred_region
          %s319 = sand.u32 %s116, 1
          %s320 = scalar_lea.sflag [#allocation7], %s319
          %s321 = sand.u32 %s116, 1
          %s322 = smul.addr %s321, 512
          %s323 = scalar_lea.vmem [#allocation6], %s322
          %324 = dma.done %s320, 8192
        $region62: #{cls_graph_conv_forward.6} parent=57 // pred_fallthru
          _
        // Predicated region
        $region63: #{cls_graph_conv_forward.6} parent=57 // pred_check
          %p325 = pneg %p157
        $region64: #{cls_graph_conv_forward.6} parent=57 // pred_check_branch
          %327 = sbr.rel (%p325) target = $region66
        $region65: #{cls_graph_conv_forward.6} parent=57 // pred_region
          %s328 = sand.u32 %s142, 1
          %s329 = scalar_lea.sflag [#allocation9], %s328
          %s330 = sand.u32 %s142, 1
          %s331 = smul.addr %s330, 512
          %s332 = scalar_lea.vmem [#allocation8], %s331
          %333 = dma.done %s329, 8192
        $region66: #{cls_graph_conv_forward.6} parent=57 // pred_fallthru
          _
      $region58: #{cls_graph_conv_forward.6} parent=5 // pred_fallthru
        _
    $region6: #{cls_graph_conv_forward.6} parent=1 // loop_footer
      %s38 = sadd.s32 1, %s34
    $region7: #{cls_graph_conv_forward.6} parent=1 // loop_footer_branch
      %33 = sbr.rel target = $region3
    $region8: #{cls_graph_conv_forward.6} parent=1 // loop_exit
      _
    %334 = vsyncpa [#allocation7], 1
    %s335 = scalar_lea.sflag [#allocation7], 1
    %336 = vsyncpa %s335, 1
    %337 = vsyncpa [#allocation9], 1
    %s338 = scalar_lea.sflag [#allocation9], 1
    %339 = vsyncpa %s338, 1

</llo_original>
